<compile_context>
chip_gen: v6e
topology: v6e:2x2x1
jax: 0.10.0
libtpu: 0.0.40
codegen_flags: <defaults>
</compile_context>

<pallas_src>
import functools

import numpy as np
import jax
import jax.numpy as jnp
from jax import lax
from jax.experimental import pallas as pl
from jax.experimental.pallas import tpu as pltpu


# ----------------------------------------------------------------------------
# Generation-aware VMEM budget and tile helpers
# ----------------------------------------------------------------------------
@functools.lru_cache(maxsize=None)
def _vmem_limit_bytes():
    """3/4 of physical VMEM (capped at 100 MiB); safe fallback if query fails."""
    cap = 64 * 1024 * 1024  # conservative default: v7x physical VMEM per TC
    try:
        info = pltpu.get_tpu_info()
        c = getattr(info, "vmem_capacity_bytes", None)
        if c:
            cap = int(c)
    except Exception:
        pass
    return int(min(cap * 3 // 4, 100 * 1024 * 1024))


def _pick_tile(dim, preferred, prefer_even_count=False):
    """Largest tile from `preferred` that divides `dim` (else the full dim).
    With prefer_even_count, prefer tiles giving an even number of blocks so
    both v7x TensorCores get work on the parallel grid axes."""
    cands = [t for t in preferred if t <= dim and dim % t == 0]
    if not cands:
        return dim
    if prefer_even_count:
        even = [t for t in cands if (dim // t) % 2 == 0]
        if even:
            return even[0]
    return cands[0]


def _heads_per_step(total_heads, head_dim):
    """Heads packed per projection step so the matmul N fills the MXU (>=256)."""
    target = max(1, 256 // head_dim)
    g = min(total_heads, target)
    while total_heads % g:
        g -= 1
    return g


# ----------------------------------------------------------------------------
# Fused QKV projection: wide MXU matmul, head-major (B, H+2Hkv, P, hd) output
# ----------------------------------------------------------------------------
def _qkv_proj_kernel(x_ref, w_ref, b_ref, o_ref, *, heads_per_step, head_dim):
    # x: (1, tp, C), w: (1, C, G*hd), b: (1, 1, G*hd) -> o: (1, G, tp, hd)
    y = (jnp.dot(x_ref[0], w_ref[0], preferred_element_type=jnp.float32)
         + b_ref[0].astype(jnp.float32)).astype(o_ref.dtype)
    # Split the lane-dense wide result into per-head slabs (static lane slices).
    for j in range(heads_per_step):
        o_ref[0, j] = y[:, j * head_dim:(j + 1) * head_dim]


def pallas_qkv_head_proj(x, w_packed, b_packed, head_dim):
    """x: (B, P, C); w_packed: (ng, C, G*hd); b_packed: (ng, 1, G*hd)
       -> (B, ng*G, P, hd) head-major fused q/k/v projection."""
    B, P, C = x.shape
    ng, _, ghd = w_packed.shape
    g = ghd // head_dim
    H_total = ng * g
    tp = _pick_tile(P, (512, 384, 256, 128))
    kernel = functools.partial(_qkv_proj_kernel,
                               heads_per_step=g, head_dim=head_dim)
    # head-group axis innermost: the x token-tile block index does not change
    # with it, so x is read from HBM once per (b, t) and re-used.
    grid = (B, P // tp, ng)
    return pl.pallas_call(
        kernel,
        out_shape=jax.ShapeDtypeStruct((B, H_total, P, head_dim), x.dtype),
        grid=grid,
        in_specs=[
            pl.BlockSpec((1, tp, C), lambda b, t, hg: (b, t, 0)),
            pl.BlockSpec((1, C, ghd), lambda b, t, hg: (hg, 0, 0)),
            pl.BlockSpec((1, 1, ghd), lambda b, t, hg: (hg, 0, 0)),
        ],
        out_specs=pl.BlockSpec((1, g, tp, head_dim),
                               lambda b, t, hg: (b, hg, t, 0)),
        compiler_params=pltpu.CompilerParams(
            dimension_semantics=("parallel", "parallel", "arbitrary"),
            vmem_limit_bytes=_vmem_limit_bytes(),
        ),
    )(x, w_packed, b_packed)


# ----------------------------------------------------------------------------
# GQA attention.  Two kernels:
#   * full-KV single pass (no online-softmax rescale) when K/V + scores fit,
#   * online-softmax flash kernel with kv tiling for long sequences.
# ----------------------------------------------------------------------------
def _attn_full_kv_kernel(h2g_ref, q_ref, k_ref, v_ref, o_ref, *, approx_recip):
    del h2g_ref  # consumed only by the k/v index_maps
    q = q_ref[0, 0]  # (tq, hd) -- 1/sqrt(hd) already folded into the weights
    k = k_ref[0, 0]  # (P,  hd)
    v = v_ref[0, 0]  # (P,  hd)
    # Contract the last dims directly (MXU handles it; no transposed k copy).
    s = lax.dot_general(q, k, (((1,), (1,)), ((), ())),
                        preferred_element_type=jnp.float32)          # (tq, P)
    m = jnp.max(s, axis=-1, keepdims=True)
    p = jnp.exp(s - m)
    l = jnp.sum(p, axis=-1, keepdims=True)
    acc = jnp.dot(p.astype(v.dtype), v, preferred_element_type=jnp.float32)
    if approx_recip:
        out = acc * pl.reciprocal(l, approx=True)
    else:
        out = acc / l
    o_ref[0, 0] = out.astype(o_ref.dtype)


def _attn_flash_kernel(h2g_ref, q_ref, k_ref, v_ref, o_ref,
                       m_ref, l_ref, acc_ref, *, approx_recip):
    del h2g_ref
    ki = pl.program_id(3)

    @pl.when(ki == 0)
    def _():
        m_ref[...] = jnp.full(m_ref.shape, -jnp.inf, dtype=m_ref.dtype)
        l_ref[...] = jnp.zeros(l_ref.shape, dtype=l_ref.dtype)
        acc_ref[...] = jnp.zeros(acc_ref.shape, dtype=acc_ref.dtype)

    q = q_ref[0, 0]  # (tq, hd)
    k = k_ref[0, 0]  # (tk, hd)
    v = v_ref[0, 0]  # (tk, hd)

    s = lax.dot_general(q, k, (((1,), (1,)), ((), ())),
                        preferred_element_type=jnp.float32)          # (tq, tk)

    m_prev = m_ref[...]
    m_new = jnp.maximum(m_prev, jnp.max(s, axis=-1, keepdims=True))
    alpha = jnp.exp(m_prev - m_new)
    p = jnp.exp(s - m_new)
    l_ref[...] = alpha * l_ref[...] + jnp.sum(p, axis=-1, keepdims=True)
    acc_ref[...] = alpha * acc_ref[...] + jnp.dot(
        p.astype(v.dtype), v, preferred_element_type=jnp.float32)
    m_ref[...] = m_new

    @pl.when(ki == pl.num_programs(3) - 1)
    def _():
        if approx_recip:
            out = acc_ref[...] * pl.reciprocal(l_ref[...], approx=True)
        else:
            out = acc_ref[...] / l_ref[...]
        o_ref[0, 0] = out.astype(o_ref.dtype)


def _fits_full_kv(P, tq, hd, itemsize, budget):
    # vreg-pressure guard: (tq, P) f32 score/exp temporaries stay bounded so we
    # do not flood the load/store slots with spills.
    if tq * P * 4 > 512 * 1024:
        return False
    ws = 2 * (2 * P * hd * itemsize)      # k and v blocks, double-buffered
    ws += 2 * tq * hd * itemsize          # q block, double-buffered
    ws += 2 * tq * P * 4                  # scores + probabilities (f32)
    ws += 2 * tq * hd * 4                 # output block
    return ws <= budget // 2


def pallas_gqa_attention(qkv4, head2grp, *, num_heads, num_kv_heads,
                         force_kv_tiling=False, approx_recip=False):
    """qkv4: (B, H+2*Hkv, P, hd) head-major fused projection output.
       head2grp: (H,) int32 kv-group id per query head (scalar-prefetched)."""
    B, H_total, P, hd = qkv4.shape
    H, Hkv = num_heads, num_kv_heads
    assert H_total == H + 2 * Hkv
    budget = _vmem_limit_bytes()
    itemsize = jnp.dtype(qkv4.dtype).itemsize
    tq = _pick_tile(P, (128,))
    use_full_kv = (not force_kv_tiling) and _fits_full_kv(P, tq, hd, itemsize,
                                                          budget)

    if use_full_kv:
        # Single-pass softmax; K/V blocks re-used across q tiles (qi innermost).
        kernel = functools.partial(_attn_full_kv_kernel,
                                   approx_recip=approx_recip)
        grid_spec = pltpu.PrefetchScalarGridSpec(
            num_scalar_prefetch=1,
            grid=(B, H, P // tq),
            in_specs=[
                pl.BlockSpec((1, 1, tq, hd),
                             lambda b, h, qi, h2g: (b, h, qi, 0)),
                pl.BlockSpec((1, 1, P, hd),
                             lambda b, h, qi, h2g: (b, H + h2g[h], 0, 0)),
                pl.BlockSpec((1, 1, P, hd),
                             lambda b, h, qi, h2g: (b, H + Hkv + h2g[h], 0, 0)),
            ],
            out_specs=pl.BlockSpec((1, 1, tq, hd),
                                   lambda b, h, qi, h2g: (b, h, qi, 0)),
        )
        dims = ("parallel", "parallel", "parallel")
    else:
        # Long-sequence fallback: online softmax over kv tiles.
        # TODO(synk): consider pipeline_mode=pl.Buffered(3) on the k/v specs to
        # deepen the DMA pipeline for very long sequences.
        tk = _pick_tile(P, (512, 256, 128))
        kernel = functools.partial(_attn_flash_kernel,
                                   approx_recip=approx_recip)
        grid_spec = pltpu.PrefetchScalarGridSpec(
            num_scalar_prefetch=1,
            grid=(B, H, P // tq, P // tk),
            in_specs=[
                pl.BlockSpec((1, 1, tq, hd),
                             lambda b, h, qi, ki, h2g: (b, h, qi, 0)),
                pl.BlockSpec((1, 1, tk, hd),
                             lambda b, h, qi, ki, h2g: (b, H + h2g[h], ki, 0)),
                pl.BlockSpec((1, 1, tk, hd),
                             lambda b, h, qi, ki, h2g:
                             (b, H + Hkv + h2g[h], ki, 0)),
            ],
            out_specs=pl.BlockSpec((1, 1, tq, hd),
                                   lambda b, h, qi, ki, h2g: (b, h, qi, 0)),
            scratch_shapes=[
                pltpu.VMEM((tq, 1), jnp.float32),    # running row max
                pltpu.VMEM((tq, 1), jnp.float32),    # running row sum
                pltpu.VMEM((tq, hd), jnp.float32),   # output accumulator
            ],
        )
        dims = ("parallel", "parallel", "parallel", "arbitrary")

    return pl.pallas_call(
        kernel,
        out_shape=jax.ShapeDtypeStruct((B, H, P, hd), qkv4.dtype),
        grid_spec=grid_spec,
        compiler_params=pltpu.CompilerParams(
            dimension_semantics=dims,
            vmem_limit_bytes=budget,
        ),
    )(head2grp, qkv4, qkv4, qkv4)


# ----------------------------------------------------------------------------
# Tiled linear (output projection): f32 accumulator, K reduction last
# ----------------------------------------------------------------------------
def _linear_kernel(x_ref, w_ref, b_ref, o_ref, acc_ref):
    k_i = pl.program_id(2)

    @pl.when(k_i == 0)
    def _():
        acc_ref[...] = jnp.zeros(acc_ref.shape, dtype=acc_ref.dtype)

    acc_ref[...] += jnp.dot(x_ref[...], w_ref[...],
                            preferred_element_type=jnp.float32)

    @pl.when(k_i == pl.num_programs(2) - 1)
    def _():
        o_ref[...] = (acc_ref[...] + b_ref[...].astype(jnp.float32)
                      ).astype(o_ref.dtype)


def pallas_linear(x2d, w, b):
    """x2d: (M, K), w: (K, N), b: (1, N) -> (M, N)."""
    M, K = x2d.shape
    N = w.shape[1]
    # Even block count on the leading parallel axis keeps both v7x cores busy.
    tm = _pick_tile(M, (512, 384, 256, 128), prefer_even_count=True)
    tn = _pick_tile(N, (512, 256, 128))
    tk = _pick_tile(K, (512, 256, 128))
    return pl.pallas_call(
        _linear_kernel,
        out_shape=jax.ShapeDtypeStruct((M, N), x2d.dtype),
        grid=(M // tm, N // tn, K // tk),
        in_specs=[
            pl.BlockSpec((tm, tk), lambda i, j, k: (i, k)),
            pl.BlockSpec((tk, tn), lambda i, j, k: (k, j)),
            pl.BlockSpec((1, tn), lambda i, j, k: (0, j)),
        ],
        out_specs=pl.BlockSpec((tm, tn), lambda i, j, k: (i, j)),
        scratch_shapes=[pltpu.VMEM((tm, tn), jnp.float32)],
        compiler_params=pltpu.CompilerParams(
            dimension_semantics=("parallel", "parallel", "arbitrary"),
            vmem_limit_bytes=_vmem_limit_bytes(),
        ),
    )(x2d, w, b)


# ----------------------------------------------------------------------------
# Data-dependent head allocation (scalar glue matching the PyTorch while loops)
# ----------------------------------------------------------------------------
def compute_head2grp(k4, num_heads):
    """k4: (B, Hkv, P, hd) -> (H,) int32 kv-group index for each query head."""
    # TODO(synk): fold this sum-of-squares into the QKV projection kernel to
    # avoid re-reading K from HBM (small win; skipped to keep outputs simple).
    k_norms = jnp.sqrt(jnp.sum(jnp.square(k4.astype(jnp.float32)), axis=(2, 3)))
    k_norms = jnp.sum(k_norms, axis=0)                        # (Hkv,)
    _max = jnp.max(k_norms)
    _min = jnp.min(k_norms)
    # Epsilon guards: the raw PyTorch code divides by (max-min) and by the sum,
    # which is 0/0 when all kv-head norms are equal; fall back to uniform split.
    k_norms = (k_norms - _min) / jnp.maximum(_max - _min, 1e-12)
    total = jnp.sum(k_norms)
    num_kv = k_norms.shape[0]
    frac = jnp.where(total > 0,
                     k_norms / jnp.maximum(total, 1e-12),
                     jnp.full_like(k_norms, 1.0 / num_kv))
    alloc = jnp.round(frac * num_heads).astype(jnp.int32)
    # Fixups identical to the PyTorch while loops (argmax can never go negative
    # while the ">" condition holds, so semantics are preserved exactly).
    alloc = lax.while_loop(lambda a: jnp.sum(a) > num_heads,
                           lambda a: a.at[jnp.argmax(a)].add(-1), alloc)
    alloc = lax.while_loop(lambda a: jnp.sum(a) < num_heads,
                           lambda a: a.at[jnp.argmin(a)].add(1), alloc)
    # split semantics: query head h belongs to group g iff
    # exclusive_cumsum[g] <= h < exclusive_cumsum[g] + alloc[g]
    csum = jnp.cumsum(alloc)
    heads = jnp.arange(num_heads)
    head2grp = jnp.sum((csum[None, :] <= heads[:, None]).astype(jnp.int32),
                       axis=1)
    return head2grp.astype(jnp.int32)


# ----------------------------------------------------------------------------
# Weight packing (scale folded into q once; MXU-width head-group packing)
# ----------------------------------------------------------------------------
def _build_packed_qkv(params, num_heads, num_kv_heads, head_dim, scale,
                      heads_per_step):
    C = params["wq"].shape[0]
    wq = (params["wq"] * scale).reshape(C, num_heads, head_dim).transpose(1, 0, 2)
    wk = params["wk"].reshape(C, num_kv_heads, head_dim).transpose(1, 0, 2)
    wv = params["wv"].reshape(C, num_kv_heads, head_dim).transpose(1, 0, 2)
    w_heads = jnp.concatenate([wq, wk, wv], axis=0)            # (Ht, C, hd)
    bq = (params["bq"] * scale).reshape(num_heads, head_dim)
    bk = params["bk"].reshape(num_kv_heads, head_dim)
    bv = params["bv"].reshape(num_kv_heads, head_dim)
    b_heads = jnp.concatenate([bq, bk, bv], axis=0)            # (Ht, hd)

    Ht = num_heads + 2 * num_kv_heads
    g = heads_per_step
    ng = Ht // g
    # Group g heads along the output-column axis so each projection step does a
    # single lane-dense (C, g*hd) matmul; column slice [j*hd:(j+1)*hd] of group
    # hg corresponds to global head hg*g + j.
    w_packed = (w_heads.reshape(ng, g, C, head_dim)
                .transpose(0, 2, 1, 3).reshape(ng, C, g * head_dim))
    b_packed = b_heads.reshape(ng, g, head_dim).reshape(ng, 1, g * head_dim)
    return w_packed, b_packed


# ----------------------------------------------------------------------------
# Full forward
# ----------------------------------------------------------------------------
def kdgqa_forward(x, params, *, num_heads, num_kv_heads,
                  force_kv_tiling=False, approx_recip=False):
    B, P, C = x.shape
    hd = C // num_heads
    scale = hd ** -0.5
    H_total = num_heads + 2 * num_kv_heads
    g = _heads_per_step(H_total, hd)

    w_packed, b_packed = _build_packed_qkv(params, num_heads, num_kv_heads,
                                           hd, scale, g)

    # Fused q/k/v projection directly into (B, H+2Hkv, P, hd) -- no transposes.
    qkv4 = pallas_qkv_head_proj(x, w_packed, b_packed, hd)

    k4 = qkv4[:, num_heads:num_heads + num_kv_heads]           # (B, Hkv, P, hd)
    head2grp = compute_head2grp(k4, num_heads)

    attn = pallas_gqa_attention(qkv4, head2grp,
                                num_heads=num_heads, num_kv_heads=num_kv_heads,
                                force_kv_tiling=force_kv_tiling,
                                approx_recip=approx_recip)

    # TODO(synk): fold this (B,H,P,hd)->(B,P,C) transpose into the output
    # projection (H as a second reduction axis) for large B*P*C; at small
    # shapes the XLA transpose is cheaper than the shallow-K matmul it implies.
    attn2d = attn.transpose(0, 2, 1, 3).reshape(B * P, C)

    out = pallas_linear(attn2d, params["wp"], params["bp"])
    # attn_drop / proj_drop default to p=0.0 -> identity (omitted).
    return out.reshape(B, P, C)


# ----------------------------------------------------------------------------
# Pure-JAX reference for correctness checking
# ----------------------------------------------------------------------------
def reference_forward(x, params, *, num_heads, num_kv_heads):
    B, P, C = x.shape
    hd = C // num_heads
    scale = hd ** -0.5
    hi = "highest"

    x2d = x.reshape(B * P, C)
    q2d = jnp.einsum("mk,kn->mn", x2d, params["wq"], precision=hi) + params["bq"]
    k2d = jnp.einsum("mk,kn->mn", x2d, params["wk"], precision=hi) + params["bk"]
    v2d = jnp.einsum("mk,kn->mn", x2d, params["wv"], precision=hi) + params["bv"]

    q4 = q2d.reshape(B, P, num_heads, hd).transpose(0, 2, 1, 3) * scale
    k4 = k2d.reshape(B, P, num_kv_heads, hd).transpose(0, 2, 1, 3)
    v4 = v2d.reshape(B, P, num_kv_heads, hd).transpose(0, 2, 1, 3)

    head2grp = compute_head2grp(k4, num_heads)
    kg = k4[:, head2grp]
    vg = v4[:, head2grp]

    s = jnp.einsum("bhqd,bhkd->bhqk", q4, kg, precision=hi)
    p = jax.nn.softmax(s, axis=-1)
    a = jnp.einsum("bhqk,bhkd->bhqd", p, vg, precision=hi)

    a2d = a.transpose(0, 2, 1, 3).reshape(B * P, C)
    out = jnp.einsum("mk,kn->mn", a2d, params["wp"], precision=hi) + params["bp"]
    return out.reshape(B, P, C)


# ----------------------------------------------------------------------------
# Main
# ----------------------------------------------------------------------------
if __name__ == "__main__":
    B, P, C = 2, 384, 256
    num_heads = 8
    num_kv_heads = num_heads // 2                              # module default
    hd = C // num_heads                                        # 32
    kv_dim = num_kv_heads * hd                                 # 128

    key = jax.random.PRNGKey(0)
    kx, kq, kk, kv, kp, kpb = jax.random.split(key, 6)

    x = jax.random.normal(kx, (B, P, C), dtype=jnp.float32)

    # Deterministic parameter init (weights stored as (in, out); qkv_bias=False).
    params = {
        "wq": 0.05 * jax.random.normal(kq, (C, C), dtype=jnp.float32),
        "bq": jnp.zeros((1, C), dtype=jnp.float32),
        "wk": 0.05 * jax.random.normal(kk, (C, kv_dim), dtype=jnp.float32),
        "bk": jnp.zeros((1, kv_dim), dtype=jnp.float32),
        "wv": 0.05 * jax.random.normal(kv, (C, kv_dim), dtype=jnp.float32),
        "bv": jnp.zeros((1, kv_dim), dtype=jnp.float32),
        "wp": 0.05 * jax.random.normal(kp, (C, C), dtype=jnp.float32),
        "bp": 0.05 * jax.random.normal(kpb, (1, C), dtype=jnp.float32),
    }

    ref = reference_forward(
        x, params, num_heads=num_heads, num_kv_heads=num_kv_heads
    )

    # Default path: single-pass full-KV attention kernel.
    fwd = jax.jit(
        functools.partial(
            kdgqa_forward, num_heads=num_heads, num_kv_heads=num_kv_heads
        )
    )
    out = jax.block_until_ready(fwd(x, params))
    assert out.shape == (B, P, C)
    assert np.all(np.isfinite(np.asarray(out)))
    assert np.allclose(np.asarray(out), np.asarray(ref), rtol=2e-3, atol=2e-3)

    # Long-sequence path: kv-tiled online-softmax flash kernel.
    fwd_tiled = jax.jit(
        functools.partial(
            kdgqa_forward, num_heads=num_heads, num_kv_heads=num_kv_heads,
            force_kv_tiling=True,
        )
    )
    out_tiled = jax.block_until_ready(fwd_tiled(x, params))
    assert np.allclose(np.asarray(out_tiled), np.asarray(ref),
                       rtol=2e-3, atol=2e-3)

    print("KERNEL_OK")
</pallas_src>

<mosaic_0001>
module attributes {stable_mosaic.version = 11 : i64} {
  func.func @_qkv_proj_kernel(%arg0: i32, %arg1: i32, %arg2: i32, %arg3: memref<1x384x256xf32, #tpu.memory_space<vmem>>, %arg4: memref<1x256x256xf32, #tpu.memory_space<vmem>>, %arg5: memref<1x1x256xf32, #tpu.memory_space<vmem>>, %arg6: memref<1x8x384x32xf32, #tpu.memory_space<vmem>>) attributes {dimension_semantics = [#tpu.dimension_semantics<parallel>, #tpu.dimension_semantics<parallel>, #tpu.dimension_semantics<arbitrary>], iteration_bounds = array<i64: 2, 1, 2>, scalar_prefetch = 0 : i64, scratch_operands = 0 : i64, tpu.core_type = #tpu.core_type<tc>, window_params = [{transform_indices = @transform_0, window_bounds = array<i64: 1, 384, 256>}, {transform_indices = @transform_1, window_bounds = array<i64: 1, 256, 256>}, {transform_indices = @transform_2, window_bounds = array<i64: 1, 1, 256>}, {transform_indices = @transform_3, window_bounds = array<i64: 1, 8, 384, 32>}]} {
    %c0 = arith.constant 0 : index
    %c0_0 = arith.constant 0 : index
    %c0_1 = arith.constant 0 : index
    %0 = vector.load %arg3[%c0, %c0_0, %c0_1] : memref<1x384x256xf32, #tpu.memory_space<vmem>>, vector<1x384x256xf32>
    %1 = vector.shape_cast %0 : vector<1x384x256xf32> to vector<384x256xf32>
    %c0_2 = arith.constant 0 : index
    %c0_3 = arith.constant 0 : index
    %c0_4 = arith.constant 0 : index
    %2 = vector.load %arg4[%c0_2, %c0_3, %c0_4] : memref<1x256x256xf32, #tpu.memory_space<vmem>>, vector<1x256x256xf32>
    %3 = vector.shape_cast %2 : vector<1x256x256xf32> to vector<256x256xf32>
    %cst = arith.constant dense<0.000000e+00> : vector<384x256xf32>
    %4 = tpu.matmul %1, %3, %cst {dimension_numbers = #tpu.dot_dimension_numbers<[1], [0], [0], [1], [0, 0, 1, 1], [], []>} : vector<384x256xf32>, vector<256x256xf32>, vector<384x256xf32> -> vector<384x256xf32>
    %c0_5 = arith.constant 0 : index
    %c0_6 = arith.constant 0 : index
    %c0_7 = arith.constant 0 : index
    %5 = vector.load %arg5[%c0_5, %c0_6, %c0_7] : memref<1x1x256xf32, #tpu.memory_space<vmem>>, vector<1x1x256xf32>
    %6 = vector.shape_cast %5 : vector<1x1x256xf32> to vector<1x256xf32>
    %7 = vector.broadcast %6 : vector<1x256xf32> to vector<384x256xf32>
    %8 = arith.addf %4, %7 : vector<384x256xf32>
    %9 = vector.extract_strided_slice %8 {offsets = [0, 0], sizes = [384, 32], strides = [1, 1]} : vector<384x256xf32> to vector<384x32xf32>
    %c0_8 = arith.constant 0 : index
    %c0_9 = arith.constant 0 : index
    %c0_10 = arith.constant 0 : index
    %c0_11 = arith.constant 0 : index
    %10 = vector.load %arg6[%c0_8, %c0_9, %c0_10, %c0_11] : memref<1x8x384x32xf32, #tpu.memory_space<vmem>>, vector<1x1x384x32xf32>
    %11 = vector.shape_cast %10 : vector<1x1x384x32xf32> to vector<384x32xf32>
    %12 = vector.shape_cast %9 : vector<384x32xf32> to vector<1x1x384x32xf32>
    tpu.vector_store %arg6[%c0_8, %c0_9, %c0_10, %c0_11], %12 {strides = array<i32>} : memref<1x8x384x32xf32, #tpu.memory_space<vmem>>, vector<1x1x384x32xf32>,
    %13 = vector.extract_strided_slice %8 {offsets = [0, 32], sizes = [384, 32], strides = [1, 1]} : vector<384x256xf32> to vector<384x32xf32>
    %c0_12 = arith.constant 0 : index
    %c1 = arith.constant 1 : index
    %c0_13 = arith.constant 0 : index
    %c0_14 = arith.constant 0 : index
    %14 = vector.load %arg6[%c0_12, %c1, %c0_13, %c0_14] : memref<1x8x384x32xf32, #tpu.memory_space<vmem>>, vector<1x1x384x32xf32>
    %15 = vector.shape_cast %14 : vector<1x1x384x32xf32> to vector<384x32xf32>
    %16 = vector.shape_cast %13 : vector<384x32xf32> to vector<1x1x384x32xf32>
    tpu.vector_store %arg6[%c0_12, %c1, %c0_13, %c0_14], %16 {strides = array<i32>} : memref<1x8x384x32xf32, #tpu.memory_space<vmem>>, vector<1x1x384x32xf32>,
    %17 = vector.extract_strided_slice %8 {offsets = [0, 64], sizes = [384, 32], strides = [1, 1]} : vector<384x256xf32> to vector<384x32xf32>
    %c0_15 = arith.constant 0 : index
    %c2 = arith.constant 2 : index
    %c0_16 = arith.constant 0 : index
    %c0_17 = arith.constant 0 : index
    %18 = vector.load %arg6[%c0_15, %c2, %c0_16, %c0_17] : memref<1x8x384x32xf32, #tpu.memory_space<vmem>>, vector<1x1x384x32xf32>
    %19 = vector.shape_cast %18 : vector<1x1x384x32xf32> to vector<384x32xf32>
    %20 = vector.shape_cast %17 : vector<384x32xf32> to vector<1x1x384x32xf32>
    tpu.vector_store %arg6[%c0_15, %c2, %c0_16, %c0_17], %20 {strides = array<i32>} : memref<1x8x384x32xf32, #tpu.memory_space<vmem>>, vector<1x1x384x32xf32>,
    %21 = vector.extract_strided_slice %8 {offsets = [0, 96], sizes = [384, 32], strides = [1, 1]} : vector<384x256xf32> to vector<384x32xf32>
    %c0_18 = arith.constant 0 : index
    %c3 = arith.constant 3 : index
    %c0_19 = arith.constant 0 : index
    %c0_20 = arith.constant 0 : index
    %22 = vector.load %arg6[%c0_18, %c3, %c0_19, %c0_20] : memref<1x8x384x32xf32, #tpu.memory_space<vmem>>, vector<1x1x384x32xf32>
    %23 = vector.shape_cast %22 : vector<1x1x384x32xf32> to vector<384x32xf32>
    %24 = vector.shape_cast %21 : vector<384x32xf32> to vector<1x1x384x32xf32>
    tpu.vector_store %arg6[%c0_18, %c3, %c0_19, %c0_20], %24 {strides = array<i32>} : memref<1x8x384x32xf32, #tpu.memory_space<vmem>>, vector<1x1x384x32xf32>,
    %25 = vector.extract_strided_slice %8 {offsets = [0, 128], sizes = [384, 32], strides = [1, 1]} : vector<384x256xf32> to vector<384x32xf32>
    %c0_21 = arith.constant 0 : index
    %c4 = arith.constant 4 : index
    %c0_22 = arith.constant 0 : index
    %c0_23 = arith.constant 0 : index
    %26 = vector.load %arg6[%c0_21, %c4, %c0_22, %c0_23] : memref<1x8x384x32xf32, #tpu.memory_space<vmem>>, vector<1x1x384x32xf32>
    %27 = vector.shape_cast %26 : vector<1x1x384x32xf32> to vector<384x32xf32>
    %28 = vector.shape_cast %25 : vector<384x32xf32> to vector<1x1x384x32xf32>
    tpu.vector_store %arg6[%c0_21, %c4, %c0_22, %c0_23], %28 {strides = array<i32>} : memref<1x8x384x32xf32, #tpu.memory_space<vmem>>, vector<1x1x384x32xf32>,
    %29 = vector.extract_strided_slice %8 {offsets = [0, 160], sizes = [384, 32], strides = [1, 1]} : vector<384x256xf32> to vector<384x32xf32>
    %c0_24 = arith.constant 0 : index
    %c5 = arith.constant 5 : index
    %c0_25 = arith.constant 0 : index
    %c0_26 = arith.constant 0 : index
    %30 = vector.load %arg6[%c0_24, %c5, %c0_25, %c0_26] : memref<1x8x384x32xf32, #tpu.memory_space<vmem>>, vector<1x1x384x32xf32>
    %31 = vector.shape_cast %30 : vector<1x1x384x32xf32> to vector<384x32xf32>
    %32 = vector.shape_cast %29 : vector<384x32xf32> to vector<1x1x384x32xf32>
    tpu.vector_store %arg6[%c0_24, %c5, %c0_25, %c0_26], %32 {strides = array<i32>} : memref<1x8x384x32xf32, #tpu.memory_space<vmem>>, vector<1x1x384x32xf32>,
    %33 = vector.extract_strided_slice %8 {offsets = [0, 192], sizes = [384, 32], strides = [1, 1]} : vector<384x256xf32> to vector<384x32xf32>
    %c0_27 = arith.constant 0 : index
    %c6 = arith.constant 6 : index
    %c0_28 = arith.constant 0 : index
    %c0_29 = arith.constant 0 : index
    %34 = vector.load %arg6[%c0_27, %c6, %c0_28, %c0_29] : memref<1x8x384x32xf32, #tpu.memory_space<vmem>>, vector<1x1x384x32xf32>
    %35 = vector.shape_cast %34 : vector<1x1x384x32xf32> to vector<384x32xf32>
    %36 = vector.shape_cast %33 : vector<384x32xf32> to vector<1x1x384x32xf32>
    tpu.vector_store %arg6[%c0_27, %c6, %c0_28, %c0_29], %36 {strides = array<i32>} : memref<1x8x384x32xf32, #tpu.memory_space<vmem>>, vector<1x1x384x32xf32>,
    %37 = vector.extract_strided_slice %8 {offsets = [0, 224], sizes = [384, 32], strides = [1, 1]} : vector<384x256xf32> to vector<384x32xf32>
    %c0_30 = arith.constant 0 : index
    %c7 = arith.constant 7 : index
    %c0_31 = arith.constant 0 : index
    %c0_32 = arith.constant 0 : index
    %38 = vector.load %arg6[%c0_30, %c7, %c0_31, %c0_32] : memref<1x8x384x32xf32, #tpu.memory_space<vmem>>, vector<1x1x384x32xf32>
    %39 = vector.shape_cast %38 : vector<1x1x384x32xf32> to vector<384x32xf32>
    %40 = vector.shape_cast %37 : vector<384x32xf32> to vector<1x1x384x32xf32>
    tpu.vector_store %arg6[%c0_30, %c7, %c0_31, %c0_32], %40 {strides = array<i32>} : memref<1x8x384x32xf32, #tpu.memory_space<vmem>>, vector<1x1x384x32xf32>,
    return
  }
  func.func @transform_0(%arg0: i32, %arg1: i32, %arg2: i32) -> (i32, i32, i32) {
    %c0_i32 = arith.constant 0 : i32
    %c0_i32_0 = arith.constant 0 : i32
    return %arg0, %arg1, %c0_i32 : i32, i32, i32
  }
  func.func @transform_1(%arg0: i32, %arg1: i32, %arg2: i32) -> (i32, i32, i32) {
    %c0_i32 = arith.constant 0 : i32
    %c0_i32_0 = arith.constant 0 : i32
    %c0_i32_1 = arith.constant 0 : i32
    return %arg2, %c0_i32, %c0_i32_0 : i32, i32, i32
  }
  func.func @transform_2(%arg0: i32, %arg1: i32, %arg2: i32) -> (i32, i32, i32) {
    %c0_i32 = arith.constant 0 : i32
    %c0_i32_0 = arith.constant 0 : i32
    %c0_i32_1 = arith.constant 0 : i32
    return %arg2, %c0_i32, %c0_i32_0 : i32, i32, i32
  }
  func.func @transform_3(%arg0: i32, %arg1: i32, %arg2: i32) -> (i32, i32, i32, i32) {
    %c0_i32 = arith.constant 0 : i32
    %c0_i32_0 = arith.constant 0 : i32
    return %arg0, %arg2, %arg1, %c0_i32 : i32, i32, i32, i32
  }
}

module attributes {stable_mosaic.version = 11 : i64} {
  func.func @_attn_full_kv_kernel(%arg0: i32, %arg1: i32, %arg2: i32, %arg3: memref<8xi32, #tpu.memory_space<smem>>, %arg4: memref<1x1x128x32xf32, #tpu.memory_space<vmem>>, %arg5: memref<1x1x384x32xf32, #tpu.memory_space<vmem>>, %arg6: memref<1x1x384x32xf32, #tpu.memory_space<vmem>>, %arg7: memref<1x1x128x32xf32, #tpu.memory_space<vmem>>) attributes {dimension_semantics = [#tpu.dimension_semantics<parallel>, #tpu.dimension_semantics<parallel>, #tpu.dimension_semantics<parallel>], iteration_bounds = array<i64: 2, 8, 3>, scalar_prefetch = 1 : i64, scratch_operands = 0 : i64, tpu.core_type = #tpu.core_type<tc>, window_params = [{transform_indices = @transform_0, window_bounds = array<i64: 1, 1, 128, 32>}, {transform_indices = @transform_1, window_bounds = array<i64: 1, 1, 384, 32>}, {transform_indices = @transform_2, window_bounds = array<i64: 1, 1, 384, 32>}, {transform_indices = @transform_3, window_bounds = array<i64: 1, 1, 128, 32>}]} {
    %c0 = arith.constant 0 : index
    %c0_0 = arith.constant 0 : index
    %c0_1 = arith.constant 0 : index
    %c0_2 = arith.constant 0 : index
    %0 = vector.load %arg4[%c0, %c0_0, %c0_1, %c0_2] : memref<1x1x128x32xf32, #tpu.memory_space<vmem>>, vector<1x1x128x32xf32>
    %1 = vector.shape_cast %0 : vector<1x1x128x32xf32> to vector<128x32xf32>
    %c0_3 = arith.constant 0 : index
    %c0_4 = arith.constant 0 : index
    %c0_5 = arith.constant 0 : index
    %c0_6 = arith.constant 0 : index
    %2 = vector.load %arg5[%c0_3, %c0_4, %c0_5, %c0_6] : memref<1x1x384x32xf32, #tpu.memory_space<vmem>>, vector<1x1x384x32xf32>
    %3 = vector.shape_cast %2 : vector<1x1x384x32xf32> to vector<384x32xf32>
    %c0_7 = arith.constant 0 : index
    %c0_8 = arith.constant 0 : index
    %c0_9 = arith.constant 0 : index
    %c0_10 = arith.constant 0 : index
    %4 = vector.load %arg6[%c0_7, %c0_8, %c0_9, %c0_10] : memref<1x1x384x32xf32, #tpu.memory_space<vmem>>, vector<1x1x384x32xf32>
    %5 = vector.shape_cast %4 : vector<1x1x384x32xf32> to vector<384x32xf32>
    %cst = arith.constant dense<0.000000e+00> : vector<128x384xf32>
    %6 = tpu.matmul %1, %3, %cst {dimension_numbers = #tpu.dot_dimension_numbers<[1], [1], [0], [0], [0, 0, 1, 0], [], []>} : vector<128x32xf32>, vector<384x32xf32>, vector<128x384xf32> -> vector<128x384xf32>
    %cst_11 = arith.constant dense<0xFF800000> : vector<128xf32>
    %7 = vector.multi_reduction <maximumf>, %6, %cst_11 [1] : vector<128x384xf32> to vector<128xf32>
    %8 = vector.shape_cast %7 : vector<128xf32> to vector<128x1xf32>
    %9 = vector.broadcast %8 : vector<128x1xf32> to vector<128x384xf32>
    %10 = arith.subf %6, %9 : vector<128x384xf32>
    %11 = math.exp %10 : vector<128x384xf32>
    %cst_12 = arith.constant dense<0.000000e+00> : vector<128xf32>
    %12 = vector.multi_reduction <add>, %11, %cst_12 [1] : vector<128x384xf32> to vector<128xf32>
    %13 = vector.shape_cast %12 : vector<128xf32> to vector<128x1xf32>
    %cst_13 = arith.constant dense<0.000000e+00> : vector<128x32xf32>
    %14 = tpu.matmul %11, %5, %cst_13 {dimension_numbers = #tpu.dot_dimension_numbers<[1], [0], [0], [1], [0, 0, 1, 1], [], []>} : vector<128x384xf32>, vector<384x32xf32>, vector<128x32xf32> -> vector<128x32xf32>
    %15 = vector.broadcast %13 : vector<128x1xf32> to vector<128x32xf32>
    %16 = arith.divf %14, %15 : vector<128x32xf32>
    %c0_14 = arith.constant 0 : index
    %c0_15 = arith.constant 0 : index
    %c0_16 = arith.constant 0 : index
    %c0_17 = arith.constant 0 : index
    %17 = vector.load %arg7[%c0_14, %c0_15, %c0_16, %c0_17] : memref<1x1x128x32xf32, #tpu.memory_space<vmem>>, vector<1x1x128x32xf32>
    %18 = vector.shape_cast %17 : vector<1x1x128x32xf32> to vector<128x32xf32>
    %19 = vector.shape_cast %16 : vector<128x32xf32> to vector<1x1x128x32xf32>
    tpu.vector_store %arg7[%c0_14, %c0_15, %c0_16, %c0_17], %19 {strides = array<i32>} : memref<1x1x128x32xf32, #tpu.memory_space<vmem>>, vector<1x1x128x32xf32>,
    return
  }
  func.func @transform_0(%arg0: i32, %arg1: i32, %arg2: i32, %arg3: memref<8xi32, #tpu.memory_space<smem>>) -> (i32, i32, i32, i32) {
    %c0_i32 = arith.constant 0 : i32
    %c0_i32_0 = arith.constant 0 : i32
    return %arg0, %arg1, %arg2, %c0_i32 : i32, i32, i32, i32
  }
  func.func @transform_1(%arg0: i32, %arg1: i32, %arg2: i32, %arg3: memref<8xi32, #tpu.memory_space<smem>>) -> (i32, i32, i32, i32) {
    %0 = arith.index_cast %arg1 : i32 to index
    %1 = memref.load %arg3[%0] : memref<8xi32, #tpu.memory_space<smem>>
    %c8_i32 = arith.constant 8 : i32
    %2 = arith.addi %c8_i32, %1 : i32
    %c0_i32 = arith.constant 0 : i32
    %c0_i32_0 = arith.constant 0 : i32
    %c0_i32_1 = arith.constant 0 : i32
    return %arg0, %2, %c0_i32, %c0_i32_0 : i32, i32, i32, i32
  }
  func.func @transform_2(%arg0: i32, %arg1: i32, %arg2: i32, %arg3: memref<8xi32, #tpu.memory_space<smem>>) -> (i32, i32, i32, i32) {
    %0 = arith.index_cast %arg1 : i32 to index
    %1 = memref.load %arg3[%0] : memref<8xi32, #tpu.memory_space<smem>>
    %c12_i32 = arith.constant 12 : i32
    %2 = arith.addi %c12_i32, %1 : i32
    %c0_i32 = arith.constant 0 : i32
    %c0_i32_0 = arith.constant 0 : i32
    %c0_i32_1 = arith.constant 0 : i32
    return %arg0, %2, %c0_i32, %c0_i32_0 : i32, i32, i32, i32
  }
  func.func @transform_3(%arg0: i32, %arg1: i32, %arg2: i32, %arg3: memref<8xi32, #tpu.memory_space<smem>>) -> (i32, i32, i32, i32) {
    %c0_i32 = arith.constant 0 : i32
    %c0_i32_0 = arith.constant 0 : i32
    return %arg0, %arg1, %arg2, %c0_i32 : i32, i32, i32, i32
  }
}

module attributes {stable_mosaic.version = 11 : i64} {
  func.func @_linear_kernel(%arg0: i32, %arg1: i32, %arg2: i32, %arg3: memref<384x256xf32, #tpu.memory_space<vmem>>, %arg4: memref<256x256xf32, #tpu.memory_space<vmem>>, %arg5: memref<1x256xf32, #tpu.memory_space<vmem>>, %arg6: memref<384x256xf32, #tpu.memory_space<vmem>>, %arg7: memref<384x256xf32, #tpu.memory_space<vmem>>) attributes {dimension_semantics = [#tpu.dimension_semantics<parallel>, #tpu.dimension_semantics<parallel>, #tpu.dimension_semantics<arbitrary>], iteration_bounds = array<i64: 2, 1, 1>, scalar_prefetch = 0 : i64, scratch_operands = 1 : i64, tpu.core_type = #tpu.core_type<tc>, window_params = [{transform_indices = @transform_0, window_bounds = array<i64: 384, 256>}, {transform_indices = @transform_1, window_bounds = array<i64: 256, 256>}, {transform_indices = @transform_2, window_bounds = array<i64: 1, 256>}, {transform_indices = @transform_3, window_bounds = array<i64: 384, 256>}]} {
    %c0_i32 = arith.constant 0 : i32
    %0 = arith.cmpi eq, %arg2, %c0_i32 : i32
    %1 = arith.extui %0 : i1 to i32
    %c0_i32_0 = arith.constant 0 : i32
    %2 = arith.cmpi ne, %1, %c0_i32_0 : i32
    scf.if %2 {
      %cst_10 = arith.constant 0.000000e+00 : f32
      %12 = vector.broadcast %cst_10 : f32 to vector<384x256xf32>
      %c0_11 = arith.constant 0 : index
      %c0_12 = arith.constant 0 : index
      %13 = vector.load %arg7[%c0_11, %c0_12] : memref<384x256xf32, #tpu.memory_space<vmem>>, vector<384x256xf32>
      tpu.vector_store %arg7[%c0_11, %c0_12], %12 {strides = array<i32>} : memref<384x256xf32, #tpu.memory_space<vmem>>, vector<384x256xf32>,
    } else {
    }
    %c0 = arith.constant 0 : index
    %c0_1 = arith.constant 0 : index
    %3 = vector.load %arg7[%c0, %c0_1] : memref<384x256xf32, #tpu.memory_space<vmem>>, vector<384x256xf32>
    %c0_2 = arith.constant 0 : index
    %c0_3 = arith.constant 0 : index
    %4 = vector.load %arg3[%c0_2, %c0_3] : memref<384x256xf32, #tpu.memory_space<vmem>>, vector<384x256xf32>
    %c0_4 = arith.constant 0 : index
    %c0_5 = arith.constant 0 : index
    %5 = vector.load %arg4[%c0_4, %c0_5] : memref<256x256xf32, #tpu.memory_space<vmem>>, vector<256x256xf32>
    %cst = arith.constant dense<0.000000e+00> : vector<384x256xf32>
    %6 = tpu.matmul %4, %5, %cst {dimension_numbers = #tpu.dot_dimension_numbers<[1], [0], [0], [1], [0, 0, 1, 1], [], []>} : vector<384x256xf32>, vector<256x256xf32>, vector<384x256xf32> -> vector<384x256xf32>
    %7 = arith.addf %3, %6 : vector<384x256xf32>
    %c0_6 = arith.constant 0 : index
    %c0_7 = arith.constant 0 : index
    %8 = vector.load %arg7[%c0_6, %c0_7] : memref<384x256xf32, #tpu.memory_space<vmem>>, vector<384x256xf32>
    tpu.vector_store %arg7[%c0_6, %c0_7], %7 {strides = array<i32>} : memref<384x256xf32, #tpu.memory_space<vmem>>, vector<384x256xf32>,
    %c0_i32_8 = arith.constant 0 : i32
    %9 = arith.cmpi eq, %arg2, %c0_i32_8 : i32
    %10 = arith.extui %9 : i1 to i32
    %c0_i32_9 = arith.constant 0 : i32
    %11 = arith.cmpi ne, %10, %c0_i32_9 : i32
    scf.if %11 {
      %c0_10 = arith.constant 0 : index
      %c0_11 = arith.constant 0 : index
      %12 = vector.load %arg7[%c0_10, %c0_11] : memref<384x256xf32, #tpu.memory_space<vmem>>, vector<384x256xf32>
      %c0_12 = arith.constant 0 : index
      %c0_13 = arith.constant 0 : index
      %13 = vector.load %arg5[%c0_12, %c0_13] : memref<1x256xf32, #tpu.memory_space<vmem>>, vector<1x256xf32>
      %14 = vector.broadcast %13 : vector<1x256xf32> to vector<384x256xf32>
      %15 = arith.addf %12, %14 : vector<384x256xf32>
      %c0_14 = arith.constant 0 : index
      %c0_15 = arith.constant 0 : index
      %16 = vector.load %arg6[%c0_14, %c0_15] : memref<384x256xf32, #tpu.memory_space<vmem>>, vector<384x256xf32>
      tpu.vector_store %arg6[%c0_14, %c0_15], %15 {strides = array<i32>} : memref<384x256xf32, #tpu.memory_space<vmem>>, vector<384x256xf32>,
    } else {
    }
    return
  }
  func.func @transform_0(%arg0: i32, %arg1: i32, %arg2: i32) -> (i32, i32) {
    %c0_i32 = arith.constant 0 : i32
    return %arg0, %arg2 : i32, i32
  }
  func.func @transform_1(%arg0: i32, %arg1: i32, %arg2: i32) -> (i32, i32) {
    %c0_i32 = arith.constant 0 : i32
    return %arg2, %arg1 : i32, i32
  }
  func.func @transform_2(%arg0: i32, %arg1: i32, %arg2: i32) -> (i32, i32) {
    %c0_i32 = arith.constant 0 : i32
    %c0_i32_0 = arith.constant 0 : i32
    return %c0_i32, %arg1 : i32, i32
  }
  func.func @transform_3(%arg0: i32, %arg1: i32, %arg2: i32) -> (i32, i32) {
    %c0_i32 = arith.constant 0 : i32
    return %arg0, %arg1 : i32, i32
  }
}

</mosaic_0001>

<llo_original>
// kernel: kdgqa_forward.4
$region0: #{kdgqa_forward.4}
  #allocation0 [shape = 'u32[]', space=smem, size = 0x4, offset = 0x4, fixed_abs, tag = 'smem constant byte address 0x4 - core index']
  #allocation1 [shape = 'u32[144,128]{1,0:T(1,128)}', space=vmem, size = 0x12000, scoped, tag = 'internal scratch']
  #allocation2 [shape = 's32[1]{0}', space=sflag, size = 0x4, scoped, tag = 'scoped memory for kdgqa_forward.4']
  #allocation3 [shape = 'u8[512]{0}', space=smem, size = 0x200, scoped, tag = 'prefetched SMEM operand 0']
  %s0 = inlined_call_operand.vmem [shape: s32[8], index: 0, kind: input, shape index: {}]
  %s1 = inlined_call_operand.vmem [shape: f32[2,16,384,32], index: 1, kind: input, shape index: {}, may-alias: {1,2,3}]
  %s2 = inlined_call_operand.vmem [shape: f32[2,16,384,32], index: 2, kind: input, shape index: {}, may-alias: {1,2,3}]
  %s3 = inlined_call_operand.vmem [shape: f32[2,16,384,32], index: 3, kind: input, shape index: {}, may-alias: {1,2,3}]
  %s4 = inlined_call_operand.vmem [shape: f32[2,8,384,32], index: 4, kind: output, shape index: {}]
  %s5 = sld [smem:[#allocation0]]
  $region45: #{kdgqa_forward.4} parent=0
    _
  %s7 = ssub.s32 1, %s5
  %s8 = scalar_select 0, %s7, %s5
  %s9 = sshll.u32 %s0, 4
  %s10 = int_to_ptr.vmem [resolvable:$true] %s9
  %12 = dma.vmem_to_smem %s10, 16, [#allocation3], [#allocation2]
  %13 = dma.done [#allocation2], 16
  %14 = sfence
  loop: start=0, step=1, limit=50
  $region2: #{kdgqa_forward.4} parent=0 // loop_pre_header
    _
  $region3: #{kdgqa_forward.4} parent=0 // loop_header
    %s16 = sphi 0, %s20
    %p17 = scmp.ge.s32.totalorder %s16, 50
    %s23 = sphi 0, %s42
    %s24 = sphi 0, %s38
    %s25 = sphi 0, %s34
    %s26 = sphi 0, %s23
    %s27 = sphi 0, %s24
    %s28 = sphi 0, %s25
    %s29 = sphi 0, %s26
    %s30 = sphi 0, %s27
    %s31 = sphi 0, %s28
    %s49 = sphi 0, %s51
    %s52 = sphi 0, %s49
    %s53 = sphi 0, %s52
    %s69 = sphi 0, %s53
    %s81 = sphi 0, %s83
    %s84 = sphi 0, %s81
    %s85 = sphi 0, %s84
    %s101 = sphi 0, %s85
    %s113 = sphi 0, %s115
    %s116 = sphi 0, %s113
    %s117 = sphi 0, %s116
    %s133 = sphi 0, %s117
    %s143 = sphi 0, %s145
    %s146 = sphi 0, %s143
    %s147 = sphi 0, %s146
    %s163 = sphi 0, %s147
  $region4: #{kdgqa_forward.4} parent=0 // loop_header_branch
    %19 = sbr.rel (%p17) target = $region8
  $region5: #{kdgqa_forward.4} parent=0 // loop_body
    %s21 = ssub.s32 %s16, 1
    %s22 = ssub.s32 %s16, 2
    %s32 = sadd.s32 1, %s25
    %p33 = scmp.ge.s32.totalorder %s32, 3
    %s34 = scalar_select %p33, 0, %s32
    %s35 = sadd.s32 1, %s24
    %s36 = scalar_select %p33, %s35, %s24
    %p37 = scmp.ge.s32.totalorder %s36, 8
    %s38 = scalar_select %p37, 0, %s36
    %s39 = sadd.s32 1, %s23
    %s40 = scalar_select %p37, %s39, %s23
    %p41 = scmp.ge.s32.totalorder %s40, 2
    %s42 = scalar_select %p41, 0, %s40
    %s43 = ssub.s32 %s23, %s42
    %s44 = ssub.s32 %s24, %s38
    %s45 = sor.u32 %s43, %s44
    %s46 = ssub.s32 %s25, %s34
    %s47 = sor.u32 %s45, %s46
    %p48 = scmp.eq.s32.totalorder %s47, 0
    %s50 = sadd.s32 %s49, 1
    %s51 = scalar_select %p48, %s49, %s50
    %p54 = pneg %p48
    %p55 = scmp.eq.s32.totalorder %s16, 47
    %p56 = por %p54, %p55
    %p57 = scmp.ne.s32.totalorder %s49, %s52
    %p58 = scmp.eq.s32.totalorder %s16, 0
    %p59 = por %p57, %p58
    %p60 = scmp.ne.s32.totalorder %s49, %s52
    %p61 = scmp.eq.s32.totalorder %s21, 47
    %p62 = por %p60, %p61
    %p63 = scmp.ne.s32.totalorder %s52, %s53
    %p64 = scmp.eq.s32.totalorder %s21, 0
    %p65 = por %p63, %p64
    %p66 = scmp.ne.s32.totalorder %s52, %s53
    %p67 = scmp.eq.s32.totalorder %s22, 47
    %p68 = por %p66, %p67
    %p70 = scmp.ne.s32.totalorder %s53, %s69
    %p71 = scmp.eq.s32.totalorder %s22, 0
    %p72 = por %p70, %p71
    %s73 = sld [smem:[#allocation3 + %s24]]
    %s74 = sadd.s32 %s73, 8
    %s75 = sld [smem:[#allocation3 + %s38]]
    %s76 = sadd.s32 %s75, 8
    %s77 = ssub.s32 %s23, %s42
    %s78 = ssub.s32 %s74, %s76
    %s79 = sor.u32 %s77, %s78
    %p80 = scmp.eq.s32.totalorder %s79, 0
    %s82 = sadd.s32 %s81, 1
    %s83 = scalar_select %p80, %s81, %s82
    %p86 = pneg %p80
    %p87 = scmp.eq.s32.totalorder %s16, 47
    %p88 = por %p86, %p87
    %p89 = scmp.ne.s32.totalorder %s81, %s84
    %p90 = scmp.eq.s32.totalorder %s16, 0
    %p91 = por %p89, %p90
    %p92 = scmp.ne.s32.totalorder %s81, %s84
    %p93 = scmp.eq.s32.totalorder %s21, 47
    %p94 = por %p92, %p93
    %p95 = scmp.ne.s32.totalorder %s84, %s85
    %p96 = scmp.eq.s32.totalorder %s21, 0
    %p97 = por %p95, %p96
    %p98 = scmp.ne.s32.totalorder %s84, %s85
    %p99 = scmp.eq.s32.totalorder %s22, 47
    %p100 = por %p98, %p99
    %p102 = scmp.ne.s32.totalorder %s85, %s101
    %p103 = scmp.eq.s32.totalorder %s22, 0
    %p104 = por %p102, %p103
    %s105 = sld [smem:[#allocation3 + %s24]]
    %s106 = sadd.s32 %s105, 12
    %s107 = sld [smem:[#allocation3 + %s38]]
    %s108 = sadd.s32 %s107, 12
    %s109 = ssub.s32 %s23, %s42
    %s110 = ssub.s32 %s106, %s108
    %s111 = sor.u32 %s109, %s110
    %p112 = scmp.eq.s32.totalorder %s111, 0
    %s114 = sadd.s32 %s113, 1
    %s115 = scalar_select %p112, %s113, %s114
    %p118 = pneg %p112
    %p119 = scmp.eq.s32.totalorder %s16, 47
    %p120 = por %p118, %p119
    %p121 = scmp.ne.s32.totalorder %s113, %s116
    %p122 = scmp.eq.s32.totalorder %s16, 0
    %p123 = por %p121, %p122
    %p124 = scmp.ne.s32.totalorder %s113, %s116
    %p125 = scmp.eq.s32.totalorder %s21, 47
    %p126 = por %p124, %p125
    %p127 = scmp.ne.s32.totalorder %s116, %s117
    %p128 = scmp.eq.s32.totalorder %s21, 0
    %p129 = por %p127, %p128
    %p130 = scmp.ne.s32.totalorder %s116, %s117
    %p131 = scmp.eq.s32.totalorder %s22, 47
    %p132 = por %p130, %p131
    %p134 = scmp.ne.s32.totalorder %s117, %s133
    %p135 = scmp.eq.s32.totalorder %s22, 0
    %p136 = por %p134, %p135
    %s137 = ssub.s32 %s23, %s42
    %s138 = ssub.s32 %s24, %s38
    %s139 = sor.u32 %s137, %s138
    %s140 = ssub.s32 %s25, %s34
    %s141 = sor.u32 %s139, %s140
    %p142 = scmp.eq.s32.totalorder %s141, 0
    %s144 = sadd.s32 %s143, 1
    %s145 = scalar_select %p142, %s143, %s144
    %p148 = pneg %p142
    %p149 = scmp.eq.s32.totalorder %s16, 47
    %p150 = por %p148, %p149
    %p151 = scmp.ne.s32.totalorder %s143, %s146
    %p152 = scmp.eq.s32.totalorder %s16, 0
    %p153 = por %p151, %p152
    %p154 = scmp.ne.s32.totalorder %s143, %s146
    %p155 = scmp.eq.s32.totalorder %s21, 47
    %p156 = por %p154, %p155
    %p157 = scmp.ne.s32.totalorder %s146, %s147
    %p158 = scmp.eq.s32.totalorder %s21, 0
    %p159 = por %p157, %p158
    %p160 = scmp.ne.s32.totalorder %s146, %s147
    %p161 = scmp.eq.s32.totalorder %s22, 47
    %p162 = por %p160, %p161
    %p164 = scmp.ne.s32.totalorder %s147, %s163
    %p165 = scmp.eq.s32.totalorder %s22, 0
    %p166 = por %p164, %p165
    %p167 = scmp.le.s32.totalorder 1, %s16
    %p168 = scmp.lt.s32.totalorder %s16, 49
    %p169 = pnand %p167, %p168
    %p170 = pneg %p169
    // Predicated region
    $region9: #{kdgqa_forward.4} parent=5 // pred_check
      _
    $region10: #{kdgqa_forward.4} parent=5 // pred_check_branch
      %172 = sbr.rel (%p169) target = $region12
    $region11: #{kdgqa_forward.4} parent=5 // pred_region
      %s173 = ssub.s32 %s16, 1
    $region12: #{kdgqa_forward.4} parent=5 // pred_fallthru
      _
    %p174 = scmp.lt.s32.totalorder %s16, 48
    // Predicated region
    $region13: #{kdgqa_forward.4} parent=5 // pred_check
      %p175 = pneg %p174
    $region14: #{kdgqa_forward.4} parent=5 // pred_check_branch
      %177 = sbr.rel (%p175) target = $region16
    $region15: #{kdgqa_forward.4} parent=5 // pred_region
      // Predicated region
      $region17: #{kdgqa_forward.4} parent=15 // pred_check
        %p178 = pneg %p59
      $region18: #{kdgqa_forward.4} parent=15 // pred_check_branch
        %180 = sbr.rel (%p178) target = $region20
      $region19: #{kdgqa_forward.4} parent=15 // pred_region
        %s181 = smul.u32 16, %s25
        %p182 = scmp.lt.s32.totalorder %s23, 1
        %s183 = scalar_select %p182, %s23, 1
        %p184 = scmp.lt.s32.totalorder %s24, 15
        %s185 = scalar_select %p184, %s24, 15
        %p186 = scmp.lt.s32.totalorder %s181, 47
        %s187 = scalar_select %p186, %s181, 47
        %s188 = smul.addr %s185, 48
        %s189 = sadd.s32 %s187, %s188
        %s190 = smul.addr %s183, 768
        %s191 = sadd.s32 %s189, %s190
        %s192 = smul.addr %s191, 8
        %s193 = scalar_lea.vmem %s1, %s192
        %s194 = smul.u32 16, %s25
      $region20: #{kdgqa_forward.4} parent=15 // pred_fallthru
        _
      // Predicated region
      $region21: #{kdgqa_forward.4} parent=15 // pred_check
        %p195 = pneg %p91
      $region22: #{kdgqa_forward.4} parent=15 // pred_check_branch
        %197 = sbr.rel (%p195) target = $region24
      $region23: #{kdgqa_forward.4} parent=15 // pred_region
        %s198 = sld [smem:[#allocation3 + %s24]]
        %s199 = sadd.s32 %s198, 8
        %p200 = scmp.lt.s32.totalorder %s23, 1
        %s201 = scalar_select %p200, %s23, 1
        %p202 = scmp.lt.s32.totalorder %s199, 15
        %s203 = scalar_select %p202, %s199, 15
        %s204 = smul.addr %s203, 48
        %s205 = smul.addr %s201, 768
        %s206 = sadd.s32 %s204, %s205
        %s207 = smul.addr %s206, 8
        %s208 = scalar_lea.vmem %s2, %s207
        %s209 = sld [smem:[#allocation3 + %s24]]
        %s210 = sadd.s32 %s209, 8
      $region24: #{kdgqa_forward.4} parent=15 // pred_fallthru
        _
      // Predicated region
      $region25: #{kdgqa_forward.4} parent=15 // pred_check
        %p211 = pneg %p123
      $region26: #{kdgqa_forward.4} parent=15 // pred_check_branch
        %213 = sbr.rel (%p211) target = $region28
      $region27: #{kdgqa_forward.4} parent=15 // pred_region
        %s214 = sld [smem:[#allocation3 + %s24]]
        %s215 = sadd.s32 %s214, 12
        %p216 = scmp.lt.s32.totalorder %s23, 1
        %s217 = scalar_select %p216, %s23, 1
        %p218 = scmp.lt.s32.totalorder %s215, 15
        %s219 = scalar_select %p218, %s215, 15
        %s220 = smul.addr %s219, 48
        %s221 = smul.addr %s217, 768
        %s222 = sadd.s32 %s220, %s221
        %s223 = smul.addr %s222, 8
        %s224 = scalar_lea.vmem %s3, %s223
        %s225 = sld [smem:[#allocation3 + %s24]]
        %s226 = sadd.s32 %s225, 12
      $region28: #{kdgqa_forward.4} parent=15 // pred_fallthru
        _
    $region16: #{kdgqa_forward.4} parent=5 // pred_fallthru
      _
    %p227 = scmp.le.s32.totalorder 1, %s16
    %p228 = scmp.lt.s32.totalorder %s16, 49
    %p229 = pnand %p227, %p228
    %p230 = pneg %p229
    // Predicated region
    $region29: #{kdgqa_forward.4} parent=5 // pred_check
      _
    $region30: #{kdgqa_forward.4} parent=5 // pred_check_branch
      %232 = sbr.rel (%p229) target = $region32
    $region31: #{kdgqa_forward.4} parent=5 // pred_region
      %s233 = ssub.s32 %s16, 1
      %s234 = smul.u32 16, %s28
      %p235 = scmp.lt.s32.totalorder %s26, 1
      %s236 = scalar_select %p235, %s26, 1
      %p237 = scmp.lt.s32.totalorder %s27, 15
      %s238 = scalar_select %p237, %s27, 15
      %p239 = scmp.lt.s32.totalorder %s234, 47
      %s240 = scalar_select %p239, %s234, 47
      %s241 = smul.addr %s238, 48
      %s242 = sadd.s32 %s240, %s241
      %s243 = smul.addr %s236, 768
      %s244 = sadd.s32 %s242, %s243
      %s245 = smul.addr %s244, 8
      %s246 = scalar_lea.vmem %s1, %s245
      %p247 = pneg %p65
      %p248 = pneg %p62
      %s249 = sld [smem:[#allocation3 + %s27]]
      %s250 = sadd.s32 %s249, 8
      %p251 = scmp.lt.s32.totalorder %s26, 1
      %s252 = scalar_select %p251, %s26, 1
      %p253 = scmp.lt.s32.totalorder %s250, 15
      %s254 = scalar_select %p253, %s250, 15
      %s255 = smul.addr %s254, 48
      %s256 = smul.addr %s252, 768
      %s257 = sadd.s32 %s255, %s256
      %s258 = smul.addr %s257, 8
      %s259 = scalar_lea.vmem %s2, %s258
      %p260 = pneg %p97
      %p261 = pneg %p94
      %s262 = sld [smem:[#allocation3 + %s27]]
      %s263 = sadd.s32 %s262, 12
      %p264 = scmp.lt.s32.totalorder %s26, 1
      %s265 = scalar_select %p264, %s26, 1
      %p266 = scmp.lt.s32.totalorder %s263, 15
      %s267 = scalar_select %p266, %s263, 15
      %s268 = smul.addr %s267, 48
      %s269 = smul.addr %s265, 768
      %s270 = sadd.s32 %s268, %s269
      %s271 = smul.addr %s270, 8
      %s272 = scalar_lea.vmem %s3, %s271
      %p273 = pneg %p129
      %p274 = pneg %p126
      %p275 = pneg %p159
      %p276 = pneg %p156
      %s277 = smul.u32 16, %s28
      %p278 = scmp.lt.s32.totalorder %s26, 1
      %s279 = scalar_select %p278, %s26, 1
      %p280 = scmp.lt.s32.totalorder %s27, 7
      %s281 = scalar_select %p280, %s27, 7
      %p282 = scmp.lt.s32.totalorder %s277, 47
      %s283 = scalar_select %p282, %s277, 47
      %s284 = smul.addr %s281, 48
      %s285 = sadd.s32 %s283, %s284
      %s286 = smul.addr %s279, 384
      %s287 = sadd.s32 %s285, %s286
      %s288 = smul.addr %s287, 8
      %s289 = scalar_lea.vmem %s4, %s288
      %s290 = smul.u32 16, %s28
      %p291 = scmp.lt.s32.totalorder %s26, 1
      %s292 = scalar_select %p291, %s26, 1
      %p293 = scmp.lt.s32.totalorder %s27, 15
      %s294 = scalar_select %p293, %s27, 15
      %p295 = scmp.lt.s32.totalorder %s290, 47
      %s296 = scalar_select %p295, %s290, 47
      %s297 = smul.addr %s294, 48
      %s298 = sadd.s32 %s296, %s297
      %s299 = smul.addr %s292, 768
      %s300 = sadd.s32 %s298, %s299
      %s301 = smul.addr %s300, 8
      %s302 = scalar_lea.vmem %s1, %s301
      %s303 = smul.u32 16, %s28
      %s304 = sld [smem:[#allocation3 + %s27]]
      %s305 = sadd.s32 %s304, 8
      %p306 = scmp.lt.s32.totalorder %s26, 1
      %s307 = scalar_select %p306, %s26, 1
      %p308 = scmp.lt.s32.totalorder %s305, 15
      %s309 = scalar_select %p308, %s305, 15
      %s310 = smul.addr %s309, 48
      %s311 = smul.addr %s307, 768
      %s312 = sadd.s32 %s310, %s311
      %s313 = smul.addr %s312, 8
      %s314 = scalar_lea.vmem %s2, %s313
      %s315 = sld [smem:[#allocation3 + %s27]]
      %s316 = sadd.s32 %s315, 8
      %s317 = sld [smem:[#allocation3 + %s27]]
      %s318 = sadd.s32 %s317, 12
      %p319 = scmp.lt.s32.totalorder %s26, 1
      %s320 = scalar_select %p319, %s26, 1
      %p321 = scmp.lt.s32.totalorder %s318, 15
      %s322 = scalar_select %p321, %s318, 15
      %s323 = smul.addr %s322, 48
      %s324 = smul.addr %s320, 768
      %s325 = sadd.s32 %s323, %s324
      %s326 = smul.addr %s325, 8
      %s327 = scalar_lea.vmem %s3, %s326
      %s328 = sld [smem:[#allocation3 + %s27]]
      %s329 = sadd.s32 %s328, 12
      %s330 = smul.u32 16, %s28
      %p331 = scmp.lt.s32.totalorder %s26, 1
      %s332 = scalar_select %p331, %s26, 1
      %p333 = scmp.lt.s32.totalorder %s27, 7
      %s334 = scalar_select %p333, %s27, 7
      %p335 = scmp.lt.s32.totalorder %s330, 47
      %s336 = scalar_select %p335, %s330, 47
      %s337 = smul.addr %s334, 48
      %s338 = sadd.s32 %s336, %s337
      %s339 = smul.addr %s332, 384
      %s340 = sadd.s32 %s338, %s339
      %s341 = smul.addr %s340, 8
      %s342 = scalar_lea.vmem %s4, %s341
      %s343 = smul.u32 16, %s28
      %v344 = vld [vmem:[%s302] sm:$0xff]
      %v345 = vld [vmem:[%s302 + $0x8] sm:$0xff]
      %v346 = vld [vmem:[%s302 + $0x10] sm:$0xff]
      %v347 = vld [vmem:[%s302 + $0x18] sm:$0xff]
      %v348 = vld [vmem:[%s302 + $0x20] sm:$0xff]
      %v349 = vld [vmem:[%s302 + $0x28] sm:$0xff]
      %v350 = vld [vmem:[%s302 + $0x30] sm:$0xff]
      %v351 = vld [vmem:[%s302 + $0x38] sm:$0xff]
      %v352 = vld [vmem:[%s302 + $0x40] sm:$0xff]
      %v353 = vld [vmem:[%s302 + $0x48] sm:$0xff]
      %v354 = vld [vmem:[%s302 + $0x50] sm:$0xff]
      %v355 = vld [vmem:[%s302 + $0x58] sm:$0xff]
      %v356 = vld [vmem:[%s302 + $0x60] sm:$0xff]
      %v357 = vld [vmem:[%s302 + $0x68] sm:$0xff]
      %v358 = vld [vmem:[%s302 + $0x70] sm:$0xff]
      %v359 = vld [vmem:[%s302 + $0x78] sm:$0xff]
      %v360 = vld [vmem:[%s314] sm:$0xff]
      %v361 = vld [vmem:[%s314 + $0x8] sm:$0xff]
      %v362 = vld [vmem:[%s314 + $0x10] sm:$0xff]
      %v363 = vld [vmem:[%s314 + $0x18] sm:$0xff]
      %v364 = vld [vmem:[%s314 + $0x20] sm:$0xff]
      %v365 = vld [vmem:[%s314 + $0x28] sm:$0xff]
      %v366 = vld [vmem:[%s314 + $0x30] sm:$0xff]
      %v367 = vld [vmem:[%s314 + $0x38] sm:$0xff]
      %v368 = vld [vmem:[%s314 + $0x40] sm:$0xff]
      %v369 = vld [vmem:[%s314 + $0x48] sm:$0xff]
      %v370 = vld [vmem:[%s314 + $0x50] sm:$0xff]
      %v371 = vld [vmem:[%s314 + $0x58] sm:$0xff]
      %v372 = vld [vmem:[%s314 + $0x60] sm:$0xff]
      %v373 = vld [vmem:[%s314 + $0x68] sm:$0xff]
      %v374 = vld [vmem:[%s314 + $0x70] sm:$0xff]
      %v375 = vld [vmem:[%s314 + $0x78] sm:$0xff]
      %v376 = vld [vmem:[%s314 + $0x80] sm:$0xff]
      %v377 = vld [vmem:[%s314 + $0x88] sm:$0xff]
      %v378 = vld [vmem:[%s314 + $0x90] sm:$0xff]
      %v379 = vld [vmem:[%s314 + $0x98] sm:$0xff]
      %v380 = vld [vmem:[%s314 + $0xa0] sm:$0xff]
      %v381 = vld [vmem:[%s314 + $0xa8] sm:$0xff]
      %v382 = vld [vmem:[%s314 + $0xb0] sm:$0xff]
      %v383 = vld [vmem:[%s314 + $0xb8] sm:$0xff]
      %v384 = vld [vmem:[%s314 + $0xc0] sm:$0xff]
      %v385 = vld [vmem:[%s314 + $0xc8] sm:$0xff]
      %v386 = vld [vmem:[%s314 + $0xd0] sm:$0xff]
      %v387 = vld [vmem:[%s314 + $0xd8] sm:$0xff]
      %v388 = vld [vmem:[%s314 + $0xe0] sm:$0xff]
      %v389 = vld [vmem:[%s314 + $0xe8] sm:$0xff]
      %v390 = vld [vmem:[%s314 + $0xf0] sm:$0xff]
      %v391 = vld [vmem:[%s314 + $0xf8] sm:$0xff]
      %v392 = vld [vmem:[%s314 + $0x100] sm:$0xff]
      %v393 = vld [vmem:[%s314 + $0x108] sm:$0xff]
      %v394 = vld [vmem:[%s314 + $0x110] sm:$0xff]
      %v395 = vld [vmem:[%s314 + $0x118] sm:$0xff]
      %v396 = vld [vmem:[%s314 + $0x120] sm:$0xff]
      %v397 = vld [vmem:[%s314 + $0x128] sm:$0xff]
      %v398 = vld [vmem:[%s314 + $0x130] sm:$0xff]
      %v399 = vld [vmem:[%s314 + $0x138] sm:$0xff]
      %v400 = vld [vmem:[%s314 + $0x140] sm:$0xff]
      %v401 = vld [vmem:[%s314 + $0x148] sm:$0xff]
      %v402 = vld [vmem:[%s314 + $0x150] sm:$0xff]
      %v403 = vld [vmem:[%s314 + $0x158] sm:$0xff]
      %v404 = vld [vmem:[%s314 + $0x160] sm:$0xff]
      %v405 = vld [vmem:[%s314 + $0x168] sm:$0xff]
      %v406 = vld [vmem:[%s314 + $0x170] sm:$0xff]
      %v407 = vld [vmem:[%s314 + $0x178] sm:$0xff]
      %v408 = vld [vmem:[%s327] sm:$0xff]
      %v409 = vld [vmem:[%s327 + $0x8] sm:$0xff]
      %v410 = vld [vmem:[%s327 + $0x10] sm:$0xff]
      %v411 = vld [vmem:[%s327 + $0x18] sm:$0xff]
      %v412 = vld [vmem:[%s327 + $0x20] sm:$0xff]
      %v413 = vld [vmem:[%s327 + $0x28] sm:$0xff]
      %v414 = vld [vmem:[%s327 + $0x30] sm:$0xff]
      %v415 = vld [vmem:[%s327 + $0x38] sm:$0xff]
      %v416 = vld [vmem:[%s327 + $0x40] sm:$0xff]
      %v417 = vld [vmem:[%s327 + $0x48] sm:$0xff]
      %v418 = vld [vmem:[%s327 + $0x50] sm:$0xff]
      %v419 = vld [vmem:[%s327 + $0x58] sm:$0xff]
      %v420 = vld [vmem:[%s327 + $0x60] sm:$0xff]
      %v421 = vld [vmem:[%s327 + $0x68] sm:$0xff]
      %v422 = vld [vmem:[%s327 + $0x70] sm:$0xff]
      %v423 = vld [vmem:[%s327 + $0x78] sm:$0xff]
      %v424 = vld [vmem:[%s327 + $0x80] sm:$0xff]
      %v425 = vld [vmem:[%s327 + $0x88] sm:$0xff]
      %v426 = vld [vmem:[%s327 + $0x90] sm:$0xff]
      %v427 = vld [vmem:[%s327 + $0x98] sm:$0xff]
      %v428 = vld [vmem:[%s327 + $0xa0] sm:$0xff]
      %v429 = vld [vmem:[%s327 + $0xa8] sm:$0xff]
      %v430 = vld [vmem:[%s327 + $0xb0] sm:$0xff]
      %v431 = vld [vmem:[%s327 + $0xb8] sm:$0xff]
      %v432 = vld [vmem:[%s327 + $0xc0] sm:$0xff]
      %v433 = vld [vmem:[%s327 + $0xc8] sm:$0xff]
      %v434 = vld [vmem:[%s327 + $0xd0] sm:$0xff]
      %v435 = vld [vmem:[%s327 + $0xd8] sm:$0xff]
      %v436 = vld [vmem:[%s327 + $0xe0] sm:$0xff]
      %v437 = vld [vmem:[%s327 + $0xe8] sm:$0xff]
      %v438 = vld [vmem:[%s327 + $0xf0] sm:$0xff]
      %v439 = vld [vmem:[%s327 + $0xf8] sm:$0xff]
      %v440 = vld [vmem:[%s327 + $0x100] sm:$0xff]
      %v441 = vld [vmem:[%s327 + $0x108] sm:$0xff]
      %v442 = vld [vmem:[%s327 + $0x110] sm:$0xff]
      %v443 = vld [vmem:[%s327 + $0x118] sm:$0xff]
      %v444 = vld [vmem:[%s327 + $0x120] sm:$0xff]
      %v445 = vld [vmem:[%s327 + $0x128] sm:$0xff]
      %v446 = vld [vmem:[%s327 + $0x130] sm:$0xff]
      %v447 = vld [vmem:[%s327 + $0x138] sm:$0xff]
      %v448 = vld [vmem:[%s327 + $0x140] sm:$0xff]
      %v449 = vld [vmem:[%s327 + $0x148] sm:$0xff]
      %v450 = vld [vmem:[%s327 + $0x150] sm:$0xff]
      %v451 = vld [vmem:[%s327 + $0x158] sm:$0xff]
      %v452 = vld [vmem:[%s327 + $0x160] sm:$0xff]
      %v453 = vld [vmem:[%s327 + $0x168] sm:$0xff]
      %v454 = vld [vmem:[%s327 + $0x170] sm:$0xff]
      %v455 = vld [vmem:[%s327 + $0x178] sm:$0xff]
      %vm456 = vcmask 261120
      %v458 = vsel %vm456, %v344, 0
      %v461 = vsel %vm456, %v345, 0
      %v464 = vsel %vm456, %v346, 0
      %v467 = vsel %vm456, %v347, 0
      %v470 = vsel %vm456, %v348, 0
      %v473 = vsel %vm456, %v349, 0
      %v476 = vsel %vm456, %v350, 0
      %v479 = vsel %vm456, %v351, 0
      %v482 = vsel %vm456, %v352, 0
      %v485 = vsel %vm456, %v353, 0
      %v488 = vsel %vm456, %v354, 0
      %v491 = vsel %vm456, %v355, 0
      %v494 = vsel %vm456, %v356, 0
      %v497 = vsel %vm456, %v357, 0
      %v500 = vsel %vm456, %v358, 0
      %v503 = vsel %vm456, %v359, 0
      %v506 = vsel %vm456, %v360, 0
      %v509 = vsel %vm456, %v361, 0
      %v512 = vsel %vm456, %v362, 0
      %v515 = vsel %vm456, %v363, 0
      %v518 = vsel %vm456, %v364, 0
      %v521 = vsel %vm456, %v365, 0
      %v524 = vsel %vm456, %v366, 0
      %v527 = vsel %vm456, %v367, 0
      %v530 = vsel %vm456, %v368, 0
      %v533 = vsel %vm456, %v369, 0
      %v536 = vsel %vm456, %v370, 0
      %v539 = vsel %vm456, %v371, 0
      %v542 = vsel %vm456, %v372, 0
      %v545 = vsel %vm456, %v373, 0
      %v548 = vsel %vm456, %v374, 0
      %v551 = vsel %vm456, %v375, 0
      %v554 = vsel %vm456, %v376, 0
      %v557 = vsel %vm456, %v377, 0
      %v560 = vsel %vm456, %v378, 0
      %v563 = vsel %vm456, %v379, 0
      %v566 = vsel %vm456, %v380, 0
      %v569 = vsel %vm456, %v381, 0
      %v572 = vsel %vm456, %v382, 0
      %v575 = vsel %vm456, %v383, 0
      %v578 = vsel %vm456, %v384, 0
      %v581 = vsel %vm456, %v385, 0
      %v584 = vsel %vm456, %v386, 0
      %v587 = vsel %vm456, %v387, 0
      %v590 = vsel %vm456, %v388, 0
      %v593 = vsel %vm456, %v389, 0
      %v596 = vsel %vm456, %v390, 0
      %v599 = vsel %vm456, %v391, 0
      %v602 = vsel %vm456, %v392, 0
      %v605 = vsel %vm456, %v393, 0
      %v608 = vsel %vm456, %v394, 0
      %v611 = vsel %vm456, %v395, 0
      %v614 = vsel %vm456, %v396, 0
      %v617 = vsel %vm456, %v397, 0
      %v620 = vsel %vm456, %v398, 0
      %v623 = vsel %vm456, %v399, 0
      %v626 = vsel %vm456, %v400, 0
      %v629 = vsel %vm456, %v401, 0
      %v632 = vsel %vm456, %v402, 0
      %v635 = vsel %vm456, %v403, 0
      %v638 = vsel %vm456, %v404, 0
      %v641 = vsel %vm456, %v405, 0
      %v644 = vsel %vm456, %v406, 0
      %v647 = vsel %vm456, %v407, 0
      %649 = vmatprep.subr.mxu0 0.0
      %650 = vmatpush1.xpose.msra.mxu0 %v551
      %651 = vmatprep.subr.mxu0 0.0
      %652 = vmatpush1.xpose.msra.mxu0 %v548
      %653 = vmatprep.subr.mxu0 0.0
      %654 = vmatpush1.xpose.msra.mxu0 %v545
      %655 = vmatprep.subr.mxu0 0.0
      %656 = vmatpush1.xpose.msra.mxu0 %v542
      %657 = vmatprep.subr.mxu0 0.0
      %658 = vmatpush1.xpose.msra.mxu0 %v539
      %659 = vmatprep.subr.mxu0 0.0
      %660 = vmatpush1.xpose.msra.mxu0 %v536
      %661 = vmatprep.subr.mxu0 0.0
      %662 = vmatpush1.xpose.msra.mxu0 %v533
      %663 = vmatprep.subr.mxu0 0.0
      %664 = vmatpush1.xpose.msra.mxu0 %v530
      %665 = vmatprep.subr.mxu0 0.0
      %666 = vmatpush1.xpose.msra.mxu0 %v527
      %667 = vmatprep.subr.mxu0 0.0
      %668 = vmatpush1.xpose.msra.mxu0 %v524
      %669 = vmatprep.subr.mxu0 0.0
      %670 = vmatpush1.xpose.msra.mxu0 %v521
      %671 = vmatprep.subr.mxu0 0.0
      %672 = vmatpush1.xpose.msra.mxu0 %v518
      %673 = vmatprep.subr.mxu0 0.0
      %674 = vmatpush1.xpose.msra.mxu0 %v515
      %675 = vmatprep.subr.mxu0 0.0
      %676 = vmatpush1.xpose.msra.mxu0 %v512
      %677 = vmatprep.subr.mxu0 0.0
      %678 = vmatpush1.xpose.msra.mxu0 %v509
      %679 = vmatprep.subr.mxu0 0.0
      %680 = vmatpush1.xpose.msra.mxu0 %v506
      %681 = vmatprep.subr.mxu0 0.0
      %682 = vmatpush2.xpose.msra.mxu0 %v599
      %683 = vmatprep.subr.mxu0 0.0
      %684 = vmatpush2.xpose.msra.mxu0 %v596
      %685 = vmatprep.subr.mxu0 0.0
      %686 = vmatpush2.xpose.msra.mxu0 %v593
      %687 = vmatprep.subr.mxu0 0.0
      %688 = vmatpush2.xpose.msra.mxu0 %v590
      %689 = vmatprep.subr.mxu0 0.0
      %690 = vmatpush2.xpose.msra.mxu0 %v587
      %691 = vmatprep.subr.mxu0 0.0
      %692 = vmatpush2.xpose.msra.mxu0 %v584
      %693 = vmatprep.subr.mxu0 0.0
      %694 = vmatpush2.xpose.msra.mxu0 %v581
      %695 = vmatprep.subr.mxu0 0.0
      %696 = vmatpush2.xpose.msra.mxu0 %v578
      %697 = vmatprep.subr.mxu0 0.0
      %698 = vmatpush2.xpose.msra.mxu0 %v575
      %699 = vmatprep.subr.mxu0 0.0
      %700 = vmatpush2.xpose.msra.mxu0 %v572
      %701 = vmatprep.subr.mxu0 0.0
      %702 = vmatpush2.xpose.msra.mxu0 %v569
      %703 = vmatprep.subr.mxu0 0.0
      %704 = vmatpush2.xpose.msra.mxu0 %v566
      %705 = vmatprep.subr.mxu0 0.0
      %706 = vmatpush2.xpose.msra.mxu0 %v563
      %707 = vmatprep.subr.mxu0 0.0
      %708 = vmatpush2.xpose.msra.mxu0 %v560
      %709 = vmatprep.subr.mxu0 0.0
      %710 = vmatpush2.xpose.msra.mxu0 %v557
      %711 = vmatprep.subr.mxu0 0.0
      %712 = vmatpush2.xpose.msra.mxu0 %v554
      %713 = vmatprep.mubr.f32.mxu0 0.0
      %714 = vmatmul.mubr.f32.gmra.mxu0 %v458
      %v715 = vpop.f32.mrf.mxu0
      %v716 = vadd.f32 0.0, %v715
      %v717 = vpop.f32.mrf.mxu0
      %v718 = vadd.f32 0.0, %v717
      %719 = vmatprep.mubr.f32.mxu0 0.0
      %720 = vmatmul.mubr.f32.gmra.mxu0 %v461
      %v721 = vpop.f32.mrf.mxu0
      %v722 = vadd.f32 0.0, %v721
      %v723 = vpop.f32.mrf.mxu0
      %v724 = vadd.f32 0.0, %v723
      %725 = vmatprep.mubr.f32.mxu0 0.0
      %726 = vmatmul.mubr.f32.gmra.mxu0 %v464
      %v727 = vpop.f32.mrf.mxu0
      %v728 = vadd.f32 0.0, %v727
      %v729 = vpop.f32.mrf.mxu0
      %v730 = vadd.f32 0.0, %v729
      %731 = vmatprep.mubr.f32.mxu0 0.0
      %732 = vmatmul.mubr.f32.gmra.mxu0 %v467
      %v733 = vpop.f32.mrf.mxu0
      %v734 = vadd.f32 0.0, %v733
      %v735 = vpop.f32.mrf.mxu0
      %v736 = vadd.f32 0.0, %v735
      %737 = vmatprep.mubr.f32.mxu0 0.0
      %738 = vmatmul.mubr.f32.gmra.mxu0 %v470
      %v739 = vpop.f32.mrf.mxu0
      %v740 = vadd.f32 0.0, %v739
      %v741 = vpop.f32.mrf.mxu0
      %v742 = vadd.f32 0.0, %v741
      %743 = vmatprep.mubr.f32.mxu0 0.0
      %744 = vmatmul.mubr.f32.gmra.mxu0 %v473
      %v745 = vpop.f32.mrf.mxu0
      %v746 = vadd.f32 0.0, %v745
      %v747 = vpop.f32.mrf.mxu0
      %v748 = vadd.f32 0.0, %v747
      %749 = vmatprep.mubr.f32.mxu0 0.0
      %750 = vmatmul.mubr.f32.gmra.mxu0 %v476
      %v751 = vpop.f32.mrf.mxu0
      %v752 = vadd.f32 0.0, %v751
      %v753 = vpop.f32.mrf.mxu0
      %v754 = vadd.f32 0.0, %v753
      %755 = vmatprep.mubr.f32.mxu0 0.0
      %756 = vmatmul.mubr.f32.gmra.mxu0 %v479
      %v757 = vpop.f32.mrf.mxu0
      %v758 = vadd.f32 0.0, %v757
      %v759 = vpop.f32.mrf.mxu0
      %v760 = vadd.f32 0.0, %v759
      %761 = vmatprep.mubr.f32.mxu0 0.0
      %762 = vmatmul.mubr.f32.gmra.mxu0 %v482
      %v763 = vpop.f32.mrf.mxu0
      %v764 = vadd.f32 0.0, %v763
      %v765 = vpop.f32.mrf.mxu0
      %v766 = vadd.f32 0.0, %v765
      %767 = vmatprep.mubr.f32.mxu0 0.0
      %768 = vmatmul.mubr.f32.gmra.mxu0 %v485
      %v769 = vpop.f32.mrf.mxu0
      %v770 = vadd.f32 0.0, %v769
      %v771 = vpop.f32.mrf.mxu0
      %v772 = vadd.f32 0.0, %v771
      %773 = vmatprep.mubr.f32.mxu0 0.0
      %774 = vmatmul.mubr.f32.gmra.mxu0 %v488
      %v775 = vpop.f32.mrf.mxu0
      %v776 = vadd.f32 0.0, %v775
      %v777 = vpop.f32.mrf.mxu0
      %v778 = vadd.f32 0.0, %v777
      %779 = vmatprep.mubr.f32.mxu0 0.0
      %780 = vmatmul.mubr.f32.gmra.mxu0 %v491
      %v781 = vpop.f32.mrf.mxu0
      %v782 = vadd.f32 0.0, %v781
      %v783 = vpop.f32.mrf.mxu0
      %v784 = vadd.f32 0.0, %v783
      %785 = vmatprep.mubr.f32.mxu0 0.0
      %786 = vmatmul.mubr.f32.gmra.mxu0 %v494
      %v787 = vpop.f32.mrf.mxu0
      %v788 = vadd.f32 0.0, %v787
      %v789 = vpop.f32.mrf.mxu0
      %v790 = vadd.f32 0.0, %v789
      %791 = vmatprep.mubr.f32.mxu0 0.0
      %792 = vmatmul.mubr.f32.gmra.mxu0 %v497
      %v793 = vpop.f32.mrf.mxu0
      %v794 = vadd.f32 0.0, %v793
      %v795 = vpop.f32.mrf.mxu0
      %v796 = vadd.f32 0.0, %v795
      %797 = vmatprep.mubr.f32.mxu0 0.0
      %798 = vmatmul.mubr.f32.gmra.mxu0 %v500
      %v799 = vpop.f32.mrf.mxu0
      %v800 = vadd.f32 0.0, %v799
      %v801 = vpop.f32.mrf.mxu0
      %v802 = vadd.f32 0.0, %v801
      %803 = vmatprep.mubr.f32.mxu0 0.0
      %804 = vmatmul.mubr.f32.gmra.mxu0 %v503
      %v805 = vpop.f32.mrf.mxu0
      %v806 = vadd.f32 0.0, %v805
      %v807 = vpop.f32.mrf.mxu0
      %v808 = vadd.f32 0.0, %v807
      %809 = vdwg.mxu0
      %810 = vmatprep.subr.mxu0 0.0
      %811 = vmatpush1.xpose.msra.mxu0 %v647
      %812 = vmatprep.subr.mxu0 0.0
      %813 = vmatpush1.xpose.msra.mxu0 %v644
      %814 = vmatprep.subr.mxu0 0.0
      %815 = vmatpush1.xpose.msra.mxu0 %v641
      %816 = vmatprep.subr.mxu0 0.0
      %817 = vmatpush1.xpose.msra.mxu0 %v638
      %818 = vmatprep.subr.mxu0 0.0
      %819 = vmatpush1.xpose.msra.mxu0 %v635
      %820 = vmatprep.subr.mxu0 0.0
      %821 = vmatpush1.xpose.msra.mxu0 %v632
      %822 = vmatprep.subr.mxu0 0.0
      %823 = vmatpush1.xpose.msra.mxu0 %v629
      %824 = vmatprep.subr.mxu0 0.0
      %825 = vmatpush1.xpose.msra.mxu0 %v626
      %826 = vmatprep.subr.mxu0 0.0
      %827 = vmatpush1.xpose.msra.mxu0 %v623
      %828 = vmatprep.subr.mxu0 0.0
      %829 = vmatpush1.xpose.msra.mxu0 %v620
      %830 = vmatprep.subr.mxu0 0.0
      %831 = vmatpush1.xpose.msra.mxu0 %v617
      %832 = vmatprep.subr.mxu0 0.0
      %833 = vmatpush1.xpose.msra.mxu0 %v614
      %834 = vmatprep.subr.mxu0 0.0
      %835 = vmatpush1.xpose.msra.mxu0 %v611
      %836 = vmatprep.subr.mxu0 0.0
      %837 = vmatpush1.xpose.msra.mxu0 %v608
      %838 = vmatprep.subr.mxu0 0.0
      %839 = vmatpush1.xpose.msra.mxu0 %v605
      %840 = vmatprep.subr.mxu0 0.0
      %841 = vmatpush1.xpose.msra.mxu0 %v602
      %842 = vmatprep.subr.mxu0 0.0
      %843 = vmatpush2.xpose.msra.mxu0 0.0
      %844 = vmatprep.subr.mxu0 0.0
      %845 = vmatpush2.xpose.msra.mxu0 0.0
      %846 = vmatprep.subr.mxu0 0.0
      %847 = vmatpush2.xpose.msra.mxu0 0.0
      %848 = vmatprep.subr.mxu0 0.0
      %849 = vmatpush2.xpose.msra.mxu0 0.0
      %850 = vmatprep.subr.mxu0 0.0
      %851 = vmatpush2.xpose.msra.mxu0 0.0
      %852 = vmatprep.subr.mxu0 0.0
      %853 = vmatpush2.xpose.msra.mxu0 0.0
      %854 = vmatprep.subr.mxu0 0.0
      %855 = vmatpush2.xpose.msra.mxu0 0.0
      %856 = vmatprep.subr.mxu0 0.0
      %857 = vmatpush2.xpose.msra.mxu0 0.0
      %858 = vmatprep.subr.mxu0 0.0
      %859 = vmatpush2.xpose.msra.mxu0 0.0
      %860 = vmatprep.subr.mxu0 0.0
      %861 = vmatpush2.xpose.msra.mxu0 0.0
      %862 = vmatprep.subr.mxu0 0.0
      %863 = vmatpush2.xpose.msra.mxu0 0.0
      %864 = vmatprep.subr.mxu0 0.0
      %865 = vmatpush2.xpose.msra.mxu0 0.0
      %866 = vmatprep.subr.mxu0 0.0
      %867 = vmatpush2.xpose.msra.mxu0 0.0
      %868 = vmatprep.subr.mxu0 0.0
      %869 = vmatpush2.xpose.msra.mxu0 0.0
      %870 = vmatprep.subr.mxu0 0.0
      %871 = vmatpush2.xpose.msra.mxu0 0.0
      %872 = vmatprep.subr.mxu0 0.0
      %873 = vmatpush2.xpose.msra.mxu0 0.0
      %874 = vmatprep.mubr.f32.mxu0 0.0
      %875 = vmatmul.mubr.f32.gmra.mxu0 %v458
      %v876 = vpop.f32.mrf.mxu0
      %v877 = vadd.f32 0.0, %v876
      %v878 = vpop.f32.mrf.mxu0
      %879 = vmatprep.mubr.f32.mxu0 0.0
      %880 = vmatmul.mubr.f32.gmra.mxu0 %v461
      %v881 = vpop.f32.mrf.mxu0
      %v882 = vadd.f32 0.0, %v881
      %v883 = vpop.f32.mrf.mxu0
      %884 = vmatprep.mubr.f32.mxu0 0.0
      %885 = vmatmul.mubr.f32.gmra.mxu0 %v464
      %v886 = vpop.f32.mrf.mxu0
      %v887 = vadd.f32 0.0, %v886
      %v888 = vpop.f32.mrf.mxu0
      %889 = vmatprep.mubr.f32.mxu0 0.0
      %890 = vmatmul.mubr.f32.gmra.mxu0 %v467
      %v891 = vpop.f32.mrf.mxu0
      %v892 = vadd.f32 0.0, %v891
      %v893 = vpop.f32.mrf.mxu0
      %894 = vmatprep.mubr.f32.mxu0 0.0
      %895 = vmatmul.mubr.f32.gmra.mxu0 %v470
      %v896 = vpop.f32.mrf.mxu0
      %v897 = vadd.f32 0.0, %v896
      %v898 = vpop.f32.mrf.mxu0
      %899 = vmatprep.mubr.f32.mxu0 0.0
      %900 = vmatmul.mubr.f32.gmra.mxu0 %v473
      %v901 = vpop.f32.mrf.mxu0
      %v902 = vadd.f32 0.0, %v901
      %v903 = vpop.f32.mrf.mxu0
      %904 = vmatprep.mubr.f32.mxu0 0.0
      %905 = vmatmul.mubr.f32.gmra.mxu0 %v476
      %v906 = vpop.f32.mrf.mxu0
      %v907 = vadd.f32 0.0, %v906
      %v908 = vpop.f32.mrf.mxu0
      %909 = vmatprep.mubr.f32.mxu0 0.0
      %910 = vmatmul.mubr.f32.gmra.mxu0 %v479
      %v911 = vpop.f32.mrf.mxu0
      %v912 = vadd.f32 0.0, %v911
      %v913 = vpop.f32.mrf.mxu0
      %914 = vmatprep.mubr.f32.mxu0 0.0
      %915 = vmatmul.mubr.f32.gmra.mxu0 %v482
      %v916 = vpop.f32.mrf.mxu0
      %v917 = vadd.f32 0.0, %v916
      %v918 = vpop.f32.mrf.mxu0
      %919 = vmatprep.mubr.f32.mxu0 0.0
      %920 = vmatmul.mubr.f32.gmra.mxu0 %v485
      %v921 = vpop.f32.mrf.mxu0
      %v922 = vadd.f32 0.0, %v921
      %v923 = vpop.f32.mrf.mxu0
      %924 = vmatprep.mubr.f32.mxu0 0.0
      %925 = vmatmul.mubr.f32.gmra.mxu0 %v488
      %v926 = vpop.f32.mrf.mxu0
      %v927 = vadd.f32 0.0, %v926
      %v928 = vpop.f32.mrf.mxu0
      %929 = vmatprep.mubr.f32.mxu0 0.0
      %930 = vmatmul.mubr.f32.gmra.mxu0 %v491
      %v931 = vpop.f32.mrf.mxu0
      %v932 = vadd.f32 0.0, %v931
      %v933 = vpop.f32.mrf.mxu0
      %934 = vmatprep.mubr.f32.mxu0 0.0
      %935 = vmatmul.mubr.f32.gmra.mxu0 %v494
      %v936 = vpop.f32.mrf.mxu0
      %v937 = vadd.f32 0.0, %v936
      %v938 = vpop.f32.mrf.mxu0
      %939 = vmatprep.mubr.f32.mxu0 0.0
      %940 = vmatmul.mubr.f32.gmra.mxu0 %v497
      %v941 = vpop.f32.mrf.mxu0
      %v942 = vadd.f32 0.0, %v941
      %v943 = vpop.f32.mrf.mxu0
      %944 = vmatprep.mubr.f32.mxu0 0.0
      %945 = vmatmul.mubr.f32.gmra.mxu0 %v500
      %v946 = vpop.f32.mrf.mxu0
      %v947 = vadd.f32 0.0, %v946
      %v948 = vpop.f32.mrf.mxu0
      %949 = vmatprep.mubr.f32.mxu0 0.0
      %950 = vmatmul.mubr.f32.gmra.mxu0 %v503
      %v951 = vpop.f32.mrf.mxu0
      %v952 = vadd.f32 0.0, %v951
      %v953 = vpop.f32.mrf.mxu0
      %954 = vdwg.mxu0
      %v955 = vmax.f32 %v716, %v718
      %v956 = vmax.f32 %v955, %v877
      %957 = vmax.xlane.f32.xlu0 %v956
      %v958 = vpop.xlane.xlu0 %957
      %v959 = vmax.f32 %v722, %v724
      %v960 = vmax.f32 %v959, %v882
      %961 = vmax.xlane.f32.xlu0 %v960
      %v962 = vpop.xlane.xlu0 %961
      %v963 = vmax.f32 %v728, %v730
      %v964 = vmax.f32 %v963, %v887
      %965 = vmax.xlane.f32.xlu0 %v964
      %v966 = vpop.xlane.xlu0 %965
      %v967 = vmax.f32 %v734, %v736
      %v968 = vmax.f32 %v967, %v892
      %969 = vmax.xlane.f32.xlu0 %v968
      %v970 = vpop.xlane.xlu0 %969
      %v971 = vmax.f32 %v740, %v742
      %v972 = vmax.f32 %v971, %v897
      %973 = vmax.xlane.f32.xlu0 %v972
      %v974 = vpop.xlane.xlu0 %973
      %v975 = vmax.f32 %v746, %v748
      %v976 = vmax.f32 %v975, %v902
      %977 = vmax.xlane.f32.xlu0 %v976
      %v978 = vpop.xlane.xlu0 %977
      %v979 = vmax.f32 %v752, %v754
      %v980 = vmax.f32 %v979, %v907
      %981 = vmax.xlane.f32.xlu0 %v980
      %v982 = vpop.xlane.xlu0 %981
      %v983 = vmax.f32 %v758, %v760
      %v984 = vmax.f32 %v983, %v912
      %985 = vmax.xlane.f32.xlu0 %v984
      %v986 = vpop.xlane.xlu0 %985
      %v987 = vmax.f32 %v764, %v766
      %v988 = vmax.f32 %v987, %v917
      %989 = vmax.xlane.f32.xlu0 %v988
      %v990 = vpop.xlane.xlu0 %989
      %v991 = vmax.f32 %v770, %v772
      %v992 = vmax.f32 %v991, %v922
      %993 = vmax.xlane.f32.xlu0 %v992
      %v994 = vpop.xlane.xlu0 %993
      %v995 = vmax.f32 %v776, %v778
      %v996 = vmax.f32 %v995, %v927
      %997 = vmax.xlane.f32.xlu0 %v996
      %v998 = vpop.xlane.xlu0 %997
      %v999 = vmax.f32 %v782, %v784
      %v1000 = vmax.f32 %v999, %v932
      %1001 = vmax.xlane.f32.xlu0 %v1000
      %v1002 = vpop.xlane.xlu0 %1001
      %v1003 = vmax.f32 %v788, %v790
      %v1004 = vmax.f32 %v1003, %v937
      %1005 = vmax.xlane.f32.xlu0 %v1004
      %v1006 = vpop.xlane.xlu0 %1005
      %v1007 = vmax.f32 %v794, %v796
      %v1008 = vmax.f32 %v1007, %v942
      %1009 = vmax.xlane.f32.xlu0 %v1008
      %v1010 = vpop.xlane.xlu0 %1009
      %v1011 = vmax.f32 %v800, %v802
      %v1012 = vmax.f32 %v1011, %v947
      %1013 = vmax.xlane.f32.xlu0 %v1012
      %v1014 = vpop.xlane.xlu0 %1013
      %v1015 = vmax.f32 %v806, %v808
      %v1016 = vmax.f32 %v1015, %v952
      %1017 = vmax.xlane.f32.xlu0 %v1016
      %v1018 = vpop.xlane.xlu0 %1017
      %v1019 = vsub.f32 %v716, %v958
      %v1020 = vsub.f32 %v718, %v958
      %v1021 = vsub.f32 %v877, %v958
      %v1022 = vsub.f32 %v722, %v962
      %v1023 = vsub.f32 %v724, %v962
      %v1024 = vsub.f32 %v882, %v962
      %v1025 = vsub.f32 %v728, %v966
      %v1026 = vsub.f32 %v730, %v966
      %v1027 = vsub.f32 %v887, %v966
      %v1028 = vsub.f32 %v734, %v970
      %v1029 = vsub.f32 %v736, %v970
      %v1030 = vsub.f32 %v892, %v970
      %v1031 = vsub.f32 %v740, %v974
      %v1032 = vsub.f32 %v742, %v974
      %v1033 = vsub.f32 %v897, %v974
      %v1034 = vsub.f32 %v746, %v978
      %v1035 = vsub.f32 %v748, %v978
      %v1036 = vsub.f32 %v902, %v978
      %v1037 = vsub.f32 %v752, %v982
      %v1038 = vsub.f32 %v754, %v982
      %v1039 = vsub.f32 %v907, %v982
      %v1040 = vsub.f32 %v758, %v986
      %v1041 = vsub.f32 %v760, %v986
      %v1042 = vsub.f32 %v912, %v986
      %v1043 = vsub.f32 %v764, %v990
      %v1044 = vsub.f32 %v766, %v990
      %v1045 = vsub.f32 %v917, %v990
      %v1046 = vsub.f32 %v770, %v994
      %v1047 = vsub.f32 %v772, %v994
      %v1048 = vsub.f32 %v922, %v994
      %v1049 = vsub.f32 %v776, %v998
      %v1050 = vsub.f32 %v778, %v998
      %v1051 = vsub.f32 %v927, %v998
      %v1052 = vsub.f32 %v782, %v1002
      %v1053 = vsub.f32 %v784, %v1002
      %v1054 = vsub.f32 %v932, %v1002
      %v1055 = vsub.f32 %v788, %v1006
      %v1056 = vsub.f32 %v790, %v1006
      %v1057 = vsub.f32 %v937, %v1006
      %v1058 = vsub.f32 %v794, %v1010
      %v1059 = vsub.f32 %v796, %v1010
      %v1060 = vsub.f32 %v942, %v1010
      %v1061 = vsub.f32 %v800, %v1014
      %v1062 = vsub.f32 %v802, %v1014
      %v1063 = vsub.f32 %v947, %v1014
      %v1064 = vsub.f32 %v806, %v1018
      %v1065 = vsub.f32 %v808, %v1018
      %v1066 = vsub.f32 %v952, %v1018
      %v1067 = vmul.f32 %v1019, 1.442695
      %v1068 = vpow.pop %v1067
      %v1069 = vmul.f32 %v1020, 1.442695
      %v1070 = vpow.pop %v1069
      %v1071 = vmul.f32 %v1021, 1.442695
      %v1072 = vpow.pop %v1071
      %v1073 = vmul.f32 %v1022, 1.442695
      %v1074 = vpow.pop %v1073
      %v1075 = vmul.f32 %v1023, 1.442695
      %v1076 = vpow.pop %v1075
      %v1077 = vmul.f32 %v1024, 1.442695
      %v1078 = vpow.pop %v1077
      %v1079 = vmul.f32 %v1025, 1.442695
      %v1080 = vpow.pop %v1079
      %v1081 = vmul.f32 %v1026, 1.442695
      %v1082 = vpow.pop %v1081
      %v1083 = vmul.f32 %v1027, 1.442695
      %v1084 = vpow.pop %v1083
      %v1085 = vmul.f32 %v1028, 1.442695
      %v1086 = vpow.pop %v1085
      %v1087 = vmul.f32 %v1029, 1.442695
      %v1088 = vpow.pop %v1087
      %v1089 = vmul.f32 %v1030, 1.442695
      %v1090 = vpow.pop %v1089
      %v1091 = vmul.f32 %v1031, 1.442695
      %v1092 = vpow.pop %v1091
      %v1093 = vmul.f32 %v1032, 1.442695
      %v1094 = vpow.pop %v1093
      %v1095 = vmul.f32 %v1033, 1.442695
      %v1096 = vpow.pop %v1095
      %v1097 = vmul.f32 %v1034, 1.442695
      %v1098 = vpow.pop %v1097
      %v1099 = vmul.f32 %v1035, 1.442695
      %v1100 = vpow.pop %v1099
      %v1101 = vmul.f32 %v1036, 1.442695
      %v1102 = vpow.pop %v1101
      %v1103 = vmul.f32 %v1037, 1.442695
      %v1104 = vpow.pop %v1103
      %v1105 = vmul.f32 %v1038, 1.442695
      %v1106 = vpow.pop %v1105
      %v1107 = vmul.f32 %v1039, 1.442695
      %v1108 = vpow.pop %v1107
      %v1109 = vmul.f32 %v1040, 1.442695
      %v1110 = vpow.pop %v1109
      %v1111 = vmul.f32 %v1041, 1.442695
      %v1112 = vpow.pop %v1111
      %v1113 = vmul.f32 %v1042, 1.442695
      %v1114 = vpow.pop %v1113
      %v1115 = vmul.f32 %v1043, 1.442695
      %v1116 = vpow.pop %v1115
      %v1117 = vmul.f32 %v1044, 1.442695
      %v1118 = vpow.pop %v1117
      %v1119 = vmul.f32 %v1045, 1.442695
      %v1120 = vpow.pop %v1119
      %v1121 = vmul.f32 %v1046, 1.442695
      %v1122 = vpow.pop %v1121
      %v1123 = vmul.f32 %v1047, 1.442695
      %v1124 = vpow.pop %v1123
      %v1125 = vmul.f32 %v1048, 1.442695
      %v1126 = vpow.pop %v1125
      %v1127 = vmul.f32 %v1049, 1.442695
      %v1128 = vpow.pop %v1127
      %v1129 = vmul.f32 %v1050, 1.442695
      %v1130 = vpow.pop %v1129
      %v1131 = vmul.f32 %v1051, 1.442695
      %v1132 = vpow.pop %v1131
      %v1133 = vmul.f32 %v1052, 1.442695
      %v1134 = vpow.pop %v1133
      %v1135 = vmul.f32 %v1053, 1.442695
      %v1136 = vpow.pop %v1135
      %v1137 = vmul.f32 %v1054, 1.442695
      %v1138 = vpow.pop %v1137
      %v1139 = vmul.f32 %v1055, 1.442695
      %v1140 = vpow.pop %v1139
      %v1141 = vmul.f32 %v1056, 1.442695
      %v1142 = vpow.pop %v1141
      %v1143 = vmul.f32 %v1057, 1.442695
      %v1144 = vpow.pop %v1143
      %v1145 = vmul.f32 %v1058, 1.442695
      %v1146 = vpow.pop %v1145
      %v1147 = vmul.f32 %v1059, 1.442695
      %v1148 = vpow.pop %v1147
      %v1149 = vmul.f32 %v1060, 1.442695
      %v1150 = vpow.pop %v1149
      %v1151 = vmul.f32 %v1061, 1.442695
      %v1152 = vpow.pop %v1151
      %v1153 = vmul.f32 %v1062, 1.442695
      %v1154 = vpow.pop %v1153
      %v1155 = vmul.f32 %v1063, 1.442695
      %v1156 = vpow.pop %v1155
      %v1157 = vmul.f32 %v1064, 1.442695
      %v1158 = vpow.pop %v1157
      %v1159 = vmul.f32 %v1065, 1.442695
      %v1160 = vpow.pop %v1159
      %v1161 = vmul.f32 %v1066, 1.442695
      %v1162 = vpow.pop %v1161
      %v1163 = vadd.f32 %v1068, %v1070
      %v1164 = vadd.f32 %v1163, %v1072
      %1165 = vadd.xlane.f32.xlu0 %v1164
      %v1166 = vpop.xlane.xlu0 %1165
      %v1167 = vadd.f32 %v1074, %v1076
      %v1168 = vadd.f32 %v1167, %v1078
      %1169 = vadd.xlane.f32.xlu0 %v1168
      %v1170 = vpop.xlane.xlu0 %1169
      %v1171 = vadd.f32 %v1080, %v1082
      %v1172 = vadd.f32 %v1171, %v1084
      %1173 = vadd.xlane.f32.xlu0 %v1172
      %v1174 = vpop.xlane.xlu0 %1173
      %v1175 = vadd.f32 %v1086, %v1088
      %v1176 = vadd.f32 %v1175, %v1090
      %1177 = vadd.xlane.f32.xlu0 %v1176
      %v1178 = vpop.xlane.xlu0 %1177
      %v1179 = vadd.f32 %v1092, %v1094
      %v1180 = vadd.f32 %v1179, %v1096
      %1181 = vadd.xlane.f32.xlu0 %v1180
      %v1182 = vpop.xlane.xlu0 %1181
      %v1183 = vadd.f32 %v1098, %v1100
      %v1184 = vadd.f32 %v1183, %v1102
      %1185 = vadd.xlane.f32.xlu0 %v1184
      %v1186 = vpop.xlane.xlu0 %1185
      %v1187 = vadd.f32 %v1104, %v1106
      %v1188 = vadd.f32 %v1187, %v1108
      %1189 = vadd.xlane.f32.xlu0 %v1188
      %v1190 = vpop.xlane.xlu0 %1189
      %v1191 = vadd.f32 %v1110, %v1112
      %v1192 = vadd.f32 %v1191, %v1114
      %1193 = vadd.xlane.f32.xlu0 %v1192
      %v1194 = vpop.xlane.xlu0 %1193
      %v1195 = vadd.f32 %v1116, %v1118
      %v1196 = vadd.f32 %v1195, %v1120
      %1197 = vadd.xlane.f32.xlu0 %v1196
      %v1198 = vpop.xlane.xlu0 %1197
      %v1199 = vadd.f32 %v1122, %v1124
      %v1200 = vadd.f32 %v1199, %v1126
      %1201 = vadd.xlane.f32.xlu0 %v1200
      %v1202 = vpop.xlane.xlu0 %1201
      %v1203 = vadd.f32 %v1128, %v1130
      %v1204 = vadd.f32 %v1203, %v1132
      %1205 = vadd.xlane.f32.xlu0 %v1204
      %v1206 = vpop.xlane.xlu0 %1205
      %v1207 = vadd.f32 %v1134, %v1136
      %v1208 = vadd.f32 %v1207, %v1138
      %1209 = vadd.xlane.f32.xlu0 %v1208
      %v1210 = vpop.xlane.xlu0 %1209
      %v1211 = vadd.f32 %v1140, %v1142
      %v1212 = vadd.f32 %v1211, %v1144
      %1213 = vadd.xlane.f32.xlu0 %v1212
      %v1214 = vpop.xlane.xlu0 %1213
      %v1215 = vadd.f32 %v1146, %v1148
      %v1216 = vadd.f32 %v1215, %v1150
      %1217 = vadd.xlane.f32.xlu0 %v1216
      %v1218 = vpop.xlane.xlu0 %1217
      %v1219 = vadd.f32 %v1152, %v1154
      %v1220 = vadd.f32 %v1219, %v1156
      %1221 = vadd.xlane.f32.xlu0 %v1220
      %v1222 = vpop.xlane.xlu0 %1221
      %v1223 = vadd.f32 %v1158, %v1160
      %v1224 = vadd.f32 %v1223, %v1162
      %1225 = vadd.xlane.f32.xlu0 %v1224
      %v1226 = vpop.xlane.xlu0 %1225
      %1227 = vmatprep.subr.mxu0 0.0
      %1228 = vmatpush1.msra.mxu0 %v423
      %1229 = vmatprep.subr.mxu0 0.0
      %1230 = vmatpush1.msra.mxu0 %v422
      %1231 = vmatprep.subr.mxu0 0.0
      %1232 = vmatpush1.msra.mxu0 %v421
      %1233 = vmatprep.subr.mxu0 0.0
      %1234 = vmatpush1.msra.mxu0 %v420
      %1235 = vmatprep.subr.mxu0 0.0
      %1236 = vmatpush1.msra.mxu0 %v419
      %1237 = vmatprep.subr.mxu0 0.0
      %1238 = vmatpush1.msra.mxu0 %v418
      %1239 = vmatprep.subr.mxu0 0.0
      %1240 = vmatpush1.msra.mxu0 %v417
      %1241 = vmatprep.subr.mxu0 0.0
      %1242 = vmatpush1.msra.mxu0 %v416
      %1243 = vmatprep.subr.mxu0 0.0
      %1244 = vmatpush1.msra.mxu0 %v415
      %1245 = vmatprep.subr.mxu0 0.0
      %1246 = vmatpush1.msra.mxu0 %v414
      %1247 = vmatprep.subr.mxu0 0.0
      %1248 = vmatpush1.msra.mxu0 %v413
      %1249 = vmatprep.subr.mxu0 0.0
      %1250 = vmatpush1.msra.mxu0 %v412
      %1251 = vmatprep.subr.mxu0 0.0
      %1252 = vmatpush1.msra.mxu0 %v411
      %1253 = vmatprep.subr.mxu0 0.0
      %1254 = vmatpush1.msra.mxu0 %v410
      %1255 = vmatprep.subr.mxu0 0.0
      %1256 = vmatpush1.msra.mxu0 %v409
      %1257 = vmatprep.subr.mxu0 0.0
      %1258 = vmatpush1.msra.mxu0 %v408
      %1259 = vmatprep.subr.mxu0 0.0
      %1260 = vmatpush2.msra.mxu0 %v439
      %1261 = vmatprep.subr.mxu0 0.0
      %1262 = vmatpush2.msra.mxu0 %v438
      %1263 = vmatprep.subr.mxu0 0.0
      %1264 = vmatpush2.msra.mxu0 %v437
      %1265 = vmatprep.subr.mxu0 0.0
      %1266 = vmatpush2.msra.mxu0 %v436
      %1267 = vmatprep.subr.mxu0 0.0
      %1268 = vmatpush2.msra.mxu0 %v435
      %1269 = vmatprep.subr.mxu0 0.0
      %1270 = vmatpush2.msra.mxu0 %v434
      %1271 = vmatprep.subr.mxu0 0.0
      %1272 = vmatpush2.msra.mxu0 %v433
      %1273 = vmatprep.subr.mxu0 0.0
      %1274 = vmatpush2.msra.mxu0 %v432
      %1275 = vmatprep.subr.mxu0 0.0
      %1276 = vmatpush2.msra.mxu0 %v431
      %1277 = vmatprep.subr.mxu0 0.0
      %1278 = vmatpush2.msra.mxu0 %v430
      %1279 = vmatprep.subr.mxu0 0.0
      %1280 = vmatpush2.msra.mxu0 %v429
      %1281 = vmatprep.subr.mxu0 0.0
      %1282 = vmatpush2.msra.mxu0 %v428
      %1283 = vmatprep.subr.mxu0 0.0
      %1284 = vmatpush2.msra.mxu0 %v427
      %1285 = vmatprep.subr.mxu0 0.0
      %1286 = vmatpush2.msra.mxu0 %v426
      %1287 = vmatprep.subr.mxu0 0.0
      %1288 = vmatpush2.msra.mxu0 %v425
      %1289 = vmatprep.subr.mxu0 0.0
      %1290 = vmatpush2.msra.mxu0 %v424
      %1291 = vmatprep.mubr.f32.mxu0 %v1070
      %1292 = vmatmul.mubr.f32.gmra.mxu0 %v1068
      %v1293 = vpop.f32.mrf.mxu0
      %v1294 = vadd.f32 0.0, %v1293
      %v1295 = vpop.f32.mrf.mxu0
      %1296 = vmatprep.mubr.f32.mxu0 %v1076
      %1297 = vmatmul.mubr.f32.gmra.mxu0 %v1074
      %v1298 = vpop.f32.mrf.mxu0
      %v1299 = vadd.f32 0.0, %v1298
      %v1300 = vpop.f32.mrf.mxu0
      %1301 = vmatprep.mubr.f32.mxu0 %v1082
      %1302 = vmatmul.mubr.f32.gmra.mxu0 %v1080
      %v1303 = vpop.f32.mrf.mxu0
      %v1304 = vadd.f32 0.0, %v1303
      %v1305 = vpop.f32.mrf.mxu0
      %1306 = vmatprep.mubr.f32.mxu0 %v1088
      %1307 = vmatmul.mubr.f32.gmra.mxu0 %v1086
      %v1308 = vpop.f32.mrf.mxu0
      %v1309 = vadd.f32 0.0, %v1308
      %v1310 = vpop.f32.mrf.mxu0
      %1311 = vmatprep.mubr.f32.mxu0 %v1094
      %1312 = vmatmul.mubr.f32.gmra.mxu0 %v1092
      %v1313 = vpop.f32.mrf.mxu0
      %v1314 = vadd.f32 0.0, %v1313
      %v1315 = vpop.f32.mrf.mxu0
      %1316 = vmatprep.mubr.f32.mxu0 %v1100
      %1317 = vmatmul.mubr.f32.gmra.mxu0 %v1098
      %v1318 = vpop.f32.mrf.mxu0
      %v1319 = vadd.f32 0.0, %v1318
      %v1320 = vpop.f32.mrf.mxu0
      %1321 = vmatprep.mubr.f32.mxu0 %v1106
      %1322 = vmatmul.mubr.f32.gmra.mxu0 %v1104
      %v1323 = vpop.f32.mrf.mxu0
      %v1324 = vadd.f32 0.0, %v1323
      %v1325 = vpop.f32.mrf.mxu0
      %1326 = vmatprep.mubr.f32.mxu0 %v1112
      %1327 = vmatmul.mubr.f32.gmra.mxu0 %v1110
      %v1328 = vpop.f32.mrf.mxu0
      %v1329 = vadd.f32 0.0, %v1328
      %v1330 = vpop.f32.mrf.mxu0
      %1331 = vmatprep.mubr.f32.mxu0 %v1118
      %1332 = vmatmul.mubr.f32.gmra.mxu0 %v1116
      %v1333 = vpop.f32.mrf.mxu0
      %v1334 = vadd.f32 0.0, %v1333
      %v1335 = vpop.f32.mrf.mxu0
      %1336 = vmatprep.mubr.f32.mxu0 %v1124
      %1337 = vmatmul.mubr.f32.gmra.mxu0 %v1122
      %v1338 = vpop.f32.mrf.mxu0
      %v1339 = vadd.f32 0.0, %v1338
      %v1340 = vpop.f32.mrf.mxu0
      %1341 = vmatprep.mubr.f32.mxu0 %v1130
      %1342 = vmatmul.mubr.f32.gmra.mxu0 %v1128
      %v1343 = vpop.f32.mrf.mxu0
      %v1344 = vadd.f32 0.0, %v1343
      %v1345 = vpop.f32.mrf.mxu0
      %1346 = vmatprep.mubr.f32.mxu0 %v1136
      %1347 = vmatmul.mubr.f32.gmra.mxu0 %v1134
      %v1348 = vpop.f32.mrf.mxu0
      %v1349 = vadd.f32 0.0, %v1348
      %v1350 = vpop.f32.mrf.mxu0
      %1351 = vmatprep.mubr.f32.mxu0 %v1142
      %1352 = vmatmul.mubr.f32.gmra.mxu0 %v1140
      %v1353 = vpop.f32.mrf.mxu0
      %v1354 = vadd.f32 0.0, %v1353
      %v1355 = vpop.f32.mrf.mxu0
      %1356 = vmatprep.mubr.f32.mxu0 %v1148
      %1357 = vmatmul.mubr.f32.gmra.mxu0 %v1146
      %v1358 = vpop.f32.mrf.mxu0
      %v1359 = vadd.f32 0.0, %v1358
      %v1360 = vpop.f32.mrf.mxu0
      %1361 = vmatprep.mubr.f32.mxu0 %v1154
      %1362 = vmatmul.mubr.f32.gmra.mxu0 %v1152
      %v1363 = vpop.f32.mrf.mxu0
      %v1364 = vadd.f32 0.0, %v1363
      %v1365 = vpop.f32.mrf.mxu0
      %1366 = vmatprep.mubr.f32.mxu0 %v1160
      %1367 = vmatmul.mubr.f32.gmra.mxu0 %v1158
      %v1368 = vpop.f32.mrf.mxu0
      %v1369 = vadd.f32 0.0, %v1368
      %v1370 = vpop.f32.mrf.mxu0
      %1371 = vdwg.mxu0
      %1372 = vmatprep.subr.mxu0 0.0
      %1373 = vmatpush1.msra.mxu0 %v455
      %1374 = vmatprep.subr.mxu0 0.0
      %1375 = vmatpush1.msra.mxu0 %v454
      %1376 = vmatprep.subr.mxu0 0.0
      %1377 = vmatpush1.msra.mxu0 %v453
      %1378 = vmatprep.subr.mxu0 0.0
      %1379 = vmatpush1.msra.mxu0 %v452
      %1380 = vmatprep.subr.mxu0 0.0
      %1381 = vmatpush1.msra.mxu0 %v451
      %1382 = vmatprep.subr.mxu0 0.0
      %1383 = vmatpush1.msra.mxu0 %v450
      %1384 = vmatprep.subr.mxu0 0.0
      %1385 = vmatpush1.msra.mxu0 %v449
      %1386 = vmatprep.subr.mxu0 0.0
      %1387 = vmatpush1.msra.mxu0 %v448
      %1388 = vmatprep.subr.mxu0 0.0
      %1389 = vmatpush1.msra.mxu0 %v447
      %1390 = vmatprep.subr.mxu0 0.0
      %1391 = vmatpush1.msra.mxu0 %v446
      %1392 = vmatprep.subr.mxu0 0.0
      %1393 = vmatpush1.msra.mxu0 %v445
      %1394 = vmatprep.subr.mxu0 0.0
      %1395 = vmatpush1.msra.mxu0 %v444
      %1396 = vmatprep.subr.mxu0 0.0
      %1397 = vmatpush1.msra.mxu0 %v443
      %1398 = vmatprep.subr.mxu0 0.0
      %1399 = vmatpush1.msra.mxu0 %v442
      %1400 = vmatprep.subr.mxu0 0.0
      %1401 = vmatpush1.msra.mxu0 %v441
      %1402 = vmatprep.subr.mxu0 0.0
      %1403 = vmatpush1.msra.mxu0 %v440
      %1404 = vmatprep.subr.mxu0 0.0
      %1405 = vmatpush2.msra.mxu0 0.0
      %1406 = vmatprep.subr.mxu0 0.0
      %1407 = vmatpush2.msra.mxu0 0.0
      %1408 = vmatprep.subr.mxu0 0.0
      %1409 = vmatpush2.msra.mxu0 0.0
      %1410 = vmatprep.subr.mxu0 0.0
      %1411 = vmatpush2.msra.mxu0 0.0
      %1412 = vmatprep.subr.mxu0 0.0
      %1413 = vmatpush2.msra.mxu0 0.0
      %1414 = vmatprep.subr.mxu0 0.0
      %1415 = vmatpush2.msra.mxu0 0.0
      %1416 = vmatprep.subr.mxu0 0.0
      %1417 = vmatpush2.msra.mxu0 0.0
      %1418 = vmatprep.subr.mxu0 0.0
      %1419 = vmatpush2.msra.mxu0 0.0
      %1420 = vmatprep.subr.mxu0 0.0
      %1421 = vmatpush2.msra.mxu0 0.0
      %1422 = vmatprep.subr.mxu0 0.0
      %1423 = vmatpush2.msra.mxu0 0.0
      %1424 = vmatprep.subr.mxu0 0.0
      %1425 = vmatpush2.msra.mxu0 0.0
      %1426 = vmatprep.subr.mxu0 0.0
      %1427 = vmatpush2.msra.mxu0 0.0
      %1428 = vmatprep.subr.mxu0 0.0
      %1429 = vmatpush2.msra.mxu0 0.0
      %1430 = vmatprep.subr.mxu0 0.0
      %1431 = vmatpush2.msra.mxu0 0.0
      %1432 = vmatprep.subr.mxu0 0.0
      %1433 = vmatpush2.msra.mxu0 0.0
      %1434 = vmatprep.subr.mxu0 0.0
      %1435 = vmatpush2.msra.mxu0 0.0
      %1436 = vmatprep.mubr.f32.mxu0 0.0
      %1437 = vmatmul.mubr.f32.gmra.mxu0 %v1072
      %v1438 = vpop.f32.mrf.mxu0
      %v1439 = vadd.f32 %v1294, %v1438
      %v1440 = vpop.f32.mrf.mxu0
      %1441 = vmatprep.mubr.f32.mxu0 0.0
      %1442 = vmatmul.mubr.f32.gmra.mxu0 %v1078
      %v1443 = vpop.f32.mrf.mxu0
      %v1444 = vadd.f32 %v1299, %v1443
      %v1445 = vpop.f32.mrf.mxu0
      %1446 = vmatprep.mubr.f32.mxu0 0.0
      %1447 = vmatmul.mubr.f32.gmra.mxu0 %v1084
      %v1448 = vpop.f32.mrf.mxu0
      %v1449 = vadd.f32 %v1304, %v1448
      %v1450 = vpop.f32.mrf.mxu0
      %1451 = vmatprep.mubr.f32.mxu0 0.0
      %1452 = vmatmul.mubr.f32.gmra.mxu0 %v1090
      %v1453 = vpop.f32.mrf.mxu0
      %v1454 = vadd.f32 %v1309, %v1453
      %v1455 = vpop.f32.mrf.mxu0
      %1456 = vmatprep.mubr.f32.mxu0 0.0
      %1457 = vmatmul.mubr.f32.gmra.mxu0 %v1096
      %v1458 = vpop.f32.mrf.mxu0
      %v1459 = vadd.f32 %v1314, %v1458
      %v1460 = vpop.f32.mrf.mxu0
      %1461 = vmatprep.mubr.f32.mxu0 0.0
      %1462 = vmatmul.mubr.f32.gmra.mxu0 %v1102
      %v1463 = vpop.f32.mrf.mxu0
      %v1464 = vadd.f32 %v1319, %v1463
      %v1465 = vpop.f32.mrf.mxu0
      %1466 = vmatprep.mubr.f32.mxu0 0.0
      %1467 = vmatmul.mubr.f32.gmra.mxu0 %v1108
      %v1468 = vpop.f32.mrf.mxu0
      %v1469 = vadd.f32 %v1324, %v1468
      %v1470 = vpop.f32.mrf.mxu0
      %1471 = vmatprep.mubr.f32.mxu0 0.0
      %1472 = vmatmul.mubr.f32.gmra.mxu0 %v1114
      %v1473 = vpop.f32.mrf.mxu0
      %v1474 = vadd.f32 %v1329, %v1473
      %v1475 = vpop.f32.mrf.mxu0
      %1476 = vmatprep.mubr.f32.mxu0 0.0
      %1477 = vmatmul.mubr.f32.gmra.mxu0 %v1120
      %v1478 = vpop.f32.mrf.mxu0
      %v1479 = vadd.f32 %v1334, %v1478
      %v1480 = vpop.f32.mrf.mxu0
      %1481 = vmatprep.mubr.f32.mxu0 0.0
      %1482 = vmatmul.mubr.f32.gmra.mxu0 %v1126
      %v1483 = vpop.f32.mrf.mxu0
      %v1484 = vadd.f32 %v1339, %v1483
      %v1485 = vpop.f32.mrf.mxu0
      %1486 = vmatprep.mubr.f32.mxu0 0.0
      %1487 = vmatmul.mubr.f32.gmra.mxu0 %v1132
      %v1488 = vpop.f32.mrf.mxu0
      %v1489 = vadd.f32 %v1344, %v1488
      %v1490 = vpop.f32.mrf.mxu0
      %1491 = vmatprep.mubr.f32.mxu0 0.0
      %1492 = vmatmul.mubr.f32.gmra.mxu0 %v1138
      %v1493 = vpop.f32.mrf.mxu0
      %v1494 = vadd.f32 %v1349, %v1493
      %v1495 = vpop.f32.mrf.mxu0
      %1496 = vmatprep.mubr.f32.mxu0 0.0
      %1497 = vmatmul.mubr.f32.gmra.mxu0 %v1144
      %v1498 = vpop.f32.mrf.mxu0
      %v1499 = vadd.f32 %v1354, %v1498
      %v1500 = vpop.f32.mrf.mxu0
      %1501 = vmatprep.mubr.f32.mxu0 0.0
      %1502 = vmatmul.mubr.f32.gmra.mxu0 %v1150
      %v1503 = vpop.f32.mrf.mxu0
      %v1504 = vadd.f32 %v1359, %v1503
      %v1505 = vpop.f32.mrf.mxu0
      %1506 = vmatprep.mubr.f32.mxu0 0.0
      %1507 = vmatmul.mubr.f32.gmra.mxu0 %v1156
      %v1508 = vpop.f32.mrf.mxu0
      %v1509 = vadd.f32 %v1364, %v1508
      %v1510 = vpop.f32.mrf.mxu0
      %1511 = vmatprep.mubr.f32.mxu0 0.0
      %1512 = vmatmul.mubr.f32.gmra.mxu0 %v1162
      %v1513 = vpop.f32.mrf.mxu0
      %v1514 = vadd.f32 %v1369, %v1513
      %v1515 = vpop.f32.mrf.mxu0
      %1516 = vdwg.mxu0
      %v1517 = vrcp.pop %v1166
      %v1518 = vmul.f32 %v1439, %v1517
      %v1519 = vrcp.pop %v1170
      %v1520 = vmul.f32 %v1444, %v1519
      %v1521 = vrcp.pop %v1174
      %v1522 = vmul.f32 %v1449, %v1521
      %v1523 = vrcp.pop %v1178
      %v1524 = vmul.f32 %v1454, %v1523
      %v1525 = vrcp.pop %v1182
      %v1526 = vmul.f32 %v1459, %v1525
      %v1527 = vrcp.pop %v1186
      %v1528 = vmul.f32 %v1464, %v1527
      %v1529 = vrcp.pop %v1190
      %v1530 = vmul.f32 %v1469, %v1529
      %v1531 = vrcp.pop %v1194
      %v1532 = vmul.f32 %v1474, %v1531
      %v1533 = vrcp.pop %v1198
      %v1534 = vmul.f32 %v1479, %v1533
      %v1535 = vrcp.pop %v1202
      %v1536 = vmul.f32 %v1484, %v1535
      %v1537 = vrcp.pop %v1206
      %v1538 = vmul.f32 %v1489, %v1537
      %v1539 = vrcp.pop %v1210
      %v1540 = vmul.f32 %v1494, %v1539
      %v1541 = vrcp.pop %v1214
      %v1542 = vmul.f32 %v1499, %v1541
      %v1543 = vrcp.pop %v1218
      %v1544 = vmul.f32 %v1504, %v1543
      %v1545 = vrcp.pop %v1222
      %v1546 = vmul.f32 %v1509, %v1545
      %v1547 = vrcp.pop %v1226
      %v1548 = vmul.f32 %v1514, %v1547
      %1549 = vst.msk [vmem:[%s342] sm:$0xff] %vm456, %v1518
      %1550 = vst.msk [vmem:[%s342 + $0x8] sm:$0xff] %vm456, %v1520
      %1551 = vst.msk [vmem:[%s342 + $0x10] sm:$0xff] %vm456, %v1522
      %1552 = vst.msk [vmem:[%s342 + $0x18] sm:$0xff] %vm456, %v1524
      %1553 = vst.msk [vmem:[%s342 + $0x20] sm:$0xff] %vm456, %v1526
      %1554 = vst.msk [vmem:[%s342 + $0x28] sm:$0xff] %vm456, %v1528
      %1555 = vst.msk [vmem:[%s342 + $0x30] sm:$0xff] %vm456, %v1530
      %1556 = vst.msk [vmem:[%s342 + $0x38] sm:$0xff] %vm456, %v1532
      %1557 = vst.msk [vmem:[%s342 + $0x40] sm:$0xff] %vm456, %v1534
      %1558 = vst.msk [vmem:[%s342 + $0x48] sm:$0xff] %vm456, %v1536
      %1559 = vst.msk [vmem:[%s342 + $0x50] sm:$0xff] %vm456, %v1538
      %1560 = vst.msk [vmem:[%s342 + $0x58] sm:$0xff] %vm456, %v1540
      %1561 = vst.msk [vmem:[%s342 + $0x60] sm:$0xff] %vm456, %v1542
      %1562 = vst.msk [vmem:[%s342 + $0x68] sm:$0xff] %vm456, %v1544
      %1563 = vst.msk [vmem:[%s342 + $0x70] sm:$0xff] %vm456, %v1546
      %1564 = vst.msk [vmem:[%s342 + $0x78] sm:$0xff] %vm456, %v1548
      %s1565 = smul.u32 16, %s28
      %p1566 = scmp.lt.s32.totalorder %s26, 1
      %s1567 = scalar_select %p1566, %s26, 1
      %p1568 = scmp.lt.s32.totalorder %s27, 7
      %s1569 = scalar_select %p1568, %s27, 7
      %p1570 = scmp.lt.s32.totalorder %s1565, 47
      %s1571 = scalar_select %p1570, %s1565, 47
      %s1572 = smul.addr %s1569, 48
      %s1573 = sadd.s32 %s1571, %s1572
      %s1574 = smul.addr %s1567, 384
      %s1575 = sadd.s32 %s1573, %s1574
      %s1576 = smul.addr %s1575, 8
      %s1577 = scalar_lea.vmem %s4, %s1576
      // Predicated region
      $region33: #{kdgqa_forward.4} parent=31 // pred_check
        %p1578 = pneg %p156
      $region34: #{kdgqa_forward.4} parent=31 // pred_check_branch
        %1580 = sbr.rel (%p1578) target = $region36
      $region35: #{kdgqa_forward.4} parent=31 // pred_region
        %s1581 = smul.u32 16, %s28
      $region36: #{kdgqa_forward.4} parent=31 // pred_fallthru
        _
    $region32: #{kdgqa_forward.4} parent=5 // pred_fallthru
      _
    %p1582 = scmp.le.s32.totalorder 2, %s16
    // Predicated region
    $region37: #{kdgqa_forward.4} parent=5 // pred_check
      %p1583 = pneg %p1582
    $region38: #{kdgqa_forward.4} parent=5 // pred_check_branch
      %1585 = sbr.rel (%p1583) target = $region40
    $region39: #{kdgqa_forward.4} parent=5 // pred_region
      %s1586 = ssub.s32 %s16, 2
      // Predicated region
      $region41: #{kdgqa_forward.4} parent=39 // pred_check
        %p1587 = pneg %p162
      $region42: #{kdgqa_forward.4} parent=39 // pred_check_branch
        %1589 = sbr.rel (%p1587) target = $region44
      $region43: #{kdgqa_forward.4} parent=39 // pred_region
        %s1590 = smul.u32 16, %s31
        %p1591 = scmp.lt.s32.totalorder %s29, 1
        %s1592 = scalar_select %p1591, %s29, 1
        %p1593 = scmp.lt.s32.totalorder %s30, 7
        %s1594 = scalar_select %p1593, %s30, 7
        %p1595 = scmp.lt.s32.totalorder %s1590, 47
        %s1596 = scalar_select %p1595, %s1590, 47
        %s1597 = smul.addr %s1594, 48
        %s1598 = sadd.s32 %s1596, %s1597
        %s1599 = smul.addr %s1592, 384
        %s1600 = sadd.s32 %s1598, %s1599
        %s1601 = smul.addr %s1600, 8
        %s1602 = scalar_lea.vmem %s4, %s1601
      $region44: #{kdgqa_forward.4} parent=39 // pred_fallthru
        _
    $region40: #{kdgqa_forward.4} parent=5 // pred_fallthru
      _
  $region6: #{kdgqa_forward.4} parent=0 // loop_footer
    %s20 = sadd.s32 1, %s16
  $region7: #{kdgqa_forward.4} parent=0 // loop_footer_branch
    %15 = sbr.rel target = $region3
  $region8: #{kdgqa_forward.4} parent=0 // loop_exit
    _

// kernel: kdgqa_forward.3
$region0: #{kdgqa_forward.3}
  #allocation0 [shape = 'u32[]', space=smem, size = 0x4, offset = 0x4, fixed_abs, tag = 'smem constant byte address 0x4 - core index']
  #allocation1 [shape = 'u32[144,128]{1,0:T(1,128)}', space=vmem, size = 0x12000, scoped, tag = 'internal scratch']
  %s0 = inlined_call_operand.vmem [shape: f32[2,384,256], index: 0, kind: input, shape index: {}]
  %s1 = inlined_call_operand.vmem [shape: f32[2,256,256], index: 1, kind: input, shape index: {}]
  %s2 = inlined_call_operand.vmem [shape: f32[2,1,256], index: 2, kind: input, shape index: {}]
  %s3 = inlined_call_operand.vmem [shape: f32[2,16,384,32], index: 3, kind: output, shape index: {}]
  %s4 = sld [smem:[#allocation0]]
  $region45: #{kdgqa_forward.3} parent=0
    _
  %s6 = ssub.s32 1, %s4
  %s7 = scalar_select 0, %s6, %s4
  loop: start=0, step=1, limit=6
  $region2: #{kdgqa_forward.3} parent=0 // loop_pre_header
    _
  $region3: #{kdgqa_forward.3} parent=0 // loop_header
    %s9 = sphi 0, %s13
    %p10 = scmp.ge.s32.totalorder %s9, 6
    %s16 = sphi 0, %s35
    %s17 = sphi 0, %s31
    %s18 = sphi 0, %s27
    %s19 = sphi 0, %s16
    %s20 = sphi 0, %s17
    %s21 = sphi 0, %s18
    %s22 = sphi 0, %s19
    %s23 = sphi 0, %s20
    %s24 = sphi 0, %s21
    %s40 = sphi 0, %s42
    %s43 = sphi 0, %s40
    %s44 = sphi 0, %s43
    %s60 = sphi 0, %s44
    %s66 = sphi 0, %s68
    %s69 = sphi 0, %s66
    %s70 = sphi 0, %s69
    %s86 = sphi 0, %s70
    %s92 = sphi 0, %s94
    %s95 = sphi 0, %s92
    %s96 = sphi 0, %s95
    %s112 = sphi 0, %s96
    %s122 = sphi 0, %s124
    %s125 = sphi 0, %s122
    %s126 = sphi 0, %s125
    %s142 = sphi 0, %s126
  $region4: #{kdgqa_forward.3} parent=0 // loop_header_branch
    %12 = sbr.rel (%p10) target = $region8
  $region5: #{kdgqa_forward.3} parent=0 // loop_body
    %s14 = ssub.s32 %s9, 1
    %s15 = ssub.s32 %s9, 2
    %s25 = sadd.s32 1, %s18
    %p26 = scmp.ge.s32.totalorder %s25, 2
    %s27 = scalar_select %p26, 0, %s25
    %s28 = sadd.s32 1, %s17
    %s29 = scalar_select %p26, %s28, %s17
    %p30 = scmp.ge.s32.totalorder %s29, 1
    %s31 = scalar_select %p30, 0, %s29
    %s32 = sadd.s32 1, %s16
    %s33 = scalar_select %p30, %s32, %s16
    %p34 = scmp.ge.s32.totalorder %s33, 2
    %s35 = scalar_select %p34, 0, %s33
    %s36 = ssub.s32 %s16, %s35
    %s37 = ssub.s32 %s17, %s31
    %s38 = sor.u32 %s36, %s37
    %p39 = scmp.eq.s32.totalorder %s38, 0
    %s41 = sadd.s32 %s40, 1
    %s42 = scalar_select %p39, %s40, %s41
    %p45 = pneg %p39
    %p46 = scmp.eq.s32.totalorder %s9, 3
    %p47 = por %p45, %p46
    %p48 = scmp.ne.s32.totalorder %s40, %s43
    %p49 = scmp.eq.s32.totalorder %s9, 0
    %p50 = por %p48, %p49
    %p51 = scmp.ne.s32.totalorder %s40, %s43
    %p52 = scmp.eq.s32.totalorder %s14, 3
    %p53 = por %p51, %p52
    %p54 = scmp.ne.s32.totalorder %s43, %s44
    %p55 = scmp.eq.s32.totalorder %s14, 0
    %p56 = por %p54, %p55
    %p57 = scmp.ne.s32.totalorder %s43, %s44
    %p58 = scmp.eq.s32.totalorder %s15, 3
    %p59 = por %p57, %p58
    %p61 = scmp.ne.s32.totalorder %s44, %s60
    %p62 = scmp.eq.s32.totalorder %s15, 0
    %p63 = por %p61, %p62
    %s64 = ssub.s32 %s18, %s27
    %p65 = scmp.eq.s32.totalorder %s64, 0
    %s67 = sadd.s32 %s66, 1
    %s68 = scalar_select %p65, %s66, %s67
    %p71 = pneg %p65
    %p72 = scmp.eq.s32.totalorder %s9, 3
    %p73 = por %p71, %p72
    %p74 = scmp.ne.s32.totalorder %s66, %s69
    %p75 = scmp.eq.s32.totalorder %s9, 0
    %p76 = por %p74, %p75
    %p77 = scmp.ne.s32.totalorder %s66, %s69
    %p78 = scmp.eq.s32.totalorder %s14, 3
    %p79 = por %p77, %p78
    %p80 = scmp.ne.s32.totalorder %s69, %s70
    %p81 = scmp.eq.s32.totalorder %s14, 0
    %p82 = por %p80, %p81
    %p83 = scmp.ne.s32.totalorder %s69, %s70
    %p84 = scmp.eq.s32.totalorder %s15, 3
    %p85 = por %p83, %p84
    %p87 = scmp.ne.s32.totalorder %s70, %s86
    %p88 = scmp.eq.s32.totalorder %s15, 0
    %p89 = por %p87, %p88
    %s90 = ssub.s32 %s18, %s27
    %p91 = scmp.eq.s32.totalorder %s90, 0
    %s93 = sadd.s32 %s92, 1
    %s94 = scalar_select %p91, %s92, %s93
    %p97 = pneg %p91
    %p98 = scmp.eq.s32.totalorder %s9, 3
    %p99 = por %p97, %p98
    %p100 = scmp.ne.s32.totalorder %s92, %s95
    %p101 = scmp.eq.s32.totalorder %s9, 0
    %p102 = por %p100, %p101
    %p103 = scmp.ne.s32.totalorder %s92, %s95
    %p104 = scmp.eq.s32.totalorder %s14, 3
    %p105 = por %p103, %p104
    %p106 = scmp.ne.s32.totalorder %s95, %s96
    %p107 = scmp.eq.s32.totalorder %s14, 0
    %p108 = por %p106, %p107
    %p109 = scmp.ne.s32.totalorder %s95, %s96
    %p110 = scmp.eq.s32.totalorder %s15, 3
    %p111 = por %p109, %p110
    %p113 = scmp.ne.s32.totalorder %s96, %s112
    %p114 = scmp.eq.s32.totalorder %s15, 0
    %p115 = por %p113, %p114
    %s116 = ssub.s32 %s16, %s35
    %s117 = ssub.s32 %s18, %s27
    %s118 = sor.u32 %s116, %s117
    %s119 = ssub.s32 %s17, %s31
    %s120 = sor.u32 %s118, %s119
    %p121 = scmp.eq.s32.totalorder %s120, 0
    %s123 = sadd.s32 %s122, 1
    %s124 = scalar_select %p121, %s122, %s123
    %p127 = pneg %p121
    %p128 = scmp.eq.s32.totalorder %s9, 3
    %p129 = por %p127, %p128
    %p130 = scmp.ne.s32.totalorder %s122, %s125
    %p131 = scmp.eq.s32.totalorder %s9, 0
    %p132 = por %p130, %p131
    %p133 = scmp.ne.s32.totalorder %s122, %s125
    %p134 = scmp.eq.s32.totalorder %s14, 3
    %p135 = por %p133, %p134
    %p136 = scmp.ne.s32.totalorder %s125, %s126
    %p137 = scmp.eq.s32.totalorder %s14, 0
    %p138 = por %p136, %p137
    %p139 = scmp.ne.s32.totalorder %s125, %s126
    %p140 = scmp.eq.s32.totalorder %s15, 3
    %p141 = por %p139, %p140
    %p143 = scmp.ne.s32.totalorder %s126, %s142
    %p144 = scmp.eq.s32.totalorder %s15, 0
    %p145 = por %p143, %p144
    %p146 = scmp.le.s32.totalorder 1, %s9
    %p147 = scmp.lt.s32.totalorder %s9, 5
    %p148 = pnand %p146, %p147
    %p149 = pneg %p148
    // Predicated region
    $region9: #{kdgqa_forward.3} parent=5 // pred_check
      _
    $region10: #{kdgqa_forward.3} parent=5 // pred_check_branch
      %151 = sbr.rel (%p148) target = $region12
    $region11: #{kdgqa_forward.3} parent=5 // pred_region
      %s152 = ssub.s32 %s9, 1
    $region12: #{kdgqa_forward.3} parent=5 // pred_fallthru
      _
    %p153 = scmp.lt.s32.totalorder %s9, 4
    // Predicated region
    $region13: #{kdgqa_forward.3} parent=5 // pred_check
      %p154 = pneg %p153
    $region14: #{kdgqa_forward.3} parent=5 // pred_check_branch
      %156 = sbr.rel (%p154) target = $region16
    $region15: #{kdgqa_forward.3} parent=5 // pred_region
      // Predicated region
      $region17: #{kdgqa_forward.3} parent=15 // pred_check
        %p157 = pneg %p50
      $region18: #{kdgqa_forward.3} parent=15 // pred_check_branch
        %159 = sbr.rel (%p157) target = $region20
      $region19: #{kdgqa_forward.3} parent=15 // pred_region
        %s160 = smul.u32 48, %s17
        %p161 = scmp.lt.s32.totalorder %s16, 1
        %s162 = scalar_select %p161, %s16, 1
        %p163 = scmp.lt.s32.totalorder %s160, 47
        %s164 = scalar_select %p163, %s160, 47
        %s165 = smul.addr %s164, 2
        %s166 = smul.addr %s162, 96
        %s167 = sadd.s32 %s165, %s166
        %s168 = smul.addr %s167, 8
        %s169 = scalar_lea.vmem %s0, %s168
        %s170 = smul.u32 48, %s17
      $region20: #{kdgqa_forward.3} parent=15 // pred_fallthru
        _
      // Predicated region
      $region21: #{kdgqa_forward.3} parent=15 // pred_check
        %p171 = pneg %p76
      $region22: #{kdgqa_forward.3} parent=15 // pred_check_branch
        %173 = sbr.rel (%p171) target = $region24
      $region23: #{kdgqa_forward.3} parent=15 // pred_region
        %p174 = scmp.lt.s32.totalorder %s18, 1
        %s175 = scalar_select %p174, %s18, 1
        %s176 = smul.addr %s175, 64
        %s177 = smul.addr %s176, 8
        %s178 = scalar_lea.vmem %s1, %s177
      $region24: #{kdgqa_forward.3} parent=15 // pred_fallthru
        _
      // Predicated region
      $region25: #{kdgqa_forward.3} parent=15 // pred_check
        %p179 = pneg %p102
      $region26: #{kdgqa_forward.3} parent=15 // pred_check_branch
        %181 = sbr.rel (%p179) target = $region28
      $region27: #{kdgqa_forward.3} parent=15 // pred_region
        %p182 = scmp.lt.s32.totalorder %s18, 1
        %s183 = scalar_select %p182, %s18, 1
        %s184 = smul.addr %s183, 2
        %s185 = scalar_lea.vmem %s2, %s184
      $region28: #{kdgqa_forward.3} parent=15 // pred_fallthru
        _
    $region16: #{kdgqa_forward.3} parent=5 // pred_fallthru
      _
    %p186 = scmp.le.s32.totalorder 1, %s9
    %p187 = scmp.lt.s32.totalorder %s9, 5
    %p188 = pnand %p186, %p187
    %p189 = pneg %p188
    // Predicated region
    $region29: #{kdgqa_forward.3} parent=5 // pred_check
      _
    $region30: #{kdgqa_forward.3} parent=5 // pred_check_branch
      %191 = sbr.rel (%p188) target = $region32
    $region31: #{kdgqa_forward.3} parent=5 // pred_region
      %s192 = ssub.s32 %s9, 1
      %s193 = smul.u32 48, %s20
      %p194 = scmp.lt.s32.totalorder %s19, 1
      %s195 = scalar_select %p194, %s19, 1
      %p196 = scmp.lt.s32.totalorder %s193, 47
      %s197 = scalar_select %p196, %s193, 47
      %s198 = smul.addr %s197, 2
      %s199 = smul.addr %s195, 96
      %s200 = sadd.s32 %s198, %s199
      %s201 = smul.addr %s200, 8
      %s202 = scalar_lea.vmem %s0, %s201
      %p203 = pneg %p56
      %p204 = pneg %p53
      %p205 = scmp.lt.s32.totalorder %s21, 1
      %s206 = scalar_select %p205, %s21, 1
      %s207 = smul.addr %s206, 64
      %s208 = smul.addr %s207, 8
      %s209 = scalar_lea.vmem %s1, %s208
      %p210 = pneg %p82
      %p211 = pneg %p79
      %p212 = scmp.lt.s32.totalorder %s21, 1
      %s213 = scalar_select %p212, %s21, 1
      %s214 = smul.addr %s213, 2
      %s215 = scalar_lea.vmem %s2, %s214
      %p216 = pneg %p108
      %p217 = pneg %p105
      %p218 = pneg %p138
      %p219 = pneg %p135
      %s220 = smul.u32 8, %s21
      %s221 = smul.u32 48, %s20
      %p222 = scmp.lt.s32.totalorder %s19, 1
      %s223 = scalar_select %p222, %s19, 1
      %p224 = scmp.lt.s32.totalorder %s220, 15
      %s225 = scalar_select %p224, %s220, 15
      %p226 = scmp.lt.s32.totalorder %s221, 47
      %s227 = scalar_select %p226, %s221, 47
      %s228 = smul.addr %s225, 48
      %s229 = sadd.s32 %s227, %s228
      %s230 = smul.addr %s223, 768
      %s231 = sadd.s32 %s229, %s230
      %s232 = smul.addr %s231, 8
      %s233 = scalar_lea.vmem %s3, %s232
      %s234 = smul.u32 48, %s20
      %p235 = scmp.lt.s32.totalorder %s19, 1
      %s236 = scalar_select %p235, %s19, 1
      %p237 = scmp.lt.s32.totalorder %s234, 47
      %s238 = scalar_select %p237, %s234, 47
      %s239 = smul.addr %s238, 2
      %s240 = smul.addr %s236, 96
      %s241 = sadd.s32 %s239, %s240
      %s242 = smul.addr %s241, 8
      %s243 = scalar_lea.vmem %s0, %s242
      %s244 = smul.u32 48, %s20
      %p245 = scmp.lt.s32.totalorder %s21, 1
      %s246 = scalar_select %p245, %s21, 1
      %s247 = smul.addr %s246, 64
      %s248 = smul.addr %s247, 8
      %s249 = scalar_lea.vmem %s1, %s248
      %p250 = scmp.lt.s32.totalorder %s21, 1
      %s251 = scalar_select %p250, %s21, 1
      %s252 = smul.addr %s251, 2
      %s253 = scalar_lea.vmem %s2, %s252
      %s254 = smul.u32 8, %s21
      %s255 = smul.u32 48, %s20
      %p256 = scmp.lt.s32.totalorder %s19, 1
      %s257 = scalar_select %p256, %s19, 1
      %p258 = scmp.lt.s32.totalorder %s254, 15
      %s259 = scalar_select %p258, %s254, 15
      %p260 = scmp.lt.s32.totalorder %s255, 47
      %s261 = scalar_select %p260, %s255, 47
      %s262 = smul.addr %s259, 48
      %s263 = sadd.s32 %s261, %s262
      %s264 = smul.addr %s257, 768
      %s265 = sadd.s32 %s263, %s264
      %s266 = smul.addr %s265, 8
      %s267 = scalar_lea.vmem %s3, %s266
      %s268 = smul.u32 8, %s21
      %s269 = smul.u32 48, %s20
      %v270 = vld [vmem:[%s243] sm:$0xff]
      %v271 = vld [vmem:[%s243 + $0x8] sm:$0xff]
      %v272 = vld [vmem:[%s243 + $0x10] sm:$0xff]
      %v273 = vld [vmem:[%s243 + $0x18] sm:$0xff]
      %v274 = vld [vmem:[%s243 + $0x20] sm:$0xff]
      %v275 = vld [vmem:[%s243 + $0x28] sm:$0xff]
      %v276 = vld [vmem:[%s243 + $0x30] sm:$0xff]
      %v277 = vld [vmem:[%s243 + $0x38] sm:$0xff]
      %v278 = vld [vmem:[%s243 + $0x40] sm:$0xff]
      %v279 = vld [vmem:[%s243 + $0x48] sm:$0xff]
      %v280 = vld [vmem:[%s243 + $0x50] sm:$0xff]
      %v281 = vld [vmem:[%s243 + $0x58] sm:$0xff]
      %v282 = vld [vmem:[%s243 + $0x60] sm:$0xff]
      %v283 = vld [vmem:[%s243 + $0x68] sm:$0xff]
      %v284 = vld [vmem:[%s243 + $0x70] sm:$0xff]
      %v285 = vld [vmem:[%s243 + $0x78] sm:$0xff]
      %v286 = vld [vmem:[%s243 + $0x80] sm:$0xff]
      %v287 = vld [vmem:[%s243 + $0x88] sm:$0xff]
      %v288 = vld [vmem:[%s243 + $0x90] sm:$0xff]
      %v289 = vld [vmem:[%s243 + $0x98] sm:$0xff]
      %v290 = vld [vmem:[%s243 + $0xa0] sm:$0xff]
      %v291 = vld [vmem:[%s243 + $0xa8] sm:$0xff]
      %v292 = vld [vmem:[%s243 + $0xb0] sm:$0xff]
      %v293 = vld [vmem:[%s243 + $0xb8] sm:$0xff]
      %v294 = vld [vmem:[%s243 + $0xc0] sm:$0xff]
      %v295 = vld [vmem:[%s243 + $0xc8] sm:$0xff]
      %v296 = vld [vmem:[%s243 + $0xd0] sm:$0xff]
      %v297 = vld [vmem:[%s243 + $0xd8] sm:$0xff]
      %v298 = vld [vmem:[%s243 + $0xe0] sm:$0xff]
      %v299 = vld [vmem:[%s243 + $0xe8] sm:$0xff]
      %v300 = vld [vmem:[%s243 + $0xf0] sm:$0xff]
      %v301 = vld [vmem:[%s243 + $0xf8] sm:$0xff]
      %v302 = vld [vmem:[%s243 + $0x100] sm:$0xff]
      %v303 = vld [vmem:[%s243 + $0x108] sm:$0xff]
      %v304 = vld [vmem:[%s243 + $0x110] sm:$0xff]
      %v305 = vld [vmem:[%s243 + $0x118] sm:$0xff]
      %v306 = vld [vmem:[%s243 + $0x120] sm:$0xff]
      %v307 = vld [vmem:[%s243 + $0x128] sm:$0xff]
      %v308 = vld [vmem:[%s243 + $0x130] sm:$0xff]
      %v309 = vld [vmem:[%s243 + $0x138] sm:$0xff]
      %v310 = vld [vmem:[%s243 + $0x140] sm:$0xff]
      %v311 = vld [vmem:[%s243 + $0x148] sm:$0xff]
      %v312 = vld [vmem:[%s243 + $0x150] sm:$0xff]
      %v313 = vld [vmem:[%s243 + $0x158] sm:$0xff]
      %v314 = vld [vmem:[%s243 + $0x160] sm:$0xff]
      %v315 = vld [vmem:[%s243 + $0x168] sm:$0xff]
      %v316 = vld [vmem:[%s243 + $0x170] sm:$0xff]
      %v317 = vld [vmem:[%s243 + $0x178] sm:$0xff]
      %v318 = vld [vmem:[%s243 + $0x180] sm:$0xff]
      %v319 = vld [vmem:[%s243 + $0x188] sm:$0xff]
      %v320 = vld [vmem:[%s243 + $0x190] sm:$0xff]
      %v321 = vld [vmem:[%s243 + $0x198] sm:$0xff]
      %v322 = vld [vmem:[%s243 + $0x1a0] sm:$0xff]
      %v323 = vld [vmem:[%s243 + $0x1a8] sm:$0xff]
      %v324 = vld [vmem:[%s243 + $0x1b0] sm:$0xff]
      %v325 = vld [vmem:[%s243 + $0x1b8] sm:$0xff]
      %v326 = vld [vmem:[%s243 + $0x1c0] sm:$0xff]
      %v327 = vld [vmem:[%s243 + $0x1c8] sm:$0xff]
      %v328 = vld [vmem:[%s243 + $0x1d0] sm:$0xff]
      %v329 = vld [vmem:[%s243 + $0x1d8] sm:$0xff]
      %v330 = vld [vmem:[%s243 + $0x1e0] sm:$0xff]
      %v331 = vld [vmem:[%s243 + $0x1e8] sm:$0xff]
      %v332 = vld [vmem:[%s243 + $0x1f0] sm:$0xff]
      %v333 = vld [vmem:[%s243 + $0x1f8] sm:$0xff]
      %v334 = vld [vmem:[%s243 + $0x200] sm:$0xff]
      %v335 = vld [vmem:[%s243 + $0x208] sm:$0xff]
      %v336 = vld [vmem:[%s243 + $0x210] sm:$0xff]
      %v337 = vld [vmem:[%s243 + $0x218] sm:$0xff]
      %v338 = vld [vmem:[%s243 + $0x220] sm:$0xff]
      %v339 = vld [vmem:[%s243 + $0x228] sm:$0xff]
      %v340 = vld [vmem:[%s243 + $0x230] sm:$0xff]
      %v341 = vld [vmem:[%s243 + $0x238] sm:$0xff]
      %v342 = vld [vmem:[%s243 + $0x240] sm:$0xff]
      %v343 = vld [vmem:[%s243 + $0x248] sm:$0xff]
      %v344 = vld [vmem:[%s243 + $0x250] sm:$0xff]
      %v345 = vld [vmem:[%s243 + $0x258] sm:$0xff]
      %v346 = vld [vmem:[%s243 + $0x260] sm:$0xff]
      %v347 = vld [vmem:[%s243 + $0x268] sm:$0xff]
      %v348 = vld [vmem:[%s243 + $0x270] sm:$0xff]
      %v349 = vld [vmem:[%s243 + $0x278] sm:$0xff]
      %v350 = vld [vmem:[%s243 + $0x280] sm:$0xff]
      %v351 = vld [vmem:[%s243 + $0x288] sm:$0xff]
      %v352 = vld [vmem:[%s243 + $0x290] sm:$0xff]
      %v353 = vld [vmem:[%s243 + $0x298] sm:$0xff]
      %v354 = vld [vmem:[%s243 + $0x2a0] sm:$0xff]
      %v355 = vld [vmem:[%s243 + $0x2a8] sm:$0xff]
      %v356 = vld [vmem:[%s243 + $0x2b0] sm:$0xff]
      %v357 = vld [vmem:[%s243 + $0x2b8] sm:$0xff]
      %v358 = vld [vmem:[%s243 + $0x2c0] sm:$0xff]
      %v359 = vld [vmem:[%s243 + $0x2c8] sm:$0xff]
      %v360 = vld [vmem:[%s243 + $0x2d0] sm:$0xff]
      %v361 = vld [vmem:[%s243 + $0x2d8] sm:$0xff]
      %v362 = vld [vmem:[%s243 + $0x2e0] sm:$0xff]
      %v363 = vld [vmem:[%s243 + $0x2e8] sm:$0xff]
      %v364 = vld [vmem:[%s243 + $0x2f0] sm:$0xff]
      %v365 = vld [vmem:[%s243 + $0x2f8] sm:$0xff]
      %v366 = vld [vmem:[%s249] sm:$0xff]
      %v367 = vld [vmem:[%s249 + $0x8] sm:$0xff]
      %v368 = vld [vmem:[%s249 + $0x10] sm:$0xff]
      %v369 = vld [vmem:[%s249 + $0x18] sm:$0xff]
      %v370 = vld [vmem:[%s249 + $0x20] sm:$0xff]
      %v371 = vld [vmem:[%s249 + $0x28] sm:$0xff]
      %v372 = vld [vmem:[%s249 + $0x30] sm:$0xff]
      %v373 = vld [vmem:[%s249 + $0x38] sm:$0xff]
      %v374 = vld [vmem:[%s249 + $0x40] sm:$0xff]
      %v375 = vld [vmem:[%s249 + $0x48] sm:$0xff]
      %v376 = vld [vmem:[%s249 + $0x50] sm:$0xff]
      %v377 = vld [vmem:[%s249 + $0x58] sm:$0xff]
      %v378 = vld [vmem:[%s249 + $0x60] sm:$0xff]
      %v379 = vld [vmem:[%s249 + $0x68] sm:$0xff]
      %v380 = vld [vmem:[%s249 + $0x70] sm:$0xff]
      %v381 = vld [vmem:[%s249 + $0x78] sm:$0xff]
      %v382 = vld [vmem:[%s249 + $0x80] sm:$0xff]
      %v383 = vld [vmem:[%s249 + $0x88] sm:$0xff]
      %v384 = vld [vmem:[%s249 + $0x90] sm:$0xff]
      %v385 = vld [vmem:[%s249 + $0x98] sm:$0xff]
      %v386 = vld [vmem:[%s249 + $0xa0] sm:$0xff]
      %v387 = vld [vmem:[%s249 + $0xa8] sm:$0xff]
      %v388 = vld [vmem:[%s249 + $0xb0] sm:$0xff]
      %v389 = vld [vmem:[%s249 + $0xb8] sm:$0xff]
      %v390 = vld [vmem:[%s249 + $0xc0] sm:$0xff]
      %v391 = vld [vmem:[%s249 + $0xc8] sm:$0xff]
      %v392 = vld [vmem:[%s249 + $0xd0] sm:$0xff]
      %v393 = vld [vmem:[%s249 + $0xd8] sm:$0xff]
      %v394 = vld [vmem:[%s249 + $0xe0] sm:$0xff]
      %v395 = vld [vmem:[%s249 + $0xe8] sm:$0xff]
      %v396 = vld [vmem:[%s249 + $0xf0] sm:$0xff]
      %v397 = vld [vmem:[%s249 + $0xf8] sm:$0xff]
      %v398 = vld [vmem:[%s249 + $0x100] sm:$0xff]
      %v399 = vld [vmem:[%s249 + $0x108] sm:$0xff]
      %v400 = vld [vmem:[%s249 + $0x110] sm:$0xff]
      %v401 = vld [vmem:[%s249 + $0x118] sm:$0xff]
      %v402 = vld [vmem:[%s249 + $0x120] sm:$0xff]
      %v403 = vld [vmem:[%s249 + $0x128] sm:$0xff]
      %v404 = vld [vmem:[%s249 + $0x130] sm:$0xff]
      %v405 = vld [vmem:[%s249 + $0x138] sm:$0xff]
      %v406 = vld [vmem:[%s249 + $0x140] sm:$0xff]
      %v407 = vld [vmem:[%s249 + $0x148] sm:$0xff]
      %v408 = vld [vmem:[%s249 + $0x150] sm:$0xff]
      %v409 = vld [vmem:[%s249 + $0x158] sm:$0xff]
      %v410 = vld [vmem:[%s249 + $0x160] sm:$0xff]
      %v411 = vld [vmem:[%s249 + $0x168] sm:$0xff]
      %v412 = vld [vmem:[%s249 + $0x170] sm:$0xff]
      %v413 = vld [vmem:[%s249 + $0x178] sm:$0xff]
      %v414 = vld [vmem:[%s249 + $0x180] sm:$0xff]
      %v415 = vld [vmem:[%s249 + $0x188] sm:$0xff]
      %v416 = vld [vmem:[%s249 + $0x190] sm:$0xff]
      %v417 = vld [vmem:[%s249 + $0x198] sm:$0xff]
      %v418 = vld [vmem:[%s249 + $0x1a0] sm:$0xff]
      %v419 = vld [vmem:[%s249 + $0x1a8] sm:$0xff]
      %v420 = vld [vmem:[%s249 + $0x1b0] sm:$0xff]
      %v421 = vld [vmem:[%s249 + $0x1b8] sm:$0xff]
      %v422 = vld [vmem:[%s249 + $0x1c0] sm:$0xff]
      %v423 = vld [vmem:[%s249 + $0x1c8] sm:$0xff]
      %v424 = vld [vmem:[%s249 + $0x1d0] sm:$0xff]
      %v425 = vld [vmem:[%s249 + $0x1d8] sm:$0xff]
      %v426 = vld [vmem:[%s249 + $0x1e0] sm:$0xff]
      %v427 = vld [vmem:[%s249 + $0x1e8] sm:$0xff]
      %v428 = vld [vmem:[%s249 + $0x1f0] sm:$0xff]
      %v429 = vld [vmem:[%s249 + $0x1f8] sm:$0xff]
      %v430 = vld [vmem:[%s253] sm:$0x3]
      %v432 = vlaneseq
      %v433 = vshrl.u32 %v432, 7
      %v434 = vsub.s32 0, %v433
      %v435 = vrot.slane %v430, %v434
      %v436 = vlaneseq
      %v437 = vshrl.u32 %v436, 7
      %v438 = vsub.s32 1, %v437
      %v439 = vrot.slane %v430, %v438
      %442 = vmatprep.subr.mxu0 %v397
      %443 = vmatpush1.msra.mxu0 %v396
      %444 = vmatprep.subr.mxu0 %v395
      %445 = vmatpush1.msra.mxu0 %v394
      %446 = vmatprep.subr.mxu0 %v393
      %447 = vmatpush1.msra.mxu0 %v392
      %448 = vmatprep.subr.mxu0 %v391
      %449 = vmatpush1.msra.mxu0 %v390
      %450 = vmatprep.subr.mxu0 %v389
      %451 = vmatpush1.msra.mxu0 %v388
      %452 = vmatprep.subr.mxu0 %v387
      %453 = vmatpush1.msra.mxu0 %v386
      %454 = vmatprep.subr.mxu0 %v385
      %455 = vmatpush1.msra.mxu0 %v384
      %456 = vmatprep.subr.mxu0 %v383
      %457 = vmatpush1.msra.mxu0 %v382
      %458 = vmatprep.subr.mxu0 %v381
      %459 = vmatpush1.msra.mxu0 %v380
      %460 = vmatprep.subr.mxu0 %v379
      %461 = vmatpush1.msra.mxu0 %v378
      %462 = vmatprep.subr.mxu0 %v377
      %463 = vmatpush1.msra.mxu0 %v376
      %464 = vmatprep.subr.mxu0 %v375
      %465 = vmatpush1.msra.mxu0 %v374
      %466 = vmatprep.subr.mxu0 %v373
      %467 = vmatpush1.msra.mxu0 %v372
      %468 = vmatprep.subr.mxu0 %v371
      %469 = vmatpush1.msra.mxu0 %v370
      %470 = vmatprep.subr.mxu0 %v369
      %471 = vmatpush1.msra.mxu0 %v368
      %472 = vmatprep.subr.mxu0 %v367
      %473 = vmatpush1.msra.mxu0 %v366
      %474 = vmatprep.subr.mxu0 %v429
      %475 = vmatpush2.msra.mxu0 %v428
      %476 = vmatprep.subr.mxu0 %v427
      %477 = vmatpush2.msra.mxu0 %v426
      %478 = vmatprep.subr.mxu0 %v425
      %479 = vmatpush2.msra.mxu0 %v424
      %480 = vmatprep.subr.mxu0 %v423
      %481 = vmatpush2.msra.mxu0 %v422
      %482 = vmatprep.subr.mxu0 %v421
      %483 = vmatpush2.msra.mxu0 %v420
      %484 = vmatprep.subr.mxu0 %v419
      %485 = vmatpush2.msra.mxu0 %v418
      %486 = vmatprep.subr.mxu0 %v417
      %487 = vmatpush2.msra.mxu0 %v416
      %488 = vmatprep.subr.mxu0 %v415
      %489 = vmatpush2.msra.mxu0 %v414
      %490 = vmatprep.subr.mxu0 %v413
      %491 = vmatpush2.msra.mxu0 %v412
      %492 = vmatprep.subr.mxu0 %v411
      %493 = vmatpush2.msra.mxu0 %v410
      %494 = vmatprep.subr.mxu0 %v409
      %495 = vmatpush2.msra.mxu0 %v408
      %496 = vmatprep.subr.mxu0 %v407
      %497 = vmatpush2.msra.mxu0 %v406
      %498 = vmatprep.subr.mxu0 %v405
      %499 = vmatpush2.msra.mxu0 %v404
      %500 = vmatprep.subr.mxu0 %v403
      %501 = vmatpush2.msra.mxu0 %v402
      %502 = vmatprep.subr.mxu0 %v401
      %503 = vmatpush2.msra.mxu0 %v400
      %504 = vmatprep.subr.mxu0 %v399
      %505 = vmatpush2.msra.mxu0 %v398
      %506 = vmatprep.mubr.f32.mxu0 %v271
      %507 = vmatmul.mubr.f32.gmra.mxu0 %v270
      %v508 = vpop.f32.mrf.mxu0
      %v509 = vadd.f32 %v435, %v508
      %v510 = vpop.f32.mrf.mxu0
      %v511 = vadd.f32 %v439, %v510
      %512 = vmatprep.mubr.f32.mxu0 %v273
      %513 = vmatmul.mubr.f32.gmra.mxu0 %v272
      %v514 = vpop.f32.mrf.mxu0
      %v515 = vadd.f32 %v435, %v514
      %v516 = vpop.f32.mrf.mxu0
      %v517 = vadd.f32 %v439, %v516
      %518 = vmatprep.mubr.f32.mxu0 %v275
      %519 = vmatmul.mubr.f32.gmra.mxu0 %v274
      %v520 = vpop.f32.mrf.mxu0
      %v521 = vadd.f32 %v435, %v520
      %v522 = vpop.f32.mrf.mxu0
      %v523 = vadd.f32 %v439, %v522
      %524 = vmatprep.mubr.f32.mxu0 %v277
      %525 = vmatmul.mubr.f32.gmra.mxu0 %v276
      %v526 = vpop.f32.mrf.mxu0
      %v527 = vadd.f32 %v435, %v526
      %v528 = vpop.f32.mrf.mxu0
      %v529 = vadd.f32 %v439, %v528
      %530 = vmatprep.mubr.f32.mxu0 %v279
      %531 = vmatmul.mubr.f32.gmra.mxu0 %v278
      %v532 = vpop.f32.mrf.mxu0
      %v533 = vadd.f32 %v435, %v532
      %v534 = vpop.f32.mrf.mxu0
      %v535 = vadd.f32 %v439, %v534
      %536 = vmatprep.mubr.f32.mxu0 %v281
      %537 = vmatmul.mubr.f32.gmra.mxu0 %v280
      %v538 = vpop.f32.mrf.mxu0
      %v539 = vadd.f32 %v435, %v538
      %v540 = vpop.f32.mrf.mxu0
      %v541 = vadd.f32 %v439, %v540
      %542 = vmatprep.mubr.f32.mxu0 %v283
      %543 = vmatmul.mubr.f32.gmra.mxu0 %v282
      %v544 = vpop.f32.mrf.mxu0
      %v545 = vadd.f32 %v435, %v544
      %v546 = vpop.f32.mrf.mxu0
      %v547 = vadd.f32 %v439, %v546
      %548 = vmatprep.mubr.f32.mxu0 %v285
      %549 = vmatmul.mubr.f32.gmra.mxu0 %v284
      %v550 = vpop.f32.mrf.mxu0
      %v551 = vadd.f32 %v435, %v550
      %v552 = vpop.f32.mrf.mxu0
      %v553 = vadd.f32 %v439, %v552
      %554 = vmatprep.mubr.f32.mxu0 %v287
      %555 = vmatmul.mubr.f32.gmra.mxu0 %v286
      %v556 = vpop.f32.mrf.mxu0
      %v557 = vadd.f32 %v435, %v556
      %v558 = vpop.f32.mrf.mxu0
      %v559 = vadd.f32 %v439, %v558
      %560 = vmatprep.mubr.f32.mxu0 %v289
      %561 = vmatmul.mubr.f32.gmra.mxu0 %v288
      %v562 = vpop.f32.mrf.mxu0
      %v563 = vadd.f32 %v435, %v562
      %v564 = vpop.f32.mrf.mxu0
      %v565 = vadd.f32 %v439, %v564
      %566 = vmatprep.mubr.f32.mxu0 %v291
      %567 = vmatmul.mubr.f32.gmra.mxu0 %v290
      %v568 = vpop.f32.mrf.mxu0
      %v569 = vadd.f32 %v435, %v568
      %v570 = vpop.f32.mrf.mxu0
      %v571 = vadd.f32 %v439, %v570
      %572 = vmatprep.mubr.f32.mxu0 %v293
      %573 = vmatmul.mubr.f32.gmra.mxu0 %v292
      %v574 = vpop.f32.mrf.mxu0
      %v575 = vadd.f32 %v435, %v574
      %v576 = vpop.f32.mrf.mxu0
      %v577 = vadd.f32 %v439, %v576
      %578 = vmatprep.mubr.f32.mxu0 %v295
      %579 = vmatmul.mubr.f32.gmra.mxu0 %v294
      %v580 = vpop.f32.mrf.mxu0
      %v581 = vadd.f32 %v435, %v580
      %v582 = vpop.f32.mrf.mxu0
      %v583 = vadd.f32 %v439, %v582
      %584 = vmatprep.mubr.f32.mxu0 %v297
      %585 = vmatmul.mubr.f32.gmra.mxu0 %v296
      %v586 = vpop.f32.mrf.mxu0
      %v587 = vadd.f32 %v435, %v586
      %v588 = vpop.f32.mrf.mxu0
      %v589 = vadd.f32 %v439, %v588
      %590 = vmatprep.mubr.f32.mxu0 %v299
      %591 = vmatmul.mubr.f32.gmra.mxu0 %v298
      %v592 = vpop.f32.mrf.mxu0
      %v593 = vadd.f32 %v435, %v592
      %v594 = vpop.f32.mrf.mxu0
      %v595 = vadd.f32 %v439, %v594
      %596 = vmatprep.mubr.f32.mxu0 %v301
      %597 = vmatmul.mubr.f32.gmra.mxu0 %v300
      %v598 = vpop.f32.mrf.mxu0
      %v599 = vadd.f32 %v435, %v598
      %v600 = vpop.f32.mrf.mxu0
      %v601 = vadd.f32 %v439, %v600
      %602 = vmatprep.mubr.f32.mxu0 %v303
      %603 = vmatmul.mubr.f32.gmra.mxu0 %v302
      %v604 = vpop.f32.mrf.mxu0
      %v605 = vadd.f32 %v435, %v604
      %v606 = vpop.f32.mrf.mxu0
      %v607 = vadd.f32 %v439, %v606
      %608 = vmatprep.mubr.f32.mxu0 %v305
      %609 = vmatmul.mubr.f32.gmra.mxu0 %v304
      %v610 = vpop.f32.mrf.mxu0
      %v611 = vadd.f32 %v435, %v610
      %v612 = vpop.f32.mrf.mxu0
      %v613 = vadd.f32 %v439, %v612
      %614 = vmatprep.mubr.f32.mxu0 %v307
      %615 = vmatmul.mubr.f32.gmra.mxu0 %v306
      %v616 = vpop.f32.mrf.mxu0
      %v617 = vadd.f32 %v435, %v616
      %v618 = vpop.f32.mrf.mxu0
      %v619 = vadd.f32 %v439, %v618
      %620 = vmatprep.mubr.f32.mxu0 %v309
      %621 = vmatmul.mubr.f32.gmra.mxu0 %v308
      %v622 = vpop.f32.mrf.mxu0
      %v623 = vadd.f32 %v435, %v622
      %v624 = vpop.f32.mrf.mxu0
      %v625 = vadd.f32 %v439, %v624
      %626 = vmatprep.mubr.f32.mxu0 %v311
      %627 = vmatmul.mubr.f32.gmra.mxu0 %v310
      %v628 = vpop.f32.mrf.mxu0
      %v629 = vadd.f32 %v435, %v628
      %v630 = vpop.f32.mrf.mxu0
      %v631 = vadd.f32 %v439, %v630
      %632 = vmatprep.mubr.f32.mxu0 %v313
      %633 = vmatmul.mubr.f32.gmra.mxu0 %v312
      %v634 = vpop.f32.mrf.mxu0
      %v635 = vadd.f32 %v435, %v634
      %v636 = vpop.f32.mrf.mxu0
      %v637 = vadd.f32 %v439, %v636
      %638 = vmatprep.mubr.f32.mxu0 %v315
      %639 = vmatmul.mubr.f32.gmra.mxu0 %v314
      %v640 = vpop.f32.mrf.mxu0
      %v641 = vadd.f32 %v435, %v640
      %v642 = vpop.f32.mrf.mxu0
      %v643 = vadd.f32 %v439, %v642
      %644 = vmatprep.mubr.f32.mxu0 %v317
      %645 = vmatmul.mubr.f32.gmra.mxu0 %v316
      %v646 = vpop.f32.mrf.mxu0
      %v647 = vadd.f32 %v435, %v646
      %v648 = vpop.f32.mrf.mxu0
      %v649 = vadd.f32 %v439, %v648
      %650 = vmatprep.mubr.f32.mxu0 %v319
      %651 = vmatmul.mubr.f32.gmra.mxu0 %v318
      %v652 = vpop.f32.mrf.mxu0
      %v653 = vadd.f32 %v435, %v652
      %v654 = vpop.f32.mrf.mxu0
      %v655 = vadd.f32 %v439, %v654
      %656 = vmatprep.mubr.f32.mxu0 %v321
      %657 = vmatmul.mubr.f32.gmra.mxu0 %v320
      %v658 = vpop.f32.mrf.mxu0
      %v659 = vadd.f32 %v435, %v658
      %v660 = vpop.f32.mrf.mxu0
      %v661 = vadd.f32 %v439, %v660
      %662 = vmatprep.mubr.f32.mxu0 %v323
      %663 = vmatmul.mubr.f32.gmra.mxu0 %v322
      %v664 = vpop.f32.mrf.mxu0
      %v665 = vadd.f32 %v435, %v664
      %v666 = vpop.f32.mrf.mxu0
      %v667 = vadd.f32 %v439, %v666
      %668 = vmatprep.mubr.f32.mxu0 %v325
      %669 = vmatmul.mubr.f32.gmra.mxu0 %v324
      %v670 = vpop.f32.mrf.mxu0
      %v671 = vadd.f32 %v435, %v670
      %v672 = vpop.f32.mrf.mxu0
      %v673 = vadd.f32 %v439, %v672
      %674 = vmatprep.mubr.f32.mxu0 %v327
      %675 = vmatmul.mubr.f32.gmra.mxu0 %v326
      %v676 = vpop.f32.mrf.mxu0
      %v677 = vadd.f32 %v435, %v676
      %v678 = vpop.f32.mrf.mxu0
      %v679 = vadd.f32 %v439, %v678
      %680 = vmatprep.mubr.f32.mxu0 %v329
      %681 = vmatmul.mubr.f32.gmra.mxu0 %v328
      %v682 = vpop.f32.mrf.mxu0
      %v683 = vadd.f32 %v435, %v682
      %v684 = vpop.f32.mrf.mxu0
      %v685 = vadd.f32 %v439, %v684
      %686 = vmatprep.mubr.f32.mxu0 %v331
      %687 = vmatmul.mubr.f32.gmra.mxu0 %v330
      %v688 = vpop.f32.mrf.mxu0
      %v689 = vadd.f32 %v435, %v688
      %v690 = vpop.f32.mrf.mxu0
      %v691 = vadd.f32 %v439, %v690
      %692 = vmatprep.mubr.f32.mxu0 %v333
      %693 = vmatmul.mubr.f32.gmra.mxu0 %v332
      %v694 = vpop.f32.mrf.mxu0
      %v695 = vadd.f32 %v435, %v694
      %v696 = vpop.f32.mrf.mxu0
      %v697 = vadd.f32 %v439, %v696
      %698 = vmatprep.mubr.f32.mxu0 %v335
      %699 = vmatmul.mubr.f32.gmra.mxu0 %v334
      %v700 = vpop.f32.mrf.mxu0
      %v701 = vadd.f32 %v435, %v700
      %v702 = vpop.f32.mrf.mxu0
      %v703 = vadd.f32 %v439, %v702
      %704 = vmatprep.mubr.f32.mxu0 %v337
      %705 = vmatmul.mubr.f32.gmra.mxu0 %v336
      %v706 = vpop.f32.mrf.mxu0
      %v707 = vadd.f32 %v435, %v706
      %v708 = vpop.f32.mrf.mxu0
      %v709 = vadd.f32 %v439, %v708
      %710 = vmatprep.mubr.f32.mxu0 %v339
      %711 = vmatmul.mubr.f32.gmra.mxu0 %v338
      %v712 = vpop.f32.mrf.mxu0
      %v713 = vadd.f32 %v435, %v712
      %v714 = vpop.f32.mrf.mxu0
      %v715 = vadd.f32 %v439, %v714
      %716 = vmatprep.mubr.f32.mxu0 %v341
      %717 = vmatmul.mubr.f32.gmra.mxu0 %v340
      %v718 = vpop.f32.mrf.mxu0
      %v719 = vadd.f32 %v435, %v718
      %v720 = vpop.f32.mrf.mxu0
      %v721 = vadd.f32 %v439, %v720
      %722 = vmatprep.mubr.f32.mxu0 %v343
      %723 = vmatmul.mubr.f32.gmra.mxu0 %v342
      %v724 = vpop.f32.mrf.mxu0
      %v725 = vadd.f32 %v435, %v724
      %v726 = vpop.f32.mrf.mxu0
      %v727 = vadd.f32 %v439, %v726
      %728 = vmatprep.mubr.f32.mxu0 %v345
      %729 = vmatmul.mubr.f32.gmra.mxu0 %v344
      %v730 = vpop.f32.mrf.mxu0
      %v731 = vadd.f32 %v435, %v730
      %v732 = vpop.f32.mrf.mxu0
      %v733 = vadd.f32 %v439, %v732
      %734 = vmatprep.mubr.f32.mxu0 %v347
      %735 = vmatmul.mubr.f32.gmra.mxu0 %v346
      %v736 = vpop.f32.mrf.mxu0
      %v737 = vadd.f32 %v435, %v736
      %v738 = vpop.f32.mrf.mxu0
      %v739 = vadd.f32 %v439, %v738
      %740 = vmatprep.mubr.f32.mxu0 %v349
      %741 = vmatmul.mubr.f32.gmra.mxu0 %v348
      %v742 = vpop.f32.mrf.mxu0
      %v743 = vadd.f32 %v435, %v742
      %v744 = vpop.f32.mrf.mxu0
      %v745 = vadd.f32 %v439, %v744
      %746 = vmatprep.mubr.f32.mxu0 %v351
      %747 = vmatmul.mubr.f32.gmra.mxu0 %v350
      %v748 = vpop.f32.mrf.mxu0
      %v749 = vadd.f32 %v435, %v748
      %v750 = vpop.f32.mrf.mxu0
      %v751 = vadd.f32 %v439, %v750
      %752 = vmatprep.mubr.f32.mxu0 %v353
      %753 = vmatmul.mubr.f32.gmra.mxu0 %v352
      %v754 = vpop.f32.mrf.mxu0
      %v755 = vadd.f32 %v435, %v754
      %v756 = vpop.f32.mrf.mxu0
      %v757 = vadd.f32 %v439, %v756
      %758 = vmatprep.mubr.f32.mxu0 %v355
      %759 = vmatmul.mubr.f32.gmra.mxu0 %v354
      %v760 = vpop.f32.mrf.mxu0
      %v761 = vadd.f32 %v435, %v760
      %v762 = vpop.f32.mrf.mxu0
      %v763 = vadd.f32 %v439, %v762
      %764 = vmatprep.mubr.f32.mxu0 %v357
      %765 = vmatmul.mubr.f32.gmra.mxu0 %v356
      %v766 = vpop.f32.mrf.mxu0
      %v767 = vadd.f32 %v435, %v766
      %v768 = vpop.f32.mrf.mxu0
      %v769 = vadd.f32 %v439, %v768
      %770 = vmatprep.mubr.f32.mxu0 %v359
      %771 = vmatmul.mubr.f32.gmra.mxu0 %v358
      %v772 = vpop.f32.mrf.mxu0
      %v773 = vadd.f32 %v435, %v772
      %v774 = vpop.f32.mrf.mxu0
      %v775 = vadd.f32 %v439, %v774
      %776 = vmatprep.mubr.f32.mxu0 %v361
      %777 = vmatmul.mubr.f32.gmra.mxu0 %v360
      %v778 = vpop.f32.mrf.mxu0
      %v779 = vadd.f32 %v435, %v778
      %v780 = vpop.f32.mrf.mxu0
      %v781 = vadd.f32 %v439, %v780
      %782 = vmatprep.mubr.f32.mxu0 %v363
      %783 = vmatmul.mubr.f32.gmra.mxu0 %v362
      %v784 = vpop.f32.mrf.mxu0
      %v785 = vadd.f32 %v435, %v784
      %v786 = vpop.f32.mrf.mxu0
      %v787 = vadd.f32 %v439, %v786
      %788 = vmatprep.mubr.f32.mxu0 %v365
      %789 = vmatmul.mubr.f32.gmra.mxu0 %v364
      %v790 = vpop.f32.mrf.mxu0
      %v791 = vadd.f32 %v435, %v790
      %v792 = vpop.f32.mrf.mxu0
      %v793 = vadd.f32 %v439, %v792
      %794 = vdwg.mxu0
      %vm795 = vcmask 261120
      %796 = vst.msk [vmem:[%s267] sm:$0xff] %vm795, %v509
      %797 = vst.msk [vmem:[%s267 + $0x8] sm:$0xff] %vm795, %v515
      %798 = vst.msk [vmem:[%s267 + $0x10] sm:$0xff] %vm795, %v521
      %799 = vst.msk [vmem:[%s267 + $0x18] sm:$0xff] %vm795, %v527
      %800 = vst.msk [vmem:[%s267 + $0x20] sm:$0xff] %vm795, %v533
      %801 = vst.msk [vmem:[%s267 + $0x28] sm:$0xff] %vm795, %v539
      %802 = vst.msk [vmem:[%s267 + $0x30] sm:$0xff] %vm795, %v545
      %803 = vst.msk [vmem:[%s267 + $0x38] sm:$0xff] %vm795, %v551
      %804 = vst.msk [vmem:[%s267 + $0x40] sm:$0xff] %vm795, %v557
      %805 = vst.msk [vmem:[%s267 + $0x48] sm:$0xff] %vm795, %v563
      %806 = vst.msk [vmem:[%s267 + $0x50] sm:$0xff] %vm795, %v569
      %807 = vst.msk [vmem:[%s267 + $0x58] sm:$0xff] %vm795, %v575
      %808 = vst.msk [vmem:[%s267 + $0x60] sm:$0xff] %vm795, %v581
      %809 = vst.msk [vmem:[%s267 + $0x68] sm:$0xff] %vm795, %v587
      %810 = vst.msk [vmem:[%s267 + $0x70] sm:$0xff] %vm795, %v593
      %811 = vst.msk [vmem:[%s267 + $0x78] sm:$0xff] %vm795, %v599
      %812 = vst.msk [vmem:[%s267 + $0x80] sm:$0xff] %vm795, %v605
      %813 = vst.msk [vmem:[%s267 + $0x88] sm:$0xff] %vm795, %v611
      %814 = vst.msk [vmem:[%s267 + $0x90] sm:$0xff] %vm795, %v617
      %815 = vst.msk [vmem:[%s267 + $0x98] sm:$0xff] %vm795, %v623
      %816 = vst.msk [vmem:[%s267 + $0xa0] sm:$0xff] %vm795, %v629
      %817 = vst.msk [vmem:[%s267 + $0xa8] sm:$0xff] %vm795, %v635
      %818 = vst.msk [vmem:[%s267 + $0xb0] sm:$0xff] %vm795, %v641
      %819 = vst.msk [vmem:[%s267 + $0xb8] sm:$0xff] %vm795, %v647
      %820 = vst.msk [vmem:[%s267 + $0xc0] sm:$0xff] %vm795, %v653
      %821 = vst.msk [vmem:[%s267 + $0xc8] sm:$0xff] %vm795, %v659
      %822 = vst.msk [vmem:[%s267 + $0xd0] sm:$0xff] %vm795, %v665
      %823 = vst.msk [vmem:[%s267 + $0xd8] sm:$0xff] %vm795, %v671
      %824 = vst.msk [vmem:[%s267 + $0xe0] sm:$0xff] %vm795, %v677
      %825 = vst.msk [vmem:[%s267 + $0xe8] sm:$0xff] %vm795, %v683
      %826 = vst.msk [vmem:[%s267 + $0xf0] sm:$0xff] %vm795, %v689
      %827 = vst.msk [vmem:[%s267 + $0xf8] sm:$0xff] %vm795, %v695
      %828 = vst.msk [vmem:[%s267 + $0x100] sm:$0xff] %vm795, %v701
      %829 = vst.msk [vmem:[%s267 + $0x108] sm:$0xff] %vm795, %v707
      %830 = vst.msk [vmem:[%s267 + $0x110] sm:$0xff] %vm795, %v713
      %831 = vst.msk [vmem:[%s267 + $0x118] sm:$0xff] %vm795, %v719
      %832 = vst.msk [vmem:[%s267 + $0x120] sm:$0xff] %vm795, %v725
      %833 = vst.msk [vmem:[%s267 + $0x128] sm:$0xff] %vm795, %v731
      %834 = vst.msk [vmem:[%s267 + $0x130] sm:$0xff] %vm795, %v737
      %835 = vst.msk [vmem:[%s267 + $0x138] sm:$0xff] %vm795, %v743
      %836 = vst.msk [vmem:[%s267 + $0x140] sm:$0xff] %vm795, %v749
      %837 = vst.msk [vmem:[%s267 + $0x148] sm:$0xff] %vm795, %v755
      %838 = vst.msk [vmem:[%s267 + $0x150] sm:$0xff] %vm795, %v761
      %839 = vst.msk [vmem:[%s267 + $0x158] sm:$0xff] %vm795, %v767
      %840 = vst.msk [vmem:[%s267 + $0x160] sm:$0xff] %vm795, %v773
      %841 = vst.msk [vmem:[%s267 + $0x168] sm:$0xff] %vm795, %v779
      %842 = vst.msk [vmem:[%s267 + $0x170] sm:$0xff] %vm795, %v785
      %843 = vst.msk [vmem:[%s267 + $0x178] sm:$0xff] %vm795, %v791
      %892 = vrot.lane.b32.xlu0 %v509, 96
      %v893 = vpop.permute.xlu0 %892
      %894 = vrot.lane.b32.xlu0 %v515, 96
      %v895 = vpop.permute.xlu0 %894
      %896 = vrot.lane.b32.xlu0 %v521, 96
      %v897 = vpop.permute.xlu0 %896
      %898 = vrot.lane.b32.xlu0 %v527, 96
      %v899 = vpop.permute.xlu0 %898
      %900 = vrot.lane.b32.xlu0 %v533, 96
      %v901 = vpop.permute.xlu0 %900
      %902 = vrot.lane.b32.xlu0 %v539, 96
      %v903 = vpop.permute.xlu0 %902
      %904 = vrot.lane.b32.xlu0 %v545, 96
      %v905 = vpop.permute.xlu0 %904
      %906 = vrot.lane.b32.xlu0 %v551, 96
      %v907 = vpop.permute.xlu0 %906
      %908 = vrot.lane.b32.xlu0 %v557, 96
      %v909 = vpop.permute.xlu0 %908
      %910 = vrot.lane.b32.xlu0 %v563, 96
      %v911 = vpop.permute.xlu0 %910
      %912 = vrot.lane.b32.xlu0 %v569, 96
      %v913 = vpop.permute.xlu0 %912
      %914 = vrot.lane.b32.xlu0 %v575, 96
      %v915 = vpop.permute.xlu0 %914
      %916 = vrot.lane.b32.xlu0 %v581, 96
      %v917 = vpop.permute.xlu0 %916
      %918 = vrot.lane.b32.xlu0 %v587, 96
      %v919 = vpop.permute.xlu0 %918
      %920 = vrot.lane.b32.xlu0 %v593, 96
      %v921 = vpop.permute.xlu0 %920
      %922 = vrot.lane.b32.xlu0 %v599, 96
      %v923 = vpop.permute.xlu0 %922
      %924 = vrot.lane.b32.xlu0 %v605, 96
      %v925 = vpop.permute.xlu0 %924
      %926 = vrot.lane.b32.xlu0 %v611, 96
      %v927 = vpop.permute.xlu0 %926
      %928 = vrot.lane.b32.xlu0 %v617, 96
      %v929 = vpop.permute.xlu0 %928
      %930 = vrot.lane.b32.xlu0 %v623, 96
      %v931 = vpop.permute.xlu0 %930
      %932 = vrot.lane.b32.xlu0 %v629, 96
      %v933 = vpop.permute.xlu0 %932
      %934 = vrot.lane.b32.xlu0 %v635, 96
      %v935 = vpop.permute.xlu0 %934
      %936 = vrot.lane.b32.xlu0 %v641, 96
      %v937 = vpop.permute.xlu0 %936
      %938 = vrot.lane.b32.xlu0 %v647, 96
      %v939 = vpop.permute.xlu0 %938
      %940 = vrot.lane.b32.xlu0 %v653, 96
      %v941 = vpop.permute.xlu0 %940
      %942 = vrot.lane.b32.xlu0 %v659, 96
      %v943 = vpop.permute.xlu0 %942
      %944 = vrot.lane.b32.xlu0 %v665, 96
      %v945 = vpop.permute.xlu0 %944
      %946 = vrot.lane.b32.xlu0 %v671, 96
      %v947 = vpop.permute.xlu0 %946
      %948 = vrot.lane.b32.xlu0 %v677, 96
      %v949 = vpop.permute.xlu0 %948
      %950 = vrot.lane.b32.xlu0 %v683, 96
      %v951 = vpop.permute.xlu0 %950
      %952 = vrot.lane.b32.xlu0 %v689, 96
      %v953 = vpop.permute.xlu0 %952
      %954 = vrot.lane.b32.xlu0 %v695, 96
      %v955 = vpop.permute.xlu0 %954
      %956 = vrot.lane.b32.xlu0 %v701, 96
      %v957 = vpop.permute.xlu0 %956
      %958 = vrot.lane.b32.xlu0 %v707, 96
      %v959 = vpop.permute.xlu0 %958
      %960 = vrot.lane.b32.xlu0 %v713, 96
      %v961 = vpop.permute.xlu0 %960
      %962 = vrot.lane.b32.xlu0 %v719, 96
      %v963 = vpop.permute.xlu0 %962
      %964 = vrot.lane.b32.xlu0 %v725, 96
      %v965 = vpop.permute.xlu0 %964
      %966 = vrot.lane.b32.xlu0 %v731, 96
      %v967 = vpop.permute.xlu0 %966
      %968 = vrot.lane.b32.xlu0 %v737, 96
      %v969 = vpop.permute.xlu0 %968
      %970 = vrot.lane.b32.xlu0 %v743, 96
      %v971 = vpop.permute.xlu0 %970
      %972 = vrot.lane.b32.xlu0 %v749, 96
      %v973 = vpop.permute.xlu0 %972
      %974 = vrot.lane.b32.xlu0 %v755, 96
      %v975 = vpop.permute.xlu0 %974
      %976 = vrot.lane.b32.xlu0 %v761, 96
      %v977 = vpop.permute.xlu0 %976
      %978 = vrot.lane.b32.xlu0 %v767, 96
      %v979 = vpop.permute.xlu0 %978
      %980 = vrot.lane.b32.xlu0 %v773, 96
      %v981 = vpop.permute.xlu0 %980
      %982 = vrot.lane.b32.xlu0 %v779, 96
      %v983 = vpop.permute.xlu0 %982
      %984 = vrot.lane.b32.xlu0 %v785, 96
      %v985 = vpop.permute.xlu0 %984
      %986 = vrot.lane.b32.xlu0 %v791, 96
      %v987 = vpop.permute.xlu0 %986
      %s1036 = scalar_lea.vmem %s267, 384
      %1037 = vst.msk [vmem:[%s1036] sm:$0xff] %vm795, %v893
      %1038 = vst.msk [vmem:[%s1036 + $0x8] sm:$0xff] %vm795, %v895
      %1039 = vst.msk [vmem:[%s1036 + $0x10] sm:$0xff] %vm795, %v897
      %1040 = vst.msk [vmem:[%s1036 + $0x18] sm:$0xff] %vm795, %v899
      %1041 = vst.msk [vmem:[%s1036 + $0x20] sm:$0xff] %vm795, %v901
      %1042 = vst.msk [vmem:[%s1036 + $0x28] sm:$0xff] %vm795, %v903
      %1043 = vst.msk [vmem:[%s1036 + $0x30] sm:$0xff] %vm795, %v905
      %1044 = vst.msk [vmem:[%s1036 + $0x38] sm:$0xff] %vm795, %v907
      %1045 = vst.msk [vmem:[%s1036 + $0x40] sm:$0xff] %vm795, %v909
      %1046 = vst.msk [vmem:[%s1036 + $0x48] sm:$0xff] %vm795, %v911
      %1047 = vst.msk [vmem:[%s1036 + $0x50] sm:$0xff] %vm795, %v913
      %1048 = vst.msk [vmem:[%s1036 + $0x58] sm:$0xff] %vm795, %v915
      %1049 = vst.msk [vmem:[%s1036 + $0x60] sm:$0xff] %vm795, %v917
      %1050 = vst.msk [vmem:[%s1036 + $0x68] sm:$0xff] %vm795, %v919
      %1051 = vst.msk [vmem:[%s1036 + $0x70] sm:$0xff] %vm795, %v921
      %1052 = vst.msk [vmem:[%s1036 + $0x78] sm:$0xff] %vm795, %v923
      %1053 = vst.msk [vmem:[%s1036 + $0x80] sm:$0xff] %vm795, %v925
      %1054 = vst.msk [vmem:[%s1036 + $0x88] sm:$0xff] %vm795, %v927
      %1055 = vst.msk [vmem:[%s1036 + $0x90] sm:$0xff] %vm795, %v929
      %1056 = vst.msk [vmem:[%s1036 + $0x98] sm:$0xff] %vm795, %v931
      %1057 = vst.msk [vmem:[%s1036 + $0xa0] sm:$0xff] %vm795, %v933
      %1058 = vst.msk [vmem:[%s1036 + $0xa8] sm:$0xff] %vm795, %v935
      %1059 = vst.msk [vmem:[%s1036 + $0xb0] sm:$0xff] %vm795, %v937
      %1060 = vst.msk [vmem:[%s1036 + $0xb8] sm:$0xff] %vm795, %v939
      %1061 = vst.msk [vmem:[%s1036 + $0xc0] sm:$0xff] %vm795, %v941
      %1062 = vst.msk [vmem:[%s1036 + $0xc8] sm:$0xff] %vm795, %v943
      %1063 = vst.msk [vmem:[%s1036 + $0xd0] sm:$0xff] %vm795, %v945
      %1064 = vst.msk [vmem:[%s1036 + $0xd8] sm:$0xff] %vm795, %v947
      %1065 = vst.msk [vmem:[%s1036 + $0xe0] sm:$0xff] %vm795, %v949
      %1066 = vst.msk [vmem:[%s1036 + $0xe8] sm:$0xff] %vm795, %v951
      %1067 = vst.msk [vmem:[%s1036 + $0xf0] sm:$0xff] %vm795, %v953
      %1068 = vst.msk [vmem:[%s1036 + $0xf8] sm:$0xff] %vm795, %v955
      %1069 = vst.msk [vmem:[%s1036 + $0x100] sm:$0xff] %vm795, %v957
      %1070 = vst.msk [vmem:[%s1036 + $0x108] sm:$0xff] %vm795, %v959
      %1071 = vst.msk [vmem:[%s1036 + $0x110] sm:$0xff] %vm795, %v961
      %1072 = vst.msk [vmem:[%s1036 + $0x118] sm:$0xff] %vm795, %v963
      %1073 = vst.msk [vmem:[%s1036 + $0x120] sm:$0xff] %vm795, %v965
      %1074 = vst.msk [vmem:[%s1036 + $0x128] sm:$0xff] %vm795, %v967
      %1075 = vst.msk [vmem:[%s1036 + $0x130] sm:$0xff] %vm795, %v969
      %1076 = vst.msk [vmem:[%s1036 + $0x138] sm:$0xff] %vm795, %v971
      %1077 = vst.msk [vmem:[%s1036 + $0x140] sm:$0xff] %vm795, %v973
      %1078 = vst.msk [vmem:[%s1036 + $0x148] sm:$0xff] %vm795, %v975
      %1079 = vst.msk [vmem:[%s1036 + $0x150] sm:$0xff] %vm795, %v977
      %1080 = vst.msk [vmem:[%s1036 + $0x158] sm:$0xff] %vm795, %v979
      %1081 = vst.msk [vmem:[%s1036 + $0x160] sm:$0xff] %vm795, %v981
      %1082 = vst.msk [vmem:[%s1036 + $0x168] sm:$0xff] %vm795, %v983
      %1083 = vst.msk [vmem:[%s1036 + $0x170] sm:$0xff] %vm795, %v985
      %1084 = vst.msk [vmem:[%s1036 + $0x178] sm:$0xff] %vm795, %v987
      %1085 = vrot.lane.b32.xlu0 %v509, 64
      %v1086 = vpop.permute.xlu0 %1085
      %1087 = vrot.lane.b32.xlu0 %v515, 64
      %v1088 = vpop.permute.xlu0 %1087
      %1089 = vrot.lane.b32.xlu0 %v521, 64
      %v1090 = vpop.permute.xlu0 %1089
      %1091 = vrot.lane.b32.xlu0 %v527, 64
      %v1092 = vpop.permute.xlu0 %1091
      %1093 = vrot.lane.b32.xlu0 %v533, 64
      %v1094 = vpop.permute.xlu0 %1093
      %1095 = vrot.lane.b32.xlu0 %v539, 64
      %v1096 = vpop.permute.xlu0 %1095
      %1097 = vrot.lane.b32.xlu0 %v545, 64
      %v1098 = vpop.permute.xlu0 %1097
      %1099 = vrot.lane.b32.xlu0 %v551, 64
      %v1100 = vpop.permute.xlu0 %1099
      %1101 = vrot.lane.b32.xlu0 %v557, 64
      %v1102 = vpop.permute.xlu0 %1101
      %1103 = vrot.lane.b32.xlu0 %v563, 64
      %v1104 = vpop.permute.xlu0 %1103
      %1105 = vrot.lane.b32.xlu0 %v569, 64
      %v1106 = vpop.permute.xlu0 %1105
      %1107 = vrot.lane.b32.xlu0 %v575, 64
      %v1108 = vpop.permute.xlu0 %1107
      %1109 = vrot.lane.b32.xlu0 %v581, 64
      %v1110 = vpop.permute.xlu0 %1109
      %1111 = vrot.lane.b32.xlu0 %v587, 64
      %v1112 = vpop.permute.xlu0 %1111
      %1113 = vrot.lane.b32.xlu0 %v593, 64
      %v1114 = vpop.permute.xlu0 %1113
      %1115 = vrot.lane.b32.xlu0 %v599, 64
      %v1116 = vpop.permute.xlu0 %1115
      %1117 = vrot.lane.b32.xlu0 %v605, 64
      %v1118 = vpop.permute.xlu0 %1117
      %1119 = vrot.lane.b32.xlu0 %v611, 64
      %v1120 = vpop.permute.xlu0 %1119
      %1121 = vrot.lane.b32.xlu0 %v617, 64
      %v1122 = vpop.permute.xlu0 %1121
      %1123 = vrot.lane.b32.xlu0 %v623, 64
      %v1124 = vpop.permute.xlu0 %1123
      %1125 = vrot.lane.b32.xlu0 %v629, 64
      %v1126 = vpop.permute.xlu0 %1125
      %1127 = vrot.lane.b32.xlu0 %v635, 64
      %v1128 = vpop.permute.xlu0 %1127
      %1129 = vrot.lane.b32.xlu0 %v641, 64
      %v1130 = vpop.permute.xlu0 %1129
      %1131 = vrot.lane.b32.xlu0 %v647, 64
      %v1132 = vpop.permute.xlu0 %1131
      %1133 = vrot.lane.b32.xlu0 %v653, 64
      %v1134 = vpop.permute.xlu0 %1133
      %1135 = vrot.lane.b32.xlu0 %v659, 64
      %v1136 = vpop.permute.xlu0 %1135
      %1137 = vrot.lane.b32.xlu0 %v665, 64
      %v1138 = vpop.permute.xlu0 %1137
      %1139 = vrot.lane.b32.xlu0 %v671, 64
      %v1140 = vpop.permute.xlu0 %1139
      %1141 = vrot.lane.b32.xlu0 %v677, 64
      %v1142 = vpop.permute.xlu0 %1141
      %1143 = vrot.lane.b32.xlu0 %v683, 64
      %v1144 = vpop.permute.xlu0 %1143
      %1145 = vrot.lane.b32.xlu0 %v689, 64
      %v1146 = vpop.permute.xlu0 %1145
      %1147 = vrot.lane.b32.xlu0 %v695, 64
      %v1148 = vpop.permute.xlu0 %1147
      %1149 = vrot.lane.b32.xlu0 %v701, 64
      %v1150 = vpop.permute.xlu0 %1149
      %1151 = vrot.lane.b32.xlu0 %v707, 64
      %v1152 = vpop.permute.xlu0 %1151
      %1153 = vrot.lane.b32.xlu0 %v713, 64
      %v1154 = vpop.permute.xlu0 %1153
      %1155 = vrot.lane.b32.xlu0 %v719, 64
      %v1156 = vpop.permute.xlu0 %1155
      %1157 = vrot.lane.b32.xlu0 %v725, 64
      %v1158 = vpop.permute.xlu0 %1157
      %1159 = vrot.lane.b32.xlu0 %v731, 64
      %v1160 = vpop.permute.xlu0 %1159
      %1161 = vrot.lane.b32.xlu0 %v737, 64
      %v1162 = vpop.permute.xlu0 %1161
      %1163 = vrot.lane.b32.xlu0 %v743, 64
      %v1164 = vpop.permute.xlu0 %1163
      %1165 = vrot.lane.b32.xlu0 %v749, 64
      %v1166 = vpop.permute.xlu0 %1165
      %1167 = vrot.lane.b32.xlu0 %v755, 64
      %v1168 = vpop.permute.xlu0 %1167
      %1169 = vrot.lane.b32.xlu0 %v761, 64
      %v1170 = vpop.permute.xlu0 %1169
      %1171 = vrot.lane.b32.xlu0 %v767, 64
      %v1172 = vpop.permute.xlu0 %1171
      %1173 = vrot.lane.b32.xlu0 %v773, 64
      %v1174 = vpop.permute.xlu0 %1173
      %1175 = vrot.lane.b32.xlu0 %v779, 64
      %v1176 = vpop.permute.xlu0 %1175
      %1177 = vrot.lane.b32.xlu0 %v785, 64
      %v1178 = vpop.permute.xlu0 %1177
      %1179 = vrot.lane.b32.xlu0 %v791, 64
      %v1180 = vpop.permute.xlu0 %1179
      %s1229 = scalar_lea.vmem %s267, 768
      %1230 = vst.msk [vmem:[%s1229] sm:$0xff] %vm795, %v1086
      %1231 = vst.msk [vmem:[%s1229 + $0x8] sm:$0xff] %vm795, %v1088
      %1232 = vst.msk [vmem:[%s1229 + $0x10] sm:$0xff] %vm795, %v1090
      %1233 = vst.msk [vmem:[%s1229 + $0x18] sm:$0xff] %vm795, %v1092
      %1234 = vst.msk [vmem:[%s1229 + $0x20] sm:$0xff] %vm795, %v1094
      %1235 = vst.msk [vmem:[%s1229 + $0x28] sm:$0xff] %vm795, %v1096
      %1236 = vst.msk [vmem:[%s1229 + $0x30] sm:$0xff] %vm795, %v1098
      %1237 = vst.msk [vmem:[%s1229 + $0x38] sm:$0xff] %vm795, %v1100
      %1238 = vst.msk [vmem:[%s1229 + $0x40] sm:$0xff] %vm795, %v1102
      %1239 = vst.msk [vmem:[%s1229 + $0x48] sm:$0xff] %vm795, %v1104
      %1240 = vst.msk [vmem:[%s1229 + $0x50] sm:$0xff] %vm795, %v1106
      %1241 = vst.msk [vmem:[%s1229 + $0x58] sm:$0xff] %vm795, %v1108
      %1242 = vst.msk [vmem:[%s1229 + $0x60] sm:$0xff] %vm795, %v1110
      %1243 = vst.msk [vmem:[%s1229 + $0x68] sm:$0xff] %vm795, %v1112
      %1244 = vst.msk [vmem:[%s1229 + $0x70] sm:$0xff] %vm795, %v1114
      %1245 = vst.msk [vmem:[%s1229 + $0x78] sm:$0xff] %vm795, %v1116
      %1246 = vst.msk [vmem:[%s1229 + $0x80] sm:$0xff] %vm795, %v1118
      %1247 = vst.msk [vmem:[%s1229 + $0x88] sm:$0xff] %vm795, %v1120
      %1248 = vst.msk [vmem:[%s1229 + $0x90] sm:$0xff] %vm795, %v1122
      %1249 = vst.msk [vmem:[%s1229 + $0x98] sm:$0xff] %vm795, %v1124
      %1250 = vst.msk [vmem:[%s1229 + $0xa0] sm:$0xff] %vm795, %v1126
      %1251 = vst.msk [vmem:[%s1229 + $0xa8] sm:$0xff] %vm795, %v1128
      %1252 = vst.msk [vmem:[%s1229 + $0xb0] sm:$0xff] %vm795, %v1130
      %1253 = vst.msk [vmem:[%s1229 + $0xb8] sm:$0xff] %vm795, %v1132
      %1254 = vst.msk [vmem:[%s1229 + $0xc0] sm:$0xff] %vm795, %v1134
      %1255 = vst.msk [vmem:[%s1229 + $0xc8] sm:$0xff] %vm795, %v1136
      %1256 = vst.msk [vmem:[%s1229 + $0xd0] sm:$0xff] %vm795, %v1138
      %1257 = vst.msk [vmem:[%s1229 + $0xd8] sm:$0xff] %vm795, %v1140
      %1258 = vst.msk [vmem:[%s1229 + $0xe0] sm:$0xff] %vm795, %v1142
      %1259 = vst.msk [vmem:[%s1229 + $0xe8] sm:$0xff] %vm795, %v1144
      %1260 = vst.msk [vmem:[%s1229 + $0xf0] sm:$0xff] %vm795, %v1146
      %1261 = vst.msk [vmem:[%s1229 + $0xf8] sm:$0xff] %vm795, %v1148
      %1262 = vst.msk [vmem:[%s1229 + $0x100] sm:$0xff] %vm795, %v1150
      %1263 = vst.msk [vmem:[%s1229 + $0x108] sm:$0xff] %vm795, %v1152
      %1264 = vst.msk [vmem:[%s1229 + $0x110] sm:$0xff] %vm795, %v1154
      %1265 = vst.msk [vmem:[%s1229 + $0x118] sm:$0xff] %vm795, %v1156
      %1266 = vst.msk [vmem:[%s1229 + $0x120] sm:$0xff] %vm795, %v1158
      %1267 = vst.msk [vmem:[%s1229 + $0x128] sm:$0xff] %vm795, %v1160
      %1268 = vst.msk [vmem:[%s1229 + $0x130] sm:$0xff] %vm795, %v1162
      %1269 = vst.msk [vmem:[%s1229 + $0x138] sm:$0xff] %vm795, %v1164
      %1270 = vst.msk [vmem:[%s1229 + $0x140] sm:$0xff] %vm795, %v1166
      %1271 = vst.msk [vmem:[%s1229 + $0x148] sm:$0xff] %vm795, %v1168
      %1272 = vst.msk [vmem:[%s1229 + $0x150] sm:$0xff] %vm795, %v1170
      %1273 = vst.msk [vmem:[%s1229 + $0x158] sm:$0xff] %vm795, %v1172
      %1274 = vst.msk [vmem:[%s1229 + $0x160] sm:$0xff] %vm795, %v1174
      %1275 = vst.msk [vmem:[%s1229 + $0x168] sm:$0xff] %vm795, %v1176
      %1276 = vst.msk [vmem:[%s1229 + $0x170] sm:$0xff] %vm795, %v1178
      %1277 = vst.msk [vmem:[%s1229 + $0x178] sm:$0xff] %vm795, %v1180
      %1278 = vrot.lane.b32.xlu0 %v509, 32
      %v1279 = vpop.permute.xlu0 %1278
      %1280 = vrot.lane.b32.xlu0 %v515, 32
      %v1281 = vpop.permute.xlu0 %1280
      %1282 = vrot.lane.b32.xlu0 %v521, 32
      %v1283 = vpop.permute.xlu0 %1282
      %1284 = vrot.lane.b32.xlu0 %v527, 32
      %v1285 = vpop.permute.xlu0 %1284
      %1286 = vrot.lane.b32.xlu0 %v533, 32
      %v1287 = vpop.permute.xlu0 %1286
      %1288 = vrot.lane.b32.xlu0 %v539, 32
      %v1289 = vpop.permute.xlu0 %1288
      %1290 = vrot.lane.b32.xlu0 %v545, 32
      %v1291 = vpop.permute.xlu0 %1290
      %1292 = vrot.lane.b32.xlu0 %v551, 32
      %v1293 = vpop.permute.xlu0 %1292
      %1294 = vrot.lane.b32.xlu0 %v557, 32
      %v1295 = vpop.permute.xlu0 %1294
      %1296 = vrot.lane.b32.xlu0 %v563, 32
      %v1297 = vpop.permute.xlu0 %1296
      %1298 = vrot.lane.b32.xlu0 %v569, 32
      %v1299 = vpop.permute.xlu0 %1298
      %1300 = vrot.lane.b32.xlu0 %v575, 32
      %v1301 = vpop.permute.xlu0 %1300
      %1302 = vrot.lane.b32.xlu0 %v581, 32
      %v1303 = vpop.permute.xlu0 %1302
      %1304 = vrot.lane.b32.xlu0 %v587, 32
      %v1305 = vpop.permute.xlu0 %1304
      %1306 = vrot.lane.b32.xlu0 %v593, 32
      %v1307 = vpop.permute.xlu0 %1306
      %1308 = vrot.lane.b32.xlu0 %v599, 32
      %v1309 = vpop.permute.xlu0 %1308
      %1310 = vrot.lane.b32.xlu0 %v605, 32
      %v1311 = vpop.permute.xlu0 %1310
      %1312 = vrot.lane.b32.xlu0 %v611, 32
      %v1313 = vpop.permute.xlu0 %1312
      %1314 = vrot.lane.b32.xlu0 %v617, 32
      %v1315 = vpop.permute.xlu0 %1314
      %1316 = vrot.lane.b32.xlu0 %v623, 32
      %v1317 = vpop.permute.xlu0 %1316
      %1318 = vrot.lane.b32.xlu0 %v629, 32
      %v1319 = vpop.permute.xlu0 %1318
      %1320 = vrot.lane.b32.xlu0 %v635, 32
      %v1321 = vpop.permute.xlu0 %1320
      %1322 = vrot.lane.b32.xlu0 %v641, 32
      %v1323 = vpop.permute.xlu0 %1322
      %1324 = vrot.lane.b32.xlu0 %v647, 32
      %v1325 = vpop.permute.xlu0 %1324
      %1326 = vrot.lane.b32.xlu0 %v653, 32
      %v1327 = vpop.permute.xlu0 %1326
      %1328 = vrot.lane.b32.xlu0 %v659, 32
      %v1329 = vpop.permute.xlu0 %1328
      %1330 = vrot.lane.b32.xlu0 %v665, 32
      %v1331 = vpop.permute.xlu0 %1330
      %1332 = vrot.lane.b32.xlu0 %v671, 32
      %v1333 = vpop.permute.xlu0 %1332
      %1334 = vrot.lane.b32.xlu0 %v677, 32
      %v1335 = vpop.permute.xlu0 %1334
      %1336 = vrot.lane.b32.xlu0 %v683, 32
      %v1337 = vpop.permute.xlu0 %1336
      %1338 = vrot.lane.b32.xlu0 %v689, 32
      %v1339 = vpop.permute.xlu0 %1338
      %1340 = vrot.lane.b32.xlu0 %v695, 32
      %v1341 = vpop.permute.xlu0 %1340
      %1342 = vrot.lane.b32.xlu0 %v701, 32
      %v1343 = vpop.permute.xlu0 %1342
      %1344 = vrot.lane.b32.xlu0 %v707, 32
      %v1345 = vpop.permute.xlu0 %1344
      %1346 = vrot.lane.b32.xlu0 %v713, 32
      %v1347 = vpop.permute.xlu0 %1346
      %1348 = vrot.lane.b32.xlu0 %v719, 32
      %v1349 = vpop.permute.xlu0 %1348
      %1350 = vrot.lane.b32.xlu0 %v725, 32
      %v1351 = vpop.permute.xlu0 %1350
      %1352 = vrot.lane.b32.xlu0 %v731, 32
      %v1353 = vpop.permute.xlu0 %1352
      %1354 = vrot.lane.b32.xlu0 %v737, 32
      %v1355 = vpop.permute.xlu0 %1354
      %1356 = vrot.lane.b32.xlu0 %v743, 32
      %v1357 = vpop.permute.xlu0 %1356
      %1358 = vrot.lane.b32.xlu0 %v749, 32
      %v1359 = vpop.permute.xlu0 %1358
      %1360 = vrot.lane.b32.xlu0 %v755, 32
      %v1361 = vpop.permute.xlu0 %1360
      %1362 = vrot.lane.b32.xlu0 %v761, 32
      %v1363 = vpop.permute.xlu0 %1362
      %1364 = vrot.lane.b32.xlu0 %v767, 32
      %v1365 = vpop.permute.xlu0 %1364
      %1366 = vrot.lane.b32.xlu0 %v773, 32
      %v1367 = vpop.permute.xlu0 %1366
      %1368 = vrot.lane.b32.xlu0 %v779, 32
      %v1369 = vpop.permute.xlu0 %1368
      %1370 = vrot.lane.b32.xlu0 %v785, 32
      %v1371 = vpop.permute.xlu0 %1370
      %1372 = vrot.lane.b32.xlu0 %v791, 32
      %v1373 = vpop.permute.xlu0 %1372
      %s1422 = scalar_lea.vmem %s267, 1152
      %1423 = vst.msk [vmem:[%s1422] sm:$0xff] %vm795, %v1279
      %1424 = vst.msk [vmem:[%s1422 + $0x8] sm:$0xff] %vm795, %v1281
      %1425 = vst.msk [vmem:[%s1422 + $0x10] sm:$0xff] %vm795, %v1283
      %1426 = vst.msk [vmem:[%s1422 + $0x18] sm:$0xff] %vm795, %v1285
      %1427 = vst.msk [vmem:[%s1422 + $0x20] sm:$0xff] %vm795, %v1287
      %1428 = vst.msk [vmem:[%s1422 + $0x28] sm:$0xff] %vm795, %v1289
      %1429 = vst.msk [vmem:[%s1422 + $0x30] sm:$0xff] %vm795, %v1291
      %1430 = vst.msk [vmem:[%s1422 + $0x38] sm:$0xff] %vm795, %v1293
      %1431 = vst.msk [vmem:[%s1422 + $0x40] sm:$0xff] %vm795, %v1295
      %1432 = vst.msk [vmem:[%s1422 + $0x48] sm:$0xff] %vm795, %v1297
      %1433 = vst.msk [vmem:[%s1422 + $0x50] sm:$0xff] %vm795, %v1299
      %1434 = vst.msk [vmem:[%s1422 + $0x58] sm:$0xff] %vm795, %v1301
      %1435 = vst.msk [vmem:[%s1422 + $0x60] sm:$0xff] %vm795, %v1303
      %1436 = vst.msk [vmem:[%s1422 + $0x68] sm:$0xff] %vm795, %v1305
      %1437 = vst.msk [vmem:[%s1422 + $0x70] sm:$0xff] %vm795, %v1307
      %1438 = vst.msk [vmem:[%s1422 + $0x78] sm:$0xff] %vm795, %v1309
      %1439 = vst.msk [vmem:[%s1422 + $0x80] sm:$0xff] %vm795, %v1311
      %1440 = vst.msk [vmem:[%s1422 + $0x88] sm:$0xff] %vm795, %v1313
      %1441 = vst.msk [vmem:[%s1422 + $0x90] sm:$0xff] %vm795, %v1315
      %1442 = vst.msk [vmem:[%s1422 + $0x98] sm:$0xff] %vm795, %v1317
      %1443 = vst.msk [vmem:[%s1422 + $0xa0] sm:$0xff] %vm795, %v1319
      %1444 = vst.msk [vmem:[%s1422 + $0xa8] sm:$0xff] %vm795, %v1321
      %1445 = vst.msk [vmem:[%s1422 + $0xb0] sm:$0xff] %vm795, %v1323
      %1446 = vst.msk [vmem:[%s1422 + $0xb8] sm:$0xff] %vm795, %v1325
      %1447 = vst.msk [vmem:[%s1422 + $0xc0] sm:$0xff] %vm795, %v1327
      %1448 = vst.msk [vmem:[%s1422 + $0xc8] sm:$0xff] %vm795, %v1329
      %1449 = vst.msk [vmem:[%s1422 + $0xd0] sm:$0xff] %vm795, %v1331
      %1450 = vst.msk [vmem:[%s1422 + $0xd8] sm:$0xff] %vm795, %v1333
      %1451 = vst.msk [vmem:[%s1422 + $0xe0] sm:$0xff] %vm795, %v1335
      %1452 = vst.msk [vmem:[%s1422 + $0xe8] sm:$0xff] %vm795, %v1337
      %1453 = vst.msk [vmem:[%s1422 + $0xf0] sm:$0xff] %vm795, %v1339
      %1454 = vst.msk [vmem:[%s1422 + $0xf8] sm:$0xff] %vm795, %v1341
      %1455 = vst.msk [vmem:[%s1422 + $0x100] sm:$0xff] %vm795, %v1343
      %1456 = vst.msk [vmem:[%s1422 + $0x108] sm:$0xff] %vm795, %v1345
      %1457 = vst.msk [vmem:[%s1422 + $0x110] sm:$0xff] %vm795, %v1347
      %1458 = vst.msk [vmem:[%s1422 + $0x118] sm:$0xff] %vm795, %v1349
      %1459 = vst.msk [vmem:[%s1422 + $0x120] sm:$0xff] %vm795, %v1351
      %1460 = vst.msk [vmem:[%s1422 + $0x128] sm:$0xff] %vm795, %v1353
      %1461 = vst.msk [vmem:[%s1422 + $0x130] sm:$0xff] %vm795, %v1355
      %1462 = vst.msk [vmem:[%s1422 + $0x138] sm:$0xff] %vm795, %v1357
      %1463 = vst.msk [vmem:[%s1422 + $0x140] sm:$0xff] %vm795, %v1359
      %1464 = vst.msk [vmem:[%s1422 + $0x148] sm:$0xff] %vm795, %v1361
      %1465 = vst.msk [vmem:[%s1422 + $0x150] sm:$0xff] %vm795, %v1363
      %1466 = vst.msk [vmem:[%s1422 + $0x158] sm:$0xff] %vm795, %v1365
      %1467 = vst.msk [vmem:[%s1422 + $0x160] sm:$0xff] %vm795, %v1367
      %1468 = vst.msk [vmem:[%s1422 + $0x168] sm:$0xff] %vm795, %v1369
      %1469 = vst.msk [vmem:[%s1422 + $0x170] sm:$0xff] %vm795, %v1371
      %1470 = vst.msk [vmem:[%s1422 + $0x178] sm:$0xff] %vm795, %v1373
      %s1471 = scalar_lea.vmem %s267, 1536
      %1472 = vst.msk [vmem:[%s1471] sm:$0xff] %vm795, %v511
      %1473 = vst.msk [vmem:[%s1471 + $0x8] sm:$0xff] %vm795, %v517
      %1474 = vst.msk [vmem:[%s1471 + $0x10] sm:$0xff] %vm795, %v523
      %1475 = vst.msk [vmem:[%s1471 + $0x18] sm:$0xff] %vm795, %v529
      %1476 = vst.msk [vmem:[%s1471 + $0x20] sm:$0xff] %vm795, %v535
      %1477 = vst.msk [vmem:[%s1471 + $0x28] sm:$0xff] %vm795, %v541
      %1478 = vst.msk [vmem:[%s1471 + $0x30] sm:$0xff] %vm795, %v547
      %1479 = vst.msk [vmem:[%s1471 + $0x38] sm:$0xff] %vm795, %v553
      %1480 = vst.msk [vmem:[%s1471 + $0x40] sm:$0xff] %vm795, %v559
      %1481 = vst.msk [vmem:[%s1471 + $0x48] sm:$0xff] %vm795, %v565
      %1482 = vst.msk [vmem:[%s1471 + $0x50] sm:$0xff] %vm795, %v571
      %1483 = vst.msk [vmem:[%s1471 + $0x58] sm:$0xff] %vm795, %v577
      %1484 = vst.msk [vmem:[%s1471 + $0x60] sm:$0xff] %vm795, %v583
      %1485 = vst.msk [vmem:[%s1471 + $0x68] sm:$0xff] %vm795, %v589
      %1486 = vst.msk [vmem:[%s1471 + $0x70] sm:$0xff] %vm795, %v595
      %1487 = vst.msk [vmem:[%s1471 + $0x78] sm:$0xff] %vm795, %v601
      %1488 = vst.msk [vmem:[%s1471 + $0x80] sm:$0xff] %vm795, %v607
      %1489 = vst.msk [vmem:[%s1471 + $0x88] sm:$0xff] %vm795, %v613
      %1490 = vst.msk [vmem:[%s1471 + $0x90] sm:$0xff] %vm795, %v619
      %1491 = vst.msk [vmem:[%s1471 + $0x98] sm:$0xff] %vm795, %v625
      %1492 = vst.msk [vmem:[%s1471 + $0xa0] sm:$0xff] %vm795, %v631
      %1493 = vst.msk [vmem:[%s1471 + $0xa8] sm:$0xff] %vm795, %v637
      %1494 = vst.msk [vmem:[%s1471 + $0xb0] sm:$0xff] %vm795, %v643
      %1495 = vst.msk [vmem:[%s1471 + $0xb8] sm:$0xff] %vm795, %v649
      %1496 = vst.msk [vmem:[%s1471 + $0xc0] sm:$0xff] %vm795, %v655
      %1497 = vst.msk [vmem:[%s1471 + $0xc8] sm:$0xff] %vm795, %v661
      %1498 = vst.msk [vmem:[%s1471 + $0xd0] sm:$0xff] %vm795, %v667
      %1499 = vst.msk [vmem:[%s1471 + $0xd8] sm:$0xff] %vm795, %v673
      %1500 = vst.msk [vmem:[%s1471 + $0xe0] sm:$0xff] %vm795, %v679
      %1501 = vst.msk [vmem:[%s1471 + $0xe8] sm:$0xff] %vm795, %v685
      %1502 = vst.msk [vmem:[%s1471 + $0xf0] sm:$0xff] %vm795, %v691
      %1503 = vst.msk [vmem:[%s1471 + $0xf8] sm:$0xff] %vm795, %v697
      %1504 = vst.msk [vmem:[%s1471 + $0x100] sm:$0xff] %vm795, %v703
      %1505 = vst.msk [vmem:[%s1471 + $0x108] sm:$0xff] %vm795, %v709
      %1506 = vst.msk [vmem:[%s1471 + $0x110] sm:$0xff] %vm795, %v715
      %1507 = vst.msk [vmem:[%s1471 + $0x118] sm:$0xff] %vm795, %v721
      %1508 = vst.msk [vmem:[%s1471 + $0x120] sm:$0xff] %vm795, %v727
      %1509 = vst.msk [vmem:[%s1471 + $0x128] sm:$0xff] %vm795, %v733
      %1510 = vst.msk [vmem:[%s1471 + $0x130] sm:$0xff] %vm795, %v739
      %1511 = vst.msk [vmem:[%s1471 + $0x138] sm:$0xff] %vm795, %v745
      %1512 = vst.msk [vmem:[%s1471 + $0x140] sm:$0xff] %vm795, %v751
      %1513 = vst.msk [vmem:[%s1471 + $0x148] sm:$0xff] %vm795, %v757
      %1514 = vst.msk [vmem:[%s1471 + $0x150] sm:$0xff] %vm795, %v763
      %1515 = vst.msk [vmem:[%s1471 + $0x158] sm:$0xff] %vm795, %v769
      %1516 = vst.msk [vmem:[%s1471 + $0x160] sm:$0xff] %vm795, %v775
      %1517 = vst.msk [vmem:[%s1471 + $0x168] sm:$0xff] %vm795, %v781
      %1518 = vst.msk [vmem:[%s1471 + $0x170] sm:$0xff] %vm795, %v787
      %1519 = vst.msk [vmem:[%s1471 + $0x178] sm:$0xff] %vm795, %v793
      %1568 = vrot.lane.b32.xlu0 %v511, 96
      %v1569 = vpop.permute.xlu0 %1568
      %1570 = vrot.lane.b32.xlu0 %v517, 96
      %v1571 = vpop.permute.xlu0 %1570
      %1572 = vrot.lane.b32.xlu0 %v523, 96
      %v1573 = vpop.permute.xlu0 %1572
      %1574 = vrot.lane.b32.xlu0 %v529, 96
      %v1575 = vpop.permute.xlu0 %1574
      %1576 = vrot.lane.b32.xlu0 %v535, 96
      %v1577 = vpop.permute.xlu0 %1576
      %1578 = vrot.lane.b32.xlu0 %v541, 96
      %v1579 = vpop.permute.xlu0 %1578
      %1580 = vrot.lane.b32.xlu0 %v547, 96
      %v1581 = vpop.permute.xlu0 %1580
      %1582 = vrot.lane.b32.xlu0 %v553, 96
      %v1583 = vpop.permute.xlu0 %1582
      %1584 = vrot.lane.b32.xlu0 %v559, 96
      %v1585 = vpop.permute.xlu0 %1584
      %1586 = vrot.lane.b32.xlu0 %v565, 96
      %v1587 = vpop.permute.xlu0 %1586
      %1588 = vrot.lane.b32.xlu0 %v571, 96
      %v1589 = vpop.permute.xlu0 %1588
      %1590 = vrot.lane.b32.xlu0 %v577, 96
      %v1591 = vpop.permute.xlu0 %1590
      %1592 = vrot.lane.b32.xlu0 %v583, 96
      %v1593 = vpop.permute.xlu0 %1592
      %1594 = vrot.lane.b32.xlu0 %v589, 96
      %v1595 = vpop.permute.xlu0 %1594
      %1596 = vrot.lane.b32.xlu0 %v595, 96
      %v1597 = vpop.permute.xlu0 %1596
      %1598 = vrot.lane.b32.xlu0 %v601, 96
      %v1599 = vpop.permute.xlu0 %1598
      %1600 = vrot.lane.b32.xlu0 %v607, 96
      %v1601 = vpop.permute.xlu0 %1600
      %1602 = vrot.lane.b32.xlu0 %v613, 96
      %v1603 = vpop.permute.xlu0 %1602
      %1604 = vrot.lane.b32.xlu0 %v619, 96
      %v1605 = vpop.permute.xlu0 %1604
      %1606 = vrot.lane.b32.xlu0 %v625, 96
      %v1607 = vpop.permute.xlu0 %1606
      %1608 = vrot.lane.b32.xlu0 %v631, 96
      %v1609 = vpop.permute.xlu0 %1608
      %1610 = vrot.lane.b32.xlu0 %v637, 96
      %v1611 = vpop.permute.xlu0 %1610
      %1612 = vrot.lane.b32.xlu0 %v643, 96
      %v1613 = vpop.permute.xlu0 %1612
      %1614 = vrot.lane.b32.xlu0 %v649, 96
      %v1615 = vpop.permute.xlu0 %1614
      %1616 = vrot.lane.b32.xlu0 %v655, 96
      %v1617 = vpop.permute.xlu0 %1616
      %1618 = vrot.lane.b32.xlu0 %v661, 96
      %v1619 = vpop.permute.xlu0 %1618
      %1620 = vrot.lane.b32.xlu0 %v667, 96
      %v1621 = vpop.permute.xlu0 %1620
      %1622 = vrot.lane.b32.xlu0 %v673, 96
      %v1623 = vpop.permute.xlu0 %1622
      %1624 = vrot.lane.b32.xlu0 %v679, 96
      %v1625 = vpop.permute.xlu0 %1624
      %1626 = vrot.lane.b32.xlu0 %v685, 96
      %v1627 = vpop.permute.xlu0 %1626
      %1628 = vrot.lane.b32.xlu0 %v691, 96
      %v1629 = vpop.permute.xlu0 %1628
      %1630 = vrot.lane.b32.xlu0 %v697, 96
      %v1631 = vpop.permute.xlu0 %1630
      %1632 = vrot.lane.b32.xlu0 %v703, 96
      %v1633 = vpop.permute.xlu0 %1632
      %1634 = vrot.lane.b32.xlu0 %v709, 96
      %v1635 = vpop.permute.xlu0 %1634
      %1636 = vrot.lane.b32.xlu0 %v715, 96
      %v1637 = vpop.permute.xlu0 %1636
      %1638 = vrot.lane.b32.xlu0 %v721, 96
      %v1639 = vpop.permute.xlu0 %1638
      %1640 = vrot.lane.b32.xlu0 %v727, 96
      %v1641 = vpop.permute.xlu0 %1640
      %1642 = vrot.lane.b32.xlu0 %v733, 96
      %v1643 = vpop.permute.xlu0 %1642
      %1644 = vrot.lane.b32.xlu0 %v739, 96
      %v1645 = vpop.permute.xlu0 %1644
      %1646 = vrot.lane.b32.xlu0 %v745, 96
      %v1647 = vpop.permute.xlu0 %1646
      %1648 = vrot.lane.b32.xlu0 %v751, 96
      %v1649 = vpop.permute.xlu0 %1648
      %1650 = vrot.lane.b32.xlu0 %v757, 96
      %v1651 = vpop.permute.xlu0 %1650
      %1652 = vrot.lane.b32.xlu0 %v763, 96
      %v1653 = vpop.permute.xlu0 %1652
      %1654 = vrot.lane.b32.xlu0 %v769, 96
      %v1655 = vpop.permute.xlu0 %1654
      %1656 = vrot.lane.b32.xlu0 %v775, 96
      %v1657 = vpop.permute.xlu0 %1656
      %1658 = vrot.lane.b32.xlu0 %v781, 96
      %v1659 = vpop.permute.xlu0 %1658
      %1660 = vrot.lane.b32.xlu0 %v787, 96
      %v1661 = vpop.permute.xlu0 %1660
      %1662 = vrot.lane.b32.xlu0 %v793, 96
      %v1663 = vpop.permute.xlu0 %1662
      %s1712 = scalar_lea.vmem %s267, 1920
      %1713 = vst.msk [vmem:[%s1712] sm:$0xff] %vm795, %v1569
      %1714 = vst.msk [vmem:[%s1712 + $0x8] sm:$0xff] %vm795, %v1571
      %1715 = vst.msk [vmem:[%s1712 + $0x10] sm:$0xff] %vm795, %v1573
      %1716 = vst.msk [vmem:[%s1712 + $0x18] sm:$0xff] %vm795, %v1575
      %1717 = vst.msk [vmem:[%s1712 + $0x20] sm:$0xff] %vm795, %v1577
      %1718 = vst.msk [vmem:[%s1712 + $0x28] sm:$0xff] %vm795, %v1579
      %1719 = vst.msk [vmem:[%s1712 + $0x30] sm:$0xff] %vm795, %v1581
      %1720 = vst.msk [vmem:[%s1712 + $0x38] sm:$0xff] %vm795, %v1583
      %1721 = vst.msk [vmem:[%s1712 + $0x40] sm:$0xff] %vm795, %v1585
      %1722 = vst.msk [vmem:[%s1712 + $0x48] sm:$0xff] %vm795, %v1587
      %1723 = vst.msk [vmem:[%s1712 + $0x50] sm:$0xff] %vm795, %v1589
      %1724 = vst.msk [vmem:[%s1712 + $0x58] sm:$0xff] %vm795, %v1591
      %1725 = vst.msk [vmem:[%s1712 + $0x60] sm:$0xff] %vm795, %v1593
      %1726 = vst.msk [vmem:[%s1712 + $0x68] sm:$0xff] %vm795, %v1595
      %1727 = vst.msk [vmem:[%s1712 + $0x70] sm:$0xff] %vm795, %v1597
      %1728 = vst.msk [vmem:[%s1712 + $0x78] sm:$0xff] %vm795, %v1599
      %1729 = vst.msk [vmem:[%s1712 + $0x80] sm:$0xff] %vm795, %v1601
      %1730 = vst.msk [vmem:[%s1712 + $0x88] sm:$0xff] %vm795, %v1603
      %1731 = vst.msk [vmem:[%s1712 + $0x90] sm:$0xff] %vm795, %v1605
      %1732 = vst.msk [vmem:[%s1712 + $0x98] sm:$0xff] %vm795, %v1607
      %1733 = vst.msk [vmem:[%s1712 + $0xa0] sm:$0xff] %vm795, %v1609
      %1734 = vst.msk [vmem:[%s1712 + $0xa8] sm:$0xff] %vm795, %v1611
      %1735 = vst.msk [vmem:[%s1712 + $0xb0] sm:$0xff] %vm795, %v1613
      %1736 = vst.msk [vmem:[%s1712 + $0xb8] sm:$0xff] %vm795, %v1615
      %1737 = vst.msk [vmem:[%s1712 + $0xc0] sm:$0xff] %vm795, %v1617
      %1738 = vst.msk [vmem:[%s1712 + $0xc8] sm:$0xff] %vm795, %v1619
      %1739 = vst.msk [vmem:[%s1712 + $0xd0] sm:$0xff] %vm795, %v1621
      %1740 = vst.msk [vmem:[%s1712 + $0xd8] sm:$0xff] %vm795, %v1623
      %1741 = vst.msk [vmem:[%s1712 + $0xe0] sm:$0xff] %vm795, %v1625
      %1742 = vst.msk [vmem:[%s1712 + $0xe8] sm:$0xff] %vm795, %v1627
      %1743 = vst.msk [vmem:[%s1712 + $0xf0] sm:$0xff] %vm795, %v1629
      %1744 = vst.msk [vmem:[%s1712 + $0xf8] sm:$0xff] %vm795, %v1631
      %1745 = vst.msk [vmem:[%s1712 + $0x100] sm:$0xff] %vm795, %v1633
      %1746 = vst.msk [vmem:[%s1712 + $0x108] sm:$0xff] %vm795, %v1635
      %1747 = vst.msk [vmem:[%s1712 + $0x110] sm:$0xff] %vm795, %v1637
      %1748 = vst.msk [vmem:[%s1712 + $0x118] sm:$0xff] %vm795, %v1639
      %1749 = vst.msk [vmem:[%s1712 + $0x120] sm:$0xff] %vm795, %v1641
      %1750 = vst.msk [vmem:[%s1712 + $0x128] sm:$0xff] %vm795, %v1643
      %1751 = vst.msk [vmem:[%s1712 + $0x130] sm:$0xff] %vm795, %v1645
      %1752 = vst.msk [vmem:[%s1712 + $0x138] sm:$0xff] %vm795, %v1647
      %1753 = vst.msk [vmem:[%s1712 + $0x140] sm:$0xff] %vm795, %v1649
      %1754 = vst.msk [vmem:[%s1712 + $0x148] sm:$0xff] %vm795, %v1651
      %1755 = vst.msk [vmem:[%s1712 + $0x150] sm:$0xff] %vm795, %v1653
      %1756 = vst.msk [vmem:[%s1712 + $0x158] sm:$0xff] %vm795, %v1655
      %1757 = vst.msk [vmem:[%s1712 + $0x160] sm:$0xff] %vm795, %v1657
      %1758 = vst.msk [vmem:[%s1712 + $0x168] sm:$0xff] %vm795, %v1659
      %1759 = vst.msk [vmem:[%s1712 + $0x170] sm:$0xff] %vm795, %v1661
      %1760 = vst.msk [vmem:[%s1712 + $0x178] sm:$0xff] %vm795, %v1663
      %1761 = vrot.lane.b32.xlu0 %v511, 64
      %v1762 = vpop.permute.xlu0 %1761
      %1763 = vrot.lane.b32.xlu0 %v517, 64
      %v1764 = vpop.permute.xlu0 %1763
      %1765 = vrot.lane.b32.xlu0 %v523, 64
      %v1766 = vpop.permute.xlu0 %1765
      %1767 = vrot.lane.b32.xlu0 %v529, 64
      %v1768 = vpop.permute.xlu0 %1767
      %1769 = vrot.lane.b32.xlu0 %v535, 64
      %v1770 = vpop.permute.xlu0 %1769
      %1771 = vrot.lane.b32.xlu0 %v541, 64
      %v1772 = vpop.permute.xlu0 %1771
      %1773 = vrot.lane.b32.xlu0 %v547, 64
      %v1774 = vpop.permute.xlu0 %1773
      %1775 = vrot.lane.b32.xlu0 %v553, 64
      %v1776 = vpop.permute.xlu0 %1775
      %1777 = vrot.lane.b32.xlu0 %v559, 64
      %v1778 = vpop.permute.xlu0 %1777
      %1779 = vrot.lane.b32.xlu0 %v565, 64
      %v1780 = vpop.permute.xlu0 %1779
      %1781 = vrot.lane.b32.xlu0 %v571, 64
      %v1782 = vpop.permute.xlu0 %1781
      %1783 = vrot.lane.b32.xlu0 %v577, 64
      %v1784 = vpop.permute.xlu0 %1783
      %1785 = vrot.lane.b32.xlu0 %v583, 64
      %v1786 = vpop.permute.xlu0 %1785
      %1787 = vrot.lane.b32.xlu0 %v589, 64
      %v1788 = vpop.permute.xlu0 %1787
      %1789 = vrot.lane.b32.xlu0 %v595, 64
      %v1790 = vpop.permute.xlu0 %1789
      %1791 = vrot.lane.b32.xlu0 %v601, 64
      %v1792 = vpop.permute.xlu0 %1791
      %1793 = vrot.lane.b32.xlu0 %v607, 64
      %v1794 = vpop.permute.xlu0 %1793
      %1795 = vrot.lane.b32.xlu0 %v613, 64
      %v1796 = vpop.permute.xlu0 %1795
      %1797 = vrot.lane.b32.xlu0 %v619, 64
      %v1798 = vpop.permute.xlu0 %1797
      %1799 = vrot.lane.b32.xlu0 %v625, 64
      %v1800 = vpop.permute.xlu0 %1799
      %1801 = vrot.lane.b32.xlu0 %v631, 64
      %v1802 = vpop.permute.xlu0 %1801
      %1803 = vrot.lane.b32.xlu0 %v637, 64
      %v1804 = vpop.permute.xlu0 %1803
      %1805 = vrot.lane.b32.xlu0 %v643, 64
      %v1806 = vpop.permute.xlu0 %1805
      %1807 = vrot.lane.b32.xlu0 %v649, 64
      %v1808 = vpop.permute.xlu0 %1807
      %1809 = vrot.lane.b32.xlu0 %v655, 64
      %v1810 = vpop.permute.xlu0 %1809
      %1811 = vrot.lane.b32.xlu0 %v661, 64
      %v1812 = vpop.permute.xlu0 %1811
      %1813 = vrot.lane.b32.xlu0 %v667, 64
      %v1814 = vpop.permute.xlu0 %1813
      %1815 = vrot.lane.b32.xlu0 %v673, 64
      %v1816 = vpop.permute.xlu0 %1815
      %1817 = vrot.lane.b32.xlu0 %v679, 64
      %v1818 = vpop.permute.xlu0 %1817
      %1819 = vrot.lane.b32.xlu0 %v685, 64
      %v1820 = vpop.permute.xlu0 %1819
      %1821 = vrot.lane.b32.xlu0 %v691, 64
      %v1822 = vpop.permute.xlu0 %1821
      %1823 = vrot.lane.b32.xlu0 %v697, 64
      %v1824 = vpop.permute.xlu0 %1823
      %1825 = vrot.lane.b32.xlu0 %v703, 64
      %v1826 = vpop.permute.xlu0 %1825
      %1827 = vrot.lane.b32.xlu0 %v709, 64
      %v1828 = vpop.permute.xlu0 %1827
      %1829 = vrot.lane.b32.xlu0 %v715, 64
      %v1830 = vpop.permute.xlu0 %1829
      %1831 = vrot.lane.b32.xlu0 %v721, 64
      %v1832 = vpop.permute.xlu0 %1831
      %1833 = vrot.lane.b32.xlu0 %v727, 64
      %v1834 = vpop.permute.xlu0 %1833
      %1835 = vrot.lane.b32.xlu0 %v733, 64
      %v1836 = vpop.permute.xlu0 %1835
      %1837 = vrot.lane.b32.xlu0 %v739, 64
      %v1838 = vpop.permute.xlu0 %1837
      %1839 = vrot.lane.b32.xlu0 %v745, 64
      %v1840 = vpop.permute.xlu0 %1839
      %1841 = vrot.lane.b32.xlu0 %v751, 64
      %v1842 = vpop.permute.xlu0 %1841
      %1843 = vrot.lane.b32.xlu0 %v757, 64
      %v1844 = vpop.permute.xlu0 %1843
      %1845 = vrot.lane.b32.xlu0 %v763, 64
      %v1846 = vpop.permute.xlu0 %1845
      %1847 = vrot.lane.b32.xlu0 %v769, 64
      %v1848 = vpop.permute.xlu0 %1847
      %1849 = vrot.lane.b32.xlu0 %v775, 64
      %v1850 = vpop.permute.xlu0 %1849
      %1851 = vrot.lane.b32.xlu0 %v781, 64
      %v1852 = vpop.permute.xlu0 %1851
      %1853 = vrot.lane.b32.xlu0 %v787, 64
      %v1854 = vpop.permute.xlu0 %1853
      %1855 = vrot.lane.b32.xlu0 %v793, 64
      %v1856 = vpop.permute.xlu0 %1855
      %s1905 = scalar_lea.vmem %s267, 2304
      %1906 = vst.msk [vmem:[%s1905] sm:$0xff] %vm795, %v1762
      %1907 = vst.msk [vmem:[%s1905 + $0x8] sm:$0xff] %vm795, %v1764
      %1908 = vst.msk [vmem:[%s1905 + $0x10] sm:$0xff] %vm795, %v1766
      %1909 = vst.msk [vmem:[%s1905 + $0x18] sm:$0xff] %vm795, %v1768
      %1910 = vst.msk [vmem:[%s1905 + $0x20] sm:$0xff] %vm795, %v1770
      %1911 = vst.msk [vmem:[%s1905 + $0x28] sm:$0xff] %vm795, %v1772
      %1912 = vst.msk [vmem:[%s1905 + $0x30] sm:$0xff] %vm795, %v1774
      %1913 = vst.msk [vmem:[%s1905 + $0x38] sm:$0xff] %vm795, %v1776
      %1914 = vst.msk [vmem:[%s1905 + $0x40] sm:$0xff] %vm795, %v1778
      %1915 = vst.msk [vmem:[%s1905 + $0x48] sm:$0xff] %vm795, %v1780
      %1916 = vst.msk [vmem:[%s1905 + $0x50] sm:$0xff] %vm795, %v1782
      %1917 = vst.msk [vmem:[%s1905 + $0x58] sm:$0xff] %vm795, %v1784
      %1918 = vst.msk [vmem:[%s1905 + $0x60] sm:$0xff] %vm795, %v1786
      %1919 = vst.msk [vmem:[%s1905 + $0x68] sm:$0xff] %vm795, %v1788
      %1920 = vst.msk [vmem:[%s1905 + $0x70] sm:$0xff] %vm795, %v1790
      %1921 = vst.msk [vmem:[%s1905 + $0x78] sm:$0xff] %vm795, %v1792
      %1922 = vst.msk [vmem:[%s1905 + $0x80] sm:$0xff] %vm795, %v1794
      %1923 = vst.msk [vmem:[%s1905 + $0x88] sm:$0xff] %vm795, %v1796
      %1924 = vst.msk [vmem:[%s1905 + $0x90] sm:$0xff] %vm795, %v1798
      %1925 = vst.msk [vmem:[%s1905 + $0x98] sm:$0xff] %vm795, %v1800
      %1926 = vst.msk [vmem:[%s1905 + $0xa0] sm:$0xff] %vm795, %v1802
      %1927 = vst.msk [vmem:[%s1905 + $0xa8] sm:$0xff] %vm795, %v1804
      %1928 = vst.msk [vmem:[%s1905 + $0xb0] sm:$0xff] %vm795, %v1806
      %1929 = vst.msk [vmem:[%s1905 + $0xb8] sm:$0xff] %vm795, %v1808
      %1930 = vst.msk [vmem:[%s1905 + $0xc0] sm:$0xff] %vm795, %v1810
      %1931 = vst.msk [vmem:[%s1905 + $0xc8] sm:$0xff] %vm795, %v1812
      %1932 = vst.msk [vmem:[%s1905 + $0xd0] sm:$0xff] %vm795, %v1814
      %1933 = vst.msk [vmem:[%s1905 + $0xd8] sm:$0xff] %vm795, %v1816
      %1934 = vst.msk [vmem:[%s1905 + $0xe0] sm:$0xff] %vm795, %v1818
      %1935 = vst.msk [vmem:[%s1905 + $0xe8] sm:$0xff] %vm795, %v1820
      %1936 = vst.msk [vmem:[%s1905 + $0xf0] sm:$0xff] %vm795, %v1822
      %1937 = vst.msk [vmem:[%s1905 + $0xf8] sm:$0xff] %vm795, %v1824
      %1938 = vst.msk [vmem:[%s1905 + $0x100] sm:$0xff] %vm795, %v1826
      %1939 = vst.msk [vmem:[%s1905 + $0x108] sm:$0xff] %vm795, %v1828
      %1940 = vst.msk [vmem:[%s1905 + $0x110] sm:$0xff] %vm795, %v1830
      %1941 = vst.msk [vmem:[%s1905 + $0x118] sm:$0xff] %vm795, %v1832
      %1942 = vst.msk [vmem:[%s1905 + $0x120] sm:$0xff] %vm795, %v1834
      %1943 = vst.msk [vmem:[%s1905 + $0x128] sm:$0xff] %vm795, %v1836
      %1944 = vst.msk [vmem:[%s1905 + $0x130] sm:$0xff] %vm795, %v1838
      %1945 = vst.msk [vmem:[%s1905 + $0x138] sm:$0xff] %vm795, %v1840
      %1946 = vst.msk [vmem:[%s1905 + $0x140] sm:$0xff] %vm795, %v1842
      %1947 = vst.msk [vmem:[%s1905 + $0x148] sm:$0xff] %vm795, %v1844
      %1948 = vst.msk [vmem:[%s1905 + $0x150] sm:$0xff] %vm795, %v1846
      %1949 = vst.msk [vmem:[%s1905 + $0x158] sm:$0xff] %vm795, %v1848
      %1950 = vst.msk [vmem:[%s1905 + $0x160] sm:$0xff] %vm795, %v1850
      %1951 = vst.msk [vmem:[%s1905 + $0x168] sm:$0xff] %vm795, %v1852
      %1952 = vst.msk [vmem:[%s1905 + $0x170] sm:$0xff] %vm795, %v1854
      %1953 = vst.msk [vmem:[%s1905 + $0x178] sm:$0xff] %vm795, %v1856
      %1954 = vrot.lane.b32.xlu0 %v511, 32
      %v1955 = vpop.permute.xlu0 %1954
      %1956 = vrot.lane.b32.xlu0 %v517, 32
      %v1957 = vpop.permute.xlu0 %1956
      %1958 = vrot.lane.b32.xlu0 %v523, 32
      %v1959 = vpop.permute.xlu0 %1958
      %1960 = vrot.lane.b32.xlu0 %v529, 32
      %v1961 = vpop.permute.xlu0 %1960
      %1962 = vrot.lane.b32.xlu0 %v535, 32
      %v1963 = vpop.permute.xlu0 %1962
      %1964 = vrot.lane.b32.xlu0 %v541, 32
      %v1965 = vpop.permute.xlu0 %1964
      %1966 = vrot.lane.b32.xlu0 %v547, 32
      %v1967 = vpop.permute.xlu0 %1966
      %1968 = vrot.lane.b32.xlu0 %v553, 32
      %v1969 = vpop.permute.xlu0 %1968
      %1970 = vrot.lane.b32.xlu0 %v559, 32
      %v1971 = vpop.permute.xlu0 %1970
      %1972 = vrot.lane.b32.xlu0 %v565, 32
      %v1973 = vpop.permute.xlu0 %1972
      %1974 = vrot.lane.b32.xlu0 %v571, 32
      %v1975 = vpop.permute.xlu0 %1974
      %1976 = vrot.lane.b32.xlu0 %v577, 32
      %v1977 = vpop.permute.xlu0 %1976
      %1978 = vrot.lane.b32.xlu0 %v583, 32
      %v1979 = vpop.permute.xlu0 %1978
      %1980 = vrot.lane.b32.xlu0 %v589, 32
      %v1981 = vpop.permute.xlu0 %1980
      %1982 = vrot.lane.b32.xlu0 %v595, 32
      %v1983 = vpop.permute.xlu0 %1982
      %1984 = vrot.lane.b32.xlu0 %v601, 32
      %v1985 = vpop.permute.xlu0 %1984
      %1986 = vrot.lane.b32.xlu0 %v607, 32
      %v1987 = vpop.permute.xlu0 %1986
      %1988 = vrot.lane.b32.xlu0 %v613, 32
      %v1989 = vpop.permute.xlu0 %1988
      %1990 = vrot.lane.b32.xlu0 %v619, 32
      %v1991 = vpop.permute.xlu0 %1990
      %1992 = vrot.lane.b32.xlu0 %v625, 32
      %v1993 = vpop.permute.xlu0 %1992
      %1994 = vrot.lane.b32.xlu0 %v631, 32
      %v1995 = vpop.permute.xlu0 %1994
      %1996 = vrot.lane.b32.xlu0 %v637, 32
      %v1997 = vpop.permute.xlu0 %1996
      %1998 = vrot.lane.b32.xlu0 %v643, 32
      %v1999 = vpop.permute.xlu0 %1998
      %2000 = vrot.lane.b32.xlu0 %v649, 32
      %v2001 = vpop.permute.xlu0 %2000
      %2002 = vrot.lane.b32.xlu0 %v655, 32
      %v2003 = vpop.permute.xlu0 %2002
      %2004 = vrot.lane.b32.xlu0 %v661, 32
      %v2005 = vpop.permute.xlu0 %2004
      %2006 = vrot.lane.b32.xlu0 %v667, 32
      %v2007 = vpop.permute.xlu0 %2006
      %2008 = vrot.lane.b32.xlu0 %v673, 32
      %v2009 = vpop.permute.xlu0 %2008
      %2010 = vrot.lane.b32.xlu0 %v679, 32
      %v2011 = vpop.permute.xlu0 %2010
      %2012 = vrot.lane.b32.xlu0 %v685, 32
      %v2013 = vpop.permute.xlu0 %2012
      %2014 = vrot.lane.b32.xlu0 %v691, 32
      %v2015 = vpop.permute.xlu0 %2014
      %2016 = vrot.lane.b32.xlu0 %v697, 32
      %v2017 = vpop.permute.xlu0 %2016
      %2018 = vrot.lane.b32.xlu0 %v703, 32
      %v2019 = vpop.permute.xlu0 %2018
      %2020 = vrot.lane.b32.xlu0 %v709, 32
      %v2021 = vpop.permute.xlu0 %2020
      %2022 = vrot.lane.b32.xlu0 %v715, 32
      %v2023 = vpop.permute.xlu0 %2022
      %2024 = vrot.lane.b32.xlu0 %v721, 32
      %v2025 = vpop.permute.xlu0 %2024
      %2026 = vrot.lane.b32.xlu0 %v727, 32
      %v2027 = vpop.permute.xlu0 %2026
      %2028 = vrot.lane.b32.xlu0 %v733, 32
      %v2029 = vpop.permute.xlu0 %2028
      %2030 = vrot.lane.b32.xlu0 %v739, 32
      %v2031 = vpop.permute.xlu0 %2030
      %2032 = vrot.lane.b32.xlu0 %v745, 32
      %v2033 = vpop.permute.xlu0 %2032
      %2034 = vrot.lane.b32.xlu0 %v751, 32
      %v2035 = vpop.permute.xlu0 %2034
      %2036 = vrot.lane.b32.xlu0 %v757, 32
      %v2037 = vpop.permute.xlu0 %2036
      %2038 = vrot.lane.b32.xlu0 %v763, 32
      %v2039 = vpop.permute.xlu0 %2038
      %2040 = vrot.lane.b32.xlu0 %v769, 32
      %v2041 = vpop.permute.xlu0 %2040
      %2042 = vrot.lane.b32.xlu0 %v775, 32
      %v2043 = vpop.permute.xlu0 %2042
      %2044 = vrot.lane.b32.xlu0 %v781, 32
      %v2045 = vpop.permute.xlu0 %2044
      %2046 = vrot.lane.b32.xlu0 %v787, 32
      %v2047 = vpop.permute.xlu0 %2046
      %2048 = vrot.lane.b32.xlu0 %v793, 32
      %v2049 = vpop.permute.xlu0 %2048
      %s2098 = scalar_lea.vmem %s267, 2688
      %2099 = vst.msk [vmem:[%s2098] sm:$0xff] %vm795, %v1955
      %2100 = vst.msk [vmem:[%s2098 + $0x8] sm:$0xff] %vm795, %v1957
      %2101 = vst.msk [vmem:[%s2098 + $0x10] sm:$0xff] %vm795, %v1959
      %2102 = vst.msk [vmem:[%s2098 + $0x18] sm:$0xff] %vm795, %v1961
      %2103 = vst.msk [vmem:[%s2098 + $0x20] sm:$0xff] %vm795, %v1963
      %2104 = vst.msk [vmem:[%s2098 + $0x28] sm:$0xff] %vm795, %v1965
      %2105 = vst.msk [vmem:[%s2098 + $0x30] sm:$0xff] %vm795, %v1967
      %2106 = vst.msk [vmem:[%s2098 + $0x38] sm:$0xff] %vm795, %v1969
      %2107 = vst.msk [vmem:[%s2098 + $0x40] sm:$0xff] %vm795, %v1971
      %2108 = vst.msk [vmem:[%s2098 + $0x48] sm:$0xff] %vm795, %v1973
      %2109 = vst.msk [vmem:[%s2098 + $0x50] sm:$0xff] %vm795, %v1975
      %2110 = vst.msk [vmem:[%s2098 + $0x58] sm:$0xff] %vm795, %v1977
      %2111 = vst.msk [vmem:[%s2098 + $0x60] sm:$0xff] %vm795, %v1979
      %2112 = vst.msk [vmem:[%s2098 + $0x68] sm:$0xff] %vm795, %v1981
      %2113 = vst.msk [vmem:[%s2098 + $0x70] sm:$0xff] %vm795, %v1983
      %2114 = vst.msk [vmem:[%s2098 + $0x78] sm:$0xff] %vm795, %v1985
      %2115 = vst.msk [vmem:[%s2098 + $0x80] sm:$0xff] %vm795, %v1987
      %2116 = vst.msk [vmem:[%s2098 + $0x88] sm:$0xff] %vm795, %v1989
      %2117 = vst.msk [vmem:[%s2098 + $0x90] sm:$0xff] %vm795, %v1991
      %2118 = vst.msk [vmem:[%s2098 + $0x98] sm:$0xff] %vm795, %v1993
      %2119 = vst.msk [vmem:[%s2098 + $0xa0] sm:$0xff] %vm795, %v1995
      %2120 = vst.msk [vmem:[%s2098 + $0xa8] sm:$0xff] %vm795, %v1997
      %2121 = vst.msk [vmem:[%s2098 + $0xb0] sm:$0xff] %vm795, %v1999
      %2122 = vst.msk [vmem:[%s2098 + $0xb8] sm:$0xff] %vm795, %v2001
      %2123 = vst.msk [vmem:[%s2098 + $0xc0] sm:$0xff] %vm795, %v2003
      %2124 = vst.msk [vmem:[%s2098 + $0xc8] sm:$0xff] %vm795, %v2005
      %2125 = vst.msk [vmem:[%s2098 + $0xd0] sm:$0xff] %vm795, %v2007
      %2126 = vst.msk [vmem:[%s2098 + $0xd8] sm:$0xff] %vm795, %v2009
      %2127 = vst.msk [vmem:[%s2098 + $0xe0] sm:$0xff] %vm795, %v2011
      %2128 = vst.msk [vmem:[%s2098 + $0xe8] sm:$0xff] %vm795, %v2013
      %2129 = vst.msk [vmem:[%s2098 + $0xf0] sm:$0xff] %vm795, %v2015
      %2130 = vst.msk [vmem:[%s2098 + $0xf8] sm:$0xff] %vm795, %v2017
      %2131 = vst.msk [vmem:[%s2098 + $0x100] sm:$0xff] %vm795, %v2019
      %2132 = vst.msk [vmem:[%s2098 + $0x108] sm:$0xff] %vm795, %v2021
      %2133 = vst.msk [vmem:[%s2098 + $0x110] sm:$0xff] %vm795, %v2023
      %2134 = vst.msk [vmem:[%s2098 + $0x118] sm:$0xff] %vm795, %v2025
      %2135 = vst.msk [vmem:[%s2098 + $0x120] sm:$0xff] %vm795, %v2027
      %2136 = vst.msk [vmem:[%s2098 + $0x128] sm:$0xff] %vm795, %v2029
      %2137 = vst.msk [vmem:[%s2098 + $0x130] sm:$0xff] %vm795, %v2031
      %2138 = vst.msk [vmem:[%s2098 + $0x138] sm:$0xff] %vm795, %v2033
      %2139 = vst.msk [vmem:[%s2098 + $0x140] sm:$0xff] %vm795, %v2035
      %2140 = vst.msk [vmem:[%s2098 + $0x148] sm:$0xff] %vm795, %v2037
      %2141 = vst.msk [vmem:[%s2098 + $0x150] sm:$0xff] %vm795, %v2039
      %2142 = vst.msk [vmem:[%s2098 + $0x158] sm:$0xff] %vm795, %v2041
      %2143 = vst.msk [vmem:[%s2098 + $0x160] sm:$0xff] %vm795, %v2043
      %2144 = vst.msk [vmem:[%s2098 + $0x168] sm:$0xff] %vm795, %v2045
      %2145 = vst.msk [vmem:[%s2098 + $0x170] sm:$0xff] %vm795, %v2047
      %2146 = vst.msk [vmem:[%s2098 + $0x178] sm:$0xff] %vm795, %v2049
      %s2147 = smul.u32 8, %s21
      %s2148 = smul.u32 48, %s20
      %p2149 = scmp.lt.s32.totalorder %s19, 1
      %s2150 = scalar_select %p2149, %s19, 1
      %p2151 = scmp.lt.s32.totalorder %s2147, 15
      %s2152 = scalar_select %p2151, %s2147, 15
      %p2153 = scmp.lt.s32.totalorder %s2148, 47
      %s2154 = scalar_select %p2153, %s2148, 47
      %s2155 = smul.addr %s2152, 48
      %s2156 = sadd.s32 %s2154, %s2155
      %s2157 = smul.addr %s2150, 768
      %s2158 = sadd.s32 %s2156, %s2157
      %s2159 = smul.addr %s2158, 8
      %s2160 = scalar_lea.vmem %s3, %s2159
      // Predicated region
      $region33: #{kdgqa_forward.3} parent=31 // pred_check
        %p2161 = pneg %p135
      $region34: #{kdgqa_forward.3} parent=31 // pred_check_branch
        %2163 = sbr.rel (%p2161) target = $region36
      $region35: #{kdgqa_forward.3} parent=31 // pred_region
        %s2164 = smul.u32 8, %s21
        %s2165 = smul.u32 48, %s20
      $region36: #{kdgqa_forward.3} parent=31 // pred_fallthru
        _
    $region32: #{kdgqa_forward.3} parent=5 // pred_fallthru
      _
    %p2166 = scmp.le.s32.totalorder 2, %s9
    // Predicated region
    $region37: #{kdgqa_forward.3} parent=5 // pred_check
      %p2167 = pneg %p2166
    $region38: #{kdgqa_forward.3} parent=5 // pred_check_branch
      %2169 = sbr.rel (%p2167) target = $region40
    $region39: #{kdgqa_forward.3} parent=5 // pred_region
      %s2170 = ssub.s32 %s9, 2
      // Predicated region
      $region41: #{kdgqa_forward.3} parent=39 // pred_check
        %p2171 = pneg %p141
      $region42: #{kdgqa_forward.3} parent=39 // pred_check_branch
        %2173 = sbr.rel (%p2171) target = $region44
      $region43: #{kdgqa_forward.3} parent=39 // pred_region
        %s2174 = smul.u32 8, %s24
        %s2175 = smul.u32 48, %s23
        %p2176 = scmp.lt.s32.totalorder %s22, 1
        %s2177 = scalar_select %p2176, %s22, 1
        %p2178 = scmp.lt.s32.totalorder %s2174, 15
        %s2179 = scalar_select %p2178, %s2174, 15
        %p2180 = scmp.lt.s32.totalorder %s2175, 47
        %s2181 = scalar_select %p2180, %s2175, 47
        %s2182 = smul.addr %s2179, 48
        %s2183 = sadd.s32 %s2181, %s2182
        %s2184 = smul.addr %s2177, 768
        %s2185 = sadd.s32 %s2183, %s2184
        %s2186 = smul.addr %s2185, 8
        %s2187 = scalar_lea.vmem %s3, %s2186
      $region44: #{kdgqa_forward.3} parent=39 // pred_fallthru
        _
    $region40: #{kdgqa_forward.3} parent=5 // pred_fallthru
      _
  $region6: #{kdgqa_forward.3} parent=0 // loop_footer
    %s13 = sadd.s32 1, %s9
  $region7: #{kdgqa_forward.3} parent=0 // loop_footer_branch
    %8 = sbr.rel target = $region3
  $region8: #{kdgqa_forward.3} parent=0 // loop_exit
    _

// kernel: kdgqa_forward.5
$region0: #{kdgqa_forward.5}
  #allocation0 [shape = 'u32[]', space=smem, size = 0x4, offset = 0x4, fixed_abs, tag = 'smem constant byte address 0x4 - core index']
  #allocation1 [shape = 'u32[144,128]{1,0:T(1,128)}', space=vmem, size = 0x12000, scoped, tag = 'internal scratch']
  #allocation2 [shape = 'f32[384,256]{1,0:T(8,128)}', space=vmem, size = 0x60000, scoped, tag = 'scratch operand']
  %s0 = inlined_call_operand.vmem [shape: f32[768,256], index: 0, kind: input, shape index: {}]
  %s1 = inlined_call_operand.vmem [shape: f32[256,256], index: 1, kind: input, shape index: {}]
  %s2 = inlined_call_operand.vmem [shape: f32[1,256], index: 2, kind: input, shape index: {}]
  %s3 = inlined_call_operand.hbm [shape: f32[768,256], index: 3, kind: output, shape index: {}]
  %s4 = sld [smem:[#allocation0]]
  $region53: #{kdgqa_forward.5} parent=0
    _
  %s6 = ssub.s32 1, %s4
  %s7 = scalar_select 0, %s6, %s4
  $region1: #{kdgqa_forward.5} parent=0
    #allocation3 [shape = 'u8[786432]{0}', space=vmem, size = 0xc0000, scoped, tag = 'output window, operand 0']
    #allocation4 [shape = 's32[2]{0}', space=sflag, size = 0x8, scoped, tag = 'scoped memory for kdgqa_forward.5']
    %8 = vsyncpa [#allocation4], 0
    %s9 = scalar_lea.sflag [#allocation4], 1
    %10 = vsyncpa %s9, 0
    loop: start=0, step=1, limit=4
    $region2: #{kdgqa_forward.5} parent=1 // loop_pre_header
      _
    $region3: #{kdgqa_forward.5} parent=1 // loop_header
      %s12 = sphi 0, %s16
      %p13 = scmp.ge.s32.totalorder %s12, 4
      %s19 = sphi 0, %s38
      %s20 = sphi 0, %s34
      %s21 = sphi 0, %s30
      %s22 = sphi 0, %s19
      %s23 = sphi 0, %s20
      %s24 = sphi 0, %s21
      %s25 = sphi 0, %s22
      %s26 = sphi 0, %s23
      %s27 = sphi 0, %s24
      %s43 = sphi 0, %s45
      %s46 = sphi 0, %s43
      %s47 = sphi 0, %s46
      %s63 = sphi 0, %s47
      %s71 = sphi 0, %s73
      %s74 = sphi 0, %s71
      %s75 = sphi 0, %s74
      %s91 = sphi 0, %s75
      %s97 = sphi 0, %s99
      %s100 = sphi 0, %s97
      %s101 = sphi 0, %s100
      %s117 = sphi 0, %s101
      %s125 = sphi 0, %s127
      %s128 = sphi 0, %s125
      %s129 = sphi 0, %s128
      %s145 = sphi 0, %s129
    $region4: #{kdgqa_forward.5} parent=1 // loop_header_branch
      %15 = sbr.rel (%p13) target = $region8
    $region5: #{kdgqa_forward.5} parent=1 // loop_body
      %s17 = ssub.s32 %s12, 1
      %s18 = ssub.s32 %s12, 2
      %s28 = sadd.s32 1, %s21
      %p29 = scmp.ge.s32.totalorder %s28, 1
      %s30 = scalar_select %p29, 0, %s28
      %s31 = sadd.s32 1, %s20
      %s32 = scalar_select %p29, %s31, %s20
      %p33 = scmp.ge.s32.totalorder %s32, 1
      %s34 = scalar_select %p33, 0, %s32
      %s35 = sadd.s32 1, %s19
      %s36 = scalar_select %p33, %s35, %s19
      %p37 = scmp.ge.s32.totalorder %s36, 2
      %s38 = scalar_select %p37, 0, %s36
      %s39 = ssub.s32 %s19, %s38
      %s40 = ssub.s32 %s21, %s30
      %s41 = sor.u32 %s39, %s40
      %p42 = scmp.eq.s32.totalorder %s41, 0
      %s44 = sadd.s32 %s43, 1
      %s45 = scalar_select %p42, %s43, %s44
      %p48 = pneg %p42
      %p49 = scmp.eq.s32.totalorder %s12, 1
      %p50 = por %p48, %p49
      %p51 = scmp.ne.s32.totalorder %s43, %s46
      %p52 = scmp.eq.s32.totalorder %s12, 0
      %p53 = por %p51, %p52
      %p54 = scmp.ne.s32.totalorder %s43, %s46
      %p55 = scmp.eq.s32.totalorder %s17, 1
      %p56 = por %p54, %p55
      %p57 = scmp.ne.s32.totalorder %s46, %s47
      %p58 = scmp.eq.s32.totalorder %s17, 0
      %p59 = por %p57, %p58
      %p60 = scmp.ne.s32.totalorder %s46, %s47
      %p61 = scmp.eq.s32.totalorder %s18, 1
      %p62 = por %p60, %p61
      %p64 = scmp.ne.s32.totalorder %s47, %s63
      %p65 = scmp.eq.s32.totalorder %s18, 0
      %p66 = por %p64, %p65
      %s67 = ssub.s32 %s21, %s30
      %s68 = ssub.s32 %s20, %s34
      %s69 = sor.u32 %s67, %s68
      %p70 = scmp.eq.s32.totalorder %s69, 0
      %s72 = sadd.s32 %s71, 1
      %s73 = scalar_select %p70, %s71, %s72
      %p76 = pneg %p70
      %p77 = scmp.eq.s32.totalorder %s12, 1
      %p78 = por %p76, %p77
      %p79 = scmp.ne.s32.totalorder %s71, %s74
      %p80 = scmp.eq.s32.totalorder %s12, 0
      %p81 = por %p79, %p80
      %p82 = scmp.ne.s32.totalorder %s71, %s74
      %p83 = scmp.eq.s32.totalorder %s17, 1
      %p84 = por %p82, %p83
      %p85 = scmp.ne.s32.totalorder %s74, %s75
      %p86 = scmp.eq.s32.totalorder %s17, 0
      %p87 = por %p85, %p86
      %p88 = scmp.ne.s32.totalorder %s74, %s75
      %p89 = scmp.eq.s32.totalorder %s18, 1
      %p90 = por %p88, %p89
      %p92 = scmp.ne.s32.totalorder %s75, %s91
      %p93 = scmp.eq.s32.totalorder %s18, 0
      %p94 = por %p92, %p93
      %s95 = ssub.s32 %s20, %s34
      %p96 = scmp.eq.s32.totalorder %s95, 0
      %s98 = sadd.s32 %s97, 1
      %s99 = scalar_select %p96, %s97, %s98
      %p102 = pneg %p96
      %p103 = scmp.eq.s32.totalorder %s12, 1
      %p104 = por %p102, %p103
      %p105 = scmp.ne.s32.totalorder %s97, %s100
      %p106 = scmp.eq.s32.totalorder %s12, 0
      %p107 = por %p105, %p106
      %p108 = scmp.ne.s32.totalorder %s97, %s100
      %p109 = scmp.eq.s32.totalorder %s17, 1
      %p110 = por %p108, %p109
      %p111 = scmp.ne.s32.totalorder %s100, %s101
      %p112 = scmp.eq.s32.totalorder %s17, 0
      %p113 = por %p111, %p112
      %p114 = scmp.ne.s32.totalorder %s100, %s101
      %p115 = scmp.eq.s32.totalorder %s18, 1
      %p116 = por %p114, %p115
      %p118 = scmp.ne.s32.totalorder %s101, %s117
      %p119 = scmp.eq.s32.totalorder %s18, 0
      %p120 = por %p118, %p119
      %s121 = ssub.s32 %s19, %s38
      %s122 = ssub.s32 %s20, %s34
      %s123 = sor.u32 %s121, %s122
      %p124 = scmp.eq.s32.totalorder %s123, 0
      %s126 = sadd.s32 %s125, 1
      %s127 = scalar_select %p124, %s125, %s126
      %p130 = pneg %p124
      %p131 = scmp.eq.s32.totalorder %s12, 1
      %p132 = por %p130, %p131
      %p133 = scmp.ne.s32.totalorder %s125, %s128
      %p134 = scmp.eq.s32.totalorder %s12, 0
      %p135 = por %p133, %p134
      %p136 = scmp.ne.s32.totalorder %s125, %s128
      %p137 = scmp.eq.s32.totalorder %s17, 1
      %p138 = por %p136, %p137
      %p139 = scmp.ne.s32.totalorder %s128, %s129
      %p140 = scmp.eq.s32.totalorder %s17, 0
      %p141 = por %p139, %p140
      %p142 = scmp.ne.s32.totalorder %s128, %s129
      %p143 = scmp.eq.s32.totalorder %s18, 1
      %p144 = por %p142, %p143
      %p146 = scmp.ne.s32.totalorder %s129, %s145
      %p147 = scmp.eq.s32.totalorder %s18, 0
      %p148 = por %p146, %p147
      %p149 = scmp.le.s32.totalorder 1, %s12
      %p150 = scmp.lt.s32.totalorder %s12, 3
      %p151 = pnand %p149, %p150
      %p152 = pneg %p151
      // Predicated region
      $region9: #{kdgqa_forward.5} parent=5 // pred_check
        _
      $region10: #{kdgqa_forward.5} parent=5 // pred_check_branch
        %154 = sbr.rel (%p151) target = $region12
      $region11: #{kdgqa_forward.5} parent=5 // pred_region
        %s155 = ssub.s32 %s12, 1
        // Predicated region
        $region13: #{kdgqa_forward.5} parent=11 // pred_check
          %p156 = pneg %p87
        $region14: #{kdgqa_forward.5} parent=11 // pred_check_branch
          %158 = sbr.rel (%p156) target = $region16
        $region15: #{kdgqa_forward.5} parent=11 // pred_region
          %s159 = smul.u32 32, %s24
          %s160 = smul.u32 2, %s23
          %p161 = scmp.lt.s32.totalorder %s159, 31
          %s162 = scalar_select %p161, %s159, 31
          %p163 = scmp.lt.s32.totalorder %s160, 1
          %s164 = scalar_select %p163, %s160, 1
          %s165 = smul.addr %s162, 2
          %s166 = sadd.s32 %s164, %s165
          %s167 = smul.addr %s166, 8
          %s168 = scalar_lea.vmem %s1, %s167
          %s169 = smul.u32 32, %s24
          %s170 = smul.u32 2, %s23
        $region16: #{kdgqa_forward.5} parent=11 // pred_fallthru
          _
        // Predicated region
        $region17: #{kdgqa_forward.5} parent=11 // pred_check
          %p171 = pneg %p113
        $region18: #{kdgqa_forward.5} parent=11 // pred_check_branch
          %173 = sbr.rel (%p171) target = $region20
        $region19: #{kdgqa_forward.5} parent=11 // pred_region
          %s174 = smul.u32 2, %s23
          %p175 = scmp.lt.s32.totalorder %s174, 1
          %s176 = scalar_select %p175, %s174, 1
          %s177 = scalar_lea.vmem %s2, %s176
          %s178 = smul.u32 2, %s23
        $region20: #{kdgqa_forward.5} parent=11 // pred_fallthru
          _
      $region12: #{kdgqa_forward.5} parent=5 // pred_fallthru
        _
      %p179 = scmp.lt.s32.totalorder %s12, 2
      // Predicated region
      $region21: #{kdgqa_forward.5} parent=5 // pred_check
        %p180 = pneg %p179
      $region22: #{kdgqa_forward.5} parent=5 // pred_check_branch
        %182 = sbr.rel (%p180) target = $region24
      $region23: #{kdgqa_forward.5} parent=5 // pred_region
        // Predicated region
        $region25: #{kdgqa_forward.5} parent=23 // pred_check
          %p183 = pneg %p53
        $region26: #{kdgqa_forward.5} parent=23 // pred_check_branch
          %185 = sbr.rel (%p183) target = $region28
        $region27: #{kdgqa_forward.5} parent=23 // pred_region
          %s186 = smul.u32 48, %s19
          %s187 = smul.u32 2, %s21
          %p188 = scmp.lt.s32.totalorder %s186, 95
          %s189 = scalar_select %p188, %s186, 95
          %p190 = scmp.lt.s32.totalorder %s187, 1
          %s191 = scalar_select %p190, %s187, 1
          %s192 = smul.addr %s189, 2
          %s193 = sadd.s32 %s191, %s192
          %s194 = smul.addr %s193, 8
          %s195 = scalar_lea.vmem %s0, %s194
          %s196 = smul.u32 48, %s19
          %s197 = smul.u32 2, %s21
        $region28: #{kdgqa_forward.5} parent=23 // pred_fallthru
          _
      $region24: #{kdgqa_forward.5} parent=5 // pred_fallthru
        _
      %p198 = scmp.le.s32.totalorder 1, %s12
      %p199 = scmp.lt.s32.totalorder %s12, 3
      %p200 = pnand %p198, %p199
      %p201 = pneg %p200
      // Predicated region
      $region29: #{kdgqa_forward.5} parent=5 // pred_check
        _
      $region30: #{kdgqa_forward.5} parent=5 // pred_check_branch
        %203 = sbr.rel (%p200) target = $region32
      $region31: #{kdgqa_forward.5} parent=5 // pred_region
        %s204 = ssub.s32 %s12, 1
        %s205 = smul.u32 48, %s22
        %s206 = smul.u32 2, %s24
        %p207 = scmp.lt.s32.totalorder %s205, 95
        %s208 = scalar_select %p207, %s205, 95
        %p209 = scmp.lt.s32.totalorder %s206, 1
        %s210 = scalar_select %p209, %s206, 1
        %s211 = smul.addr %s208, 2
        %s212 = sadd.s32 %s210, %s211
        %s213 = smul.addr %s212, 8
        %s214 = scalar_lea.vmem %s0, %s213
        %p215 = pneg %p59
        %p216 = pneg %p56
        %s217 = smul.u32 32, %s24
        %s218 = smul.u32 2, %s23
        %p219 = scmp.lt.s32.totalorder %s217, 31
        %s220 = scalar_select %p219, %s217, 31
        %p221 = scmp.lt.s32.totalorder %s218, 1
        %s222 = scalar_select %p221, %s218, 1
        %s223 = smul.addr %s220, 2
        %s224 = sadd.s32 %s222, %s223
        %s225 = smul.addr %s224, 8
        %s226 = scalar_lea.vmem %s1, %s225
        %p227 = pneg %p87
        %p228 = pneg %p84
        %s229 = smul.u32 2, %s23
        %p230 = scmp.lt.s32.totalorder %s229, 1
        %s231 = scalar_select %p230, %s229, 1
        %s232 = scalar_lea.vmem %s2, %s231
        %p233 = pneg %p113
        %p234 = pneg %p110
        %p235 = pneg %p141
        %p236 = pneg %p138
        %s237 = sand.u32 %s128, 1
        %s238 = scalar_lea.sflag [#allocation4], %s237
        %s239 = sand.u32 %s128, 1
        %s240 = smul.addr %s239, 768
        %s241 = scalar_lea.vmem [#allocation3], %s240
        %s242 = smul.u32 48, %s22
        %s243 = smul.u32 2, %s24
        %p244 = scmp.lt.s32.totalorder %s242, 95
        %s245 = scalar_select %p244, %s242, 95
        %p246 = scmp.lt.s32.totalorder %s243, 1
        %s247 = scalar_select %p246, %s243, 1
        %s248 = smul.addr %s245, 2
        %s249 = sadd.s32 %s247, %s248
        %s250 = smul.addr %s249, 8
        %s251 = scalar_lea.vmem %s0, %s250
        %s252 = smul.u32 48, %s22
        %s253 = smul.u32 2, %s24
        %s254 = smul.u32 32, %s24
        %s255 = smul.u32 2, %s23
        %p256 = scmp.lt.s32.totalorder %s254, 31
        %s257 = scalar_select %p256, %s254, 31
        %p258 = scmp.lt.s32.totalorder %s255, 1
        %s259 = scalar_select %p258, %s255, 1
        %s260 = smul.addr %s257, 2
        %s261 = sadd.s32 %s259, %s260
        %s262 = smul.addr %s261, 8
        %s263 = scalar_lea.vmem %s1, %s262
        %s264 = smul.u32 32, %s24
        %s265 = smul.u32 2, %s23
        %s266 = smul.u32 2, %s23
        %p267 = scmp.lt.s32.totalorder %s266, 1
        %s268 = scalar_select %p267, %s266, 1
        %s269 = scalar_lea.vmem %s2, %s268
        %s270 = smul.u32 2, %s23
        %s271 = smul.u32 48, %s22
        %s272 = smul.u32 2, %s23
        %p273 = scmp.eq.s32.totalorder %s24, 0
        // Predicated region
        $region33: #{kdgqa_forward.5} parent=31 // pred_check
          %p274 = pneg %p273
        $region34: #{kdgqa_forward.5} parent=31 // pred_check_branch
          %276 = sbr.rel (%p274) target = $region36
        $region35: #{kdgqa_forward.5} parent=31 // pred_region
          %277 = vst [vmem:[#allocation2] sm:$0xff] 0.0
          %278 = vst [vmem:[#allocation2 + $0x8] sm:$0xff] 0.0
          %279 = vst [vmem:[#allocation2 + $0x10] sm:$0xff] 0.0
          %280 = vst [vmem:[#allocation2 + $0x18] sm:$0xff] 0.0
          %281 = vst [vmem:[#allocation2 + $0x20] sm:$0xff] 0.0
          %282 = vst [vmem:[#allocation2 + $0x28] sm:$0xff] 0.0
          %283 = vst [vmem:[#allocation2 + $0x30] sm:$0xff] 0.0
          %284 = vst [vmem:[#allocation2 + $0x38] sm:$0xff] 0.0
          %285 = vst [vmem:[#allocation2 + $0x40] sm:$0xff] 0.0
          %286 = vst [vmem:[#allocation2 + $0x48] sm:$0xff] 0.0
          %287 = vst [vmem:[#allocation2 + $0x50] sm:$0xff] 0.0
          %288 = vst [vmem:[#allocation2 + $0x58] sm:$0xff] 0.0
          %289 = vst [vmem:[#allocation2 + $0x60] sm:$0xff] 0.0
          %290 = vst [vmem:[#allocation2 + $0x68] sm:$0xff] 0.0
          %291 = vst [vmem:[#allocation2 + $0x70] sm:$0xff] 0.0
          %292 = vst [vmem:[#allocation2 + $0x78] sm:$0xff] 0.0
          %293 = vst [vmem:[#allocation2 + $0x80] sm:$0xff] 0.0
          %294 = vst [vmem:[#allocation2 + $0x88] sm:$0xff] 0.0
          %295 = vst [vmem:[#allocation2 + $0x90] sm:$0xff] 0.0
          %296 = vst [vmem:[#allocation2 + $0x98] sm:$0xff] 0.0
          %297 = vst [vmem:[#allocation2 + $0xa0] sm:$0xff] 0.0
          %298 = vst [vmem:[#allocation2 + $0xa8] sm:$0xff] 0.0
          %299 = vst [vmem:[#allocation2 + $0xb0] sm:$0xff] 0.0
          %300 = vst [vmem:[#allocation2 + $0xb8] sm:$0xff] 0.0
          %301 = vst [vmem:[#allocation2 + $0xc0] sm:$0xff] 0.0
          %302 = vst [vmem:[#allocation2 + $0xc8] sm:$0xff] 0.0
          %303 = vst [vmem:[#allocation2 + $0xd0] sm:$0xff] 0.0
          %304 = vst [vmem:[#allocation2 + $0xd8] sm:$0xff] 0.0
          %305 = vst [vmem:[#allocation2 + $0xe0] sm:$0xff] 0.0
          %306 = vst [vmem:[#allocation2 + $0xe8] sm:$0xff] 0.0
          %307 = vst [vmem:[#allocation2 + $0xf0] sm:$0xff] 0.0
          %308 = vst [vmem:[#allocation2 + $0xf8] sm:$0xff] 0.0
          %309 = vst [vmem:[#allocation2 + $0x100] sm:$0xff] 0.0
          %310 = vst [vmem:[#allocation2 + $0x108] sm:$0xff] 0.0
          %311 = vst [vmem:[#allocation2 + $0x110] sm:$0xff] 0.0
          %312 = vst [vmem:[#allocation2 + $0x118] sm:$0xff] 0.0
          %313 = vst [vmem:[#allocation2 + $0x120] sm:$0xff] 0.0
          %314 = vst [vmem:[#allocation2 + $0x128] sm:$0xff] 0.0
          %315 = vst [vmem:[#allocation2 + $0x130] sm:$0xff] 0.0
          %316 = vst [vmem:[#allocation2 + $0x138] sm:$0xff] 0.0
          %317 = vst [vmem:[#allocation2 + $0x140] sm:$0xff] 0.0
          %318 = vst [vmem:[#allocation2 + $0x148] sm:$0xff] 0.0
          %319 = vst [vmem:[#allocation2 + $0x150] sm:$0xff] 0.0
          %320 = vst [vmem:[#allocation2 + $0x158] sm:$0xff] 0.0
          %321 = vst [vmem:[#allocation2 + $0x160] sm:$0xff] 0.0
          %322 = vst [vmem:[#allocation2 + $0x168] sm:$0xff] 0.0
          %323 = vst [vmem:[#allocation2 + $0x170] sm:$0xff] 0.0
          %324 = vst [vmem:[#allocation2 + $0x178] sm:$0xff] 0.0
          %325 = vst [vmem:[#allocation2 + $0x180] sm:$0xff] 0.0
          %326 = vst [vmem:[#allocation2 + $0x188] sm:$0xff] 0.0
          %327 = vst [vmem:[#allocation2 + $0x190] sm:$0xff] 0.0
          %328 = vst [vmem:[#allocation2 + $0x198] sm:$0xff] 0.0
          %329 = vst [vmem:[#allocation2 + $0x1a0] sm:$0xff] 0.0
          %330 = vst [vmem:[#allocation2 + $0x1a8] sm:$0xff] 0.0
          %331 = vst [vmem:[#allocation2 + $0x1b0] sm:$0xff] 0.0
          %332 = vst [vmem:[#allocation2 + $0x1b8] sm:$0xff] 0.0
          %333 = vst [vmem:[#allocation2 + $0x1c0] sm:$0xff] 0.0
          %334 = vst [vmem:[#allocation2 + $0x1c8] sm:$0xff] 0.0
          %335 = vst [vmem:[#allocation2 + $0x1d0] sm:$0xff] 0.0
          %336 = vst [vmem:[#allocation2 + $0x1d8] sm:$0xff] 0.0
          %337 = vst [vmem:[#allocation2 + $0x1e0] sm:$0xff] 0.0
          %338 = vst [vmem:[#allocation2 + $0x1e8] sm:$0xff] 0.0
          %339 = vst [vmem:[#allocation2 + $0x1f0] sm:$0xff] 0.0
          %340 = vst [vmem:[#allocation2 + $0x1f8] sm:$0xff] 0.0
          %341 = vst [vmem:[#allocation2 + $0x200] sm:$0xff] 0.0
          %342 = vst [vmem:[#allocation2 + $0x208] sm:$0xff] 0.0
          %343 = vst [vmem:[#allocation2 + $0x210] sm:$0xff] 0.0
          %344 = vst [vmem:[#allocation2 + $0x218] sm:$0xff] 0.0
          %345 = vst [vmem:[#allocation2 + $0x220] sm:$0xff] 0.0
          %346 = vst [vmem:[#allocation2 + $0x228] sm:$0xff] 0.0
          %347 = vst [vmem:[#allocation2 + $0x230] sm:$0xff] 0.0
          %348 = vst [vmem:[#allocation2 + $0x238] sm:$0xff] 0.0
          %349 = vst [vmem:[#allocation2 + $0x240] sm:$0xff] 0.0
          %350 = vst [vmem:[#allocation2 + $0x248] sm:$0xff] 0.0
          %351 = vst [vmem:[#allocation2 + $0x250] sm:$0xff] 0.0
          %352 = vst [vmem:[#allocation2 + $0x258] sm:$0xff] 0.0
          %353 = vst [vmem:[#allocation2 + $0x260] sm:$0xff] 0.0
          %354 = vst [vmem:[#allocation2 + $0x268] sm:$0xff] 0.0
          %355 = vst [vmem:[#allocation2 + $0x270] sm:$0xff] 0.0
          %356 = vst [vmem:[#allocation2 + $0x278] sm:$0xff] 0.0
          %357 = vst [vmem:[#allocation2 + $0x280] sm:$0xff] 0.0
          %358 = vst [vmem:[#allocation2 + $0x288] sm:$0xff] 0.0
          %359 = vst [vmem:[#allocation2 + $0x290] sm:$0xff] 0.0
          %360 = vst [vmem:[#allocation2 + $0x298] sm:$0xff] 0.0
          %361 = vst [vmem:[#allocation2 + $0x2a0] sm:$0xff] 0.0
          %362 = vst [vmem:[#allocation2 + $0x2a8] sm:$0xff] 0.0
          %363 = vst [vmem:[#allocation2 + $0x2b0] sm:$0xff] 0.0
          %364 = vst [vmem:[#allocation2 + $0x2b8] sm:$0xff] 0.0
          %365 = vst [vmem:[#allocation2 + $0x2c0] sm:$0xff] 0.0
          %366 = vst [vmem:[#allocation2 + $0x2c8] sm:$0xff] 0.0
          %367 = vst [vmem:[#allocation2 + $0x2d0] sm:$0xff] 0.0
          %368 = vst [vmem:[#allocation2 + $0x2d8] sm:$0xff] 0.0
          %369 = vst [vmem:[#allocation2 + $0x2e0] sm:$0xff] 0.0
          %370 = vst [vmem:[#allocation2 + $0x2e8] sm:$0xff] 0.0
          %371 = vst [vmem:[#allocation2 + $0x2f0] sm:$0xff] 0.0
          %372 = vst [vmem:[#allocation2 + $0x2f8] sm:$0xff] 0.0
        $region36: #{kdgqa_forward.5} parent=31 // pred_fallthru
          _
        %v373 = vld [vmem:[#allocation2] sm:$0xff]
        %v374 = vld [vmem:[#allocation2 + $0x8] sm:$0xff]
        %v375 = vld [vmem:[#allocation2 + $0x10] sm:$0xff]
        %v376 = vld [vmem:[#allocation2 + $0x18] sm:$0xff]
        %v377 = vld [vmem:[#allocation2 + $0x20] sm:$0xff]
        %v378 = vld [vmem:[#allocation2 + $0x28] sm:$0xff]
        %v379 = vld [vmem:[#allocation2 + $0x30] sm:$0xff]
        %v380 = vld [vmem:[#allocation2 + $0x38] sm:$0xff]
        %v381 = vld [vmem:[#allocation2 + $0x40] sm:$0xff]
        %v382 = vld [vmem:[#allocation2 + $0x48] sm:$0xff]
        %v383 = vld [vmem:[#allocation2 + $0x50] sm:$0xff]
        %v384 = vld [vmem:[#allocation2 + $0x58] sm:$0xff]
        %v385 = vld [vmem:[#allocation2 + $0x60] sm:$0xff]
        %v386 = vld [vmem:[#allocation2 + $0x68] sm:$0xff]
        %v387 = vld [vmem:[#allocation2 + $0x70] sm:$0xff]
        %v388 = vld [vmem:[#allocation2 + $0x78] sm:$0xff]
        %v389 = vld [vmem:[#allocation2 + $0x80] sm:$0xff]
        %v390 = vld [vmem:[#allocation2 + $0x88] sm:$0xff]
        %v391 = vld [vmem:[#allocation2 + $0x90] sm:$0xff]
        %v392 = vld [vmem:[#allocation2 + $0x98] sm:$0xff]
        %v393 = vld [vmem:[#allocation2 + $0xa0] sm:$0xff]
        %v394 = vld [vmem:[#allocation2 + $0xa8] sm:$0xff]
        %v395 = vld [vmem:[#allocation2 + $0xb0] sm:$0xff]
        %v396 = vld [vmem:[#allocation2 + $0xb8] sm:$0xff]
        %v397 = vld [vmem:[#allocation2 + $0xc0] sm:$0xff]
        %v398 = vld [vmem:[#allocation2 + $0xc8] sm:$0xff]
        %v399 = vld [vmem:[#allocation2 + $0xd0] sm:$0xff]
        %v400 = vld [vmem:[#allocation2 + $0xd8] sm:$0xff]
        %v401 = vld [vmem:[#allocation2 + $0xe0] sm:$0xff]
        %v402 = vld [vmem:[#allocation2 + $0xe8] sm:$0xff]
        %v403 = vld [vmem:[#allocation2 + $0xf0] sm:$0xff]
        %v404 = vld [vmem:[#allocation2 + $0xf8] sm:$0xff]
        %v405 = vld [vmem:[#allocation2 + $0x100] sm:$0xff]
        %v406 = vld [vmem:[#allocation2 + $0x108] sm:$0xff]
        %v407 = vld [vmem:[#allocation2 + $0x110] sm:$0xff]
        %v408 = vld [vmem:[#allocation2 + $0x118] sm:$0xff]
        %v409 = vld [vmem:[#allocation2 + $0x120] sm:$0xff]
        %v410 = vld [vmem:[#allocation2 + $0x128] sm:$0xff]
        %v411 = vld [vmem:[#allocation2 + $0x130] sm:$0xff]
        %v412 = vld [vmem:[#allocation2 + $0x138] sm:$0xff]
        %v413 = vld [vmem:[#allocation2 + $0x140] sm:$0xff]
        %v414 = vld [vmem:[#allocation2 + $0x148] sm:$0xff]
        %v415 = vld [vmem:[#allocation2 + $0x150] sm:$0xff]
        %v416 = vld [vmem:[#allocation2 + $0x158] sm:$0xff]
        %v417 = vld [vmem:[#allocation2 + $0x160] sm:$0xff]
        %v418 = vld [vmem:[#allocation2 + $0x168] sm:$0xff]
        %v419 = vld [vmem:[#allocation2 + $0x170] sm:$0xff]
        %v420 = vld [vmem:[#allocation2 + $0x178] sm:$0xff]
        %v421 = vld [vmem:[#allocation2 + $0x180] sm:$0xff]
        %v422 = vld [vmem:[#allocation2 + $0x188] sm:$0xff]
        %v423 = vld [vmem:[#allocation2 + $0x190] sm:$0xff]
        %v424 = vld [vmem:[#allocation2 + $0x198] sm:$0xff]
        %v425 = vld [vmem:[#allocation2 + $0x1a0] sm:$0xff]
        %v426 = vld [vmem:[#allocation2 + $0x1a8] sm:$0xff]
        %v427 = vld [vmem:[#allocation2 + $0x1b0] sm:$0xff]
        %v428 = vld [vmem:[#allocation2 + $0x1b8] sm:$0xff]
        %v429 = vld [vmem:[#allocation2 + $0x1c0] sm:$0xff]
        %v430 = vld [vmem:[#allocation2 + $0x1c8] sm:$0xff]
        %v431 = vld [vmem:[#allocation2 + $0x1d0] sm:$0xff]
        %v432 = vld [vmem:[#allocation2 + $0x1d8] sm:$0xff]
        %v433 = vld [vmem:[#allocation2 + $0x1e0] sm:$0xff]
        %v434 = vld [vmem:[#allocation2 + $0x1e8] sm:$0xff]
        %v435 = vld [vmem:[#allocation2 + $0x1f0] sm:$0xff]
        %v436 = vld [vmem:[#allocation2 + $0x1f8] sm:$0xff]
        %v437 = vld [vmem:[#allocation2 + $0x200] sm:$0xff]
        %v438 = vld [vmem:[#allocation2 + $0x208] sm:$0xff]
        %v439 = vld [vmem:[#allocation2 + $0x210] sm:$0xff]
        %v440 = vld [vmem:[#allocation2 + $0x218] sm:$0xff]
        %v441 = vld [vmem:[#allocation2 + $0x220] sm:$0xff]
        %v442 = vld [vmem:[#allocation2 + $0x228] sm:$0xff]
        %v443 = vld [vmem:[#allocation2 + $0x230] sm:$0xff]
        %v444 = vld [vmem:[#allocation2 + $0x238] sm:$0xff]
        %v445 = vld [vmem:[#allocation2 + $0x240] sm:$0xff]
        %v446 = vld [vmem:[#allocation2 + $0x248] sm:$0xff]
        %v447 = vld [vmem:[#allocation2 + $0x250] sm:$0xff]
        %v448 = vld [vmem:[#allocation2 + $0x258] sm:$0xff]
        %v449 = vld [vmem:[#allocation2 + $0x260] sm:$0xff]
        %v450 = vld [vmem:[#allocation2 + $0x268] sm:$0xff]
        %v451 = vld [vmem:[#allocation2 + $0x270] sm:$0xff]
        %v452 = vld [vmem:[#allocation2 + $0x278] sm:$0xff]
        %v453 = vld [vmem:[#allocation2 + $0x280] sm:$0xff]
        %v454 = vld [vmem:[#allocation2 + $0x288] sm:$0xff]
        %v455 = vld [vmem:[#allocation2 + $0x290] sm:$0xff]
        %v456 = vld [vmem:[#allocation2 + $0x298] sm:$0xff]
        %v457 = vld [vmem:[#allocation2 + $0x2a0] sm:$0xff]
        %v458 = vld [vmem:[#allocation2 + $0x2a8] sm:$0xff]
        %v459 = vld [vmem:[#allocation2 + $0x2b0] sm:$0xff]
        %v460 = vld [vmem:[#allocation2 + $0x2b8] sm:$0xff]
        %v461 = vld [vmem:[#allocation2 + $0x2c0] sm:$0xff]
        %v462 = vld [vmem:[#allocation2 + $0x2c8] sm:$0xff]
        %v463 = vld [vmem:[#allocation2 + $0x2d0] sm:$0xff]
        %v464 = vld [vmem:[#allocation2 + $0x2d8] sm:$0xff]
        %v465 = vld [vmem:[#allocation2 + $0x2e0] sm:$0xff]
        %v466 = vld [vmem:[#allocation2 + $0x2e8] sm:$0xff]
        %v467 = vld [vmem:[#allocation2 + $0x2f0] sm:$0xff]
        %v468 = vld [vmem:[#allocation2 + $0x2f8] sm:$0xff]
        %v469 = vld [vmem:[%s251] sm:$0xff]
        %v470 = vld [vmem:[%s251 + $0x8] sm:$0xff]
        %v471 = vld [vmem:[%s251 + $0x10] sm:$0xff]
        %v472 = vld [vmem:[%s251 + $0x18] sm:$0xff]
        %v473 = vld [vmem:[%s251 + $0x20] sm:$0xff]
        %v474 = vld [vmem:[%s251 + $0x28] sm:$0xff]
        %v475 = vld [vmem:[%s251 + $0x30] sm:$0xff]
        %v476 = vld [vmem:[%s251 + $0x38] sm:$0xff]
        %v477 = vld [vmem:[%s251 + $0x40] sm:$0xff]
        %v478 = vld [vmem:[%s251 + $0x48] sm:$0xff]
        %v479 = vld [vmem:[%s251 + $0x50] sm:$0xff]
        %v480 = vld [vmem:[%s251 + $0x58] sm:$0xff]
        %v481 = vld [vmem:[%s251 + $0x60] sm:$0xff]
        %v482 = vld [vmem:[%s251 + $0x68] sm:$0xff]
        %v483 = vld [vmem:[%s251 + $0x70] sm:$0xff]
        %v484 = vld [vmem:[%s251 + $0x78] sm:$0xff]
        %v485 = vld [vmem:[%s251 + $0x80] sm:$0xff]
        %v486 = vld [vmem:[%s251 + $0x88] sm:$0xff]
        %v487 = vld [vmem:[%s251 + $0x90] sm:$0xff]
        %v488 = vld [vmem:[%s251 + $0x98] sm:$0xff]
        %v489 = vld [vmem:[%s251 + $0xa0] sm:$0xff]
        %v490 = vld [vmem:[%s251 + $0xa8] sm:$0xff]
        %v491 = vld [vmem:[%s251 + $0xb0] sm:$0xff]
        %v492 = vld [vmem:[%s251 + $0xb8] sm:$0xff]
        %v493 = vld [vmem:[%s251 + $0xc0] sm:$0xff]
        %v494 = vld [vmem:[%s251 + $0xc8] sm:$0xff]
        %v495 = vld [vmem:[%s251 + $0xd0] sm:$0xff]
        %v496 = vld [vmem:[%s251 + $0xd8] sm:$0xff]
        %v497 = vld [vmem:[%s251 + $0xe0] sm:$0xff]
        %v498 = vld [vmem:[%s251 + $0xe8] sm:$0xff]
        %v499 = vld [vmem:[%s251 + $0xf0] sm:$0xff]
        %v500 = vld [vmem:[%s251 + $0xf8] sm:$0xff]
        %v501 = vld [vmem:[%s251 + $0x100] sm:$0xff]
        %v502 = vld [vmem:[%s251 + $0x108] sm:$0xff]
        %v503 = vld [vmem:[%s251 + $0x110] sm:$0xff]
        %v504 = vld [vmem:[%s251 + $0x118] sm:$0xff]
        %v505 = vld [vmem:[%s251 + $0x120] sm:$0xff]
        %v506 = vld [vmem:[%s251 + $0x128] sm:$0xff]
        %v507 = vld [vmem:[%s251 + $0x130] sm:$0xff]
        %v508 = vld [vmem:[%s251 + $0x138] sm:$0xff]
        %v509 = vld [vmem:[%s251 + $0x140] sm:$0xff]
        %v510 = vld [vmem:[%s251 + $0x148] sm:$0xff]
        %v511 = vld [vmem:[%s251 + $0x150] sm:$0xff]
        %v512 = vld [vmem:[%s251 + $0x158] sm:$0xff]
        %v513 = vld [vmem:[%s251 + $0x160] sm:$0xff]
        %v514 = vld [vmem:[%s251 + $0x168] sm:$0xff]
        %v515 = vld [vmem:[%s251 + $0x170] sm:$0xff]
        %v516 = vld [vmem:[%s251 + $0x178] sm:$0xff]
        %v517 = vld [vmem:[%s251 + $0x180] sm:$0xff]
        %v518 = vld [vmem:[%s251 + $0x188] sm:$0xff]
        %v519 = vld [vmem:[%s251 + $0x190] sm:$0xff]
        %v520 = vld [vmem:[%s251 + $0x198] sm:$0xff]
        %v521 = vld [vmem:[%s251 + $0x1a0] sm:$0xff]
        %v522 = vld [vmem:[%s251 + $0x1a8] sm:$0xff]
        %v523 = vld [vmem:[%s251 + $0x1b0] sm:$0xff]
        %v524 = vld [vmem:[%s251 + $0x1b8] sm:$0xff]
        %v525 = vld [vmem:[%s251 + $0x1c0] sm:$0xff]
        %v526 = vld [vmem:[%s251 + $0x1c8] sm:$0xff]
        %v527 = vld [vmem:[%s251 + $0x1d0] sm:$0xff]
        %v528 = vld [vmem:[%s251 + $0x1d8] sm:$0xff]
        %v529 = vld [vmem:[%s251 + $0x1e0] sm:$0xff]
        %v530 = vld [vmem:[%s251 + $0x1e8] sm:$0xff]
        %v531 = vld [vmem:[%s251 + $0x1f0] sm:$0xff]
        %v532 = vld [vmem:[%s251 + $0x1f8] sm:$0xff]
        %v533 = vld [vmem:[%s251 + $0x200] sm:$0xff]
        %v534 = vld [vmem:[%s251 + $0x208] sm:$0xff]
        %v535 = vld [vmem:[%s251 + $0x210] sm:$0xff]
        %v536 = vld [vmem:[%s251 + $0x218] sm:$0xff]
        %v537 = vld [vmem:[%s251 + $0x220] sm:$0xff]
        %v538 = vld [vmem:[%s251 + $0x228] sm:$0xff]
        %v539 = vld [vmem:[%s251 + $0x230] sm:$0xff]
        %v540 = vld [vmem:[%s251 + $0x238] sm:$0xff]
        %v541 = vld [vmem:[%s251 + $0x240] sm:$0xff]
        %v542 = vld [vmem:[%s251 + $0x248] sm:$0xff]
        %v543 = vld [vmem:[%s251 + $0x250] sm:$0xff]
        %v544 = vld [vmem:[%s251 + $0x258] sm:$0xff]
        %v545 = vld [vmem:[%s251 + $0x260] sm:$0xff]
        %v546 = vld [vmem:[%s251 + $0x268] sm:$0xff]
        %v547 = vld [vmem:[%s251 + $0x270] sm:$0xff]
        %v548 = vld [vmem:[%s251 + $0x278] sm:$0xff]
        %v549 = vld [vmem:[%s251 + $0x280] sm:$0xff]
        %v550 = vld [vmem:[%s251 + $0x288] sm:$0xff]
        %v551 = vld [vmem:[%s251 + $0x290] sm:$0xff]
        %v552 = vld [vmem:[%s251 + $0x298] sm:$0xff]
        %v553 = vld [vmem:[%s251 + $0x2a0] sm:$0xff]
        %v554 = vld [vmem:[%s251 + $0x2a8] sm:$0xff]
        %v555 = vld [vmem:[%s251 + $0x2b0] sm:$0xff]
        %v556 = vld [vmem:[%s251 + $0x2b8] sm:$0xff]
        %v557 = vld [vmem:[%s251 + $0x2c0] sm:$0xff]
        %v558 = vld [vmem:[%s251 + $0x2c8] sm:$0xff]
        %v559 = vld [vmem:[%s251 + $0x2d0] sm:$0xff]
        %v560 = vld [vmem:[%s251 + $0x2d8] sm:$0xff]
        %v561 = vld [vmem:[%s251 + $0x2e0] sm:$0xff]
        %v562 = vld [vmem:[%s251 + $0x2e8] sm:$0xff]
        %v563 = vld [vmem:[%s251 + $0x2f0] sm:$0xff]
        %v564 = vld [vmem:[%s251 + $0x2f8] sm:$0xff]
        %v565 = vld [vmem:[%s263] sm:$0xff]
        %v566 = vld [vmem:[%s263 + $0x8] sm:$0xff]
        %v567 = vld [vmem:[%s263 + $0x10] sm:$0xff]
        %v568 = vld [vmem:[%s263 + $0x18] sm:$0xff]
        %v569 = vld [vmem:[%s263 + $0x20] sm:$0xff]
        %v570 = vld [vmem:[%s263 + $0x28] sm:$0xff]
        %v571 = vld [vmem:[%s263 + $0x30] sm:$0xff]
        %v572 = vld [vmem:[%s263 + $0x38] sm:$0xff]
        %v573 = vld [vmem:[%s263 + $0x40] sm:$0xff]
        %v574 = vld [vmem:[%s263 + $0x48] sm:$0xff]
        %v575 = vld [vmem:[%s263 + $0x50] sm:$0xff]
        %v576 = vld [vmem:[%s263 + $0x58] sm:$0xff]
        %v577 = vld [vmem:[%s263 + $0x60] sm:$0xff]
        %v578 = vld [vmem:[%s263 + $0x68] sm:$0xff]
        %v579 = vld [vmem:[%s263 + $0x70] sm:$0xff]
        %v580 = vld [vmem:[%s263 + $0x78] sm:$0xff]
        %v581 = vld [vmem:[%s263 + $0x80] sm:$0xff]
        %v582 = vld [vmem:[%s263 + $0x88] sm:$0xff]
        %v583 = vld [vmem:[%s263 + $0x90] sm:$0xff]
        %v584 = vld [vmem:[%s263 + $0x98] sm:$0xff]
        %v585 = vld [vmem:[%s263 + $0xa0] sm:$0xff]
        %v586 = vld [vmem:[%s263 + $0xa8] sm:$0xff]
        %v587 = vld [vmem:[%s263 + $0xb0] sm:$0xff]
        %v588 = vld [vmem:[%s263 + $0xb8] sm:$0xff]
        %v589 = vld [vmem:[%s263 + $0xc0] sm:$0xff]
        %v590 = vld [vmem:[%s263 + $0xc8] sm:$0xff]
        %v591 = vld [vmem:[%s263 + $0xd0] sm:$0xff]
        %v592 = vld [vmem:[%s263 + $0xd8] sm:$0xff]
        %v593 = vld [vmem:[%s263 + $0xe0] sm:$0xff]
        %v594 = vld [vmem:[%s263 + $0xe8] sm:$0xff]
        %v595 = vld [vmem:[%s263 + $0xf0] sm:$0xff]
        %v596 = vld [vmem:[%s263 + $0xf8] sm:$0xff]
        %v597 = vld [vmem:[%s263 + $0x100] sm:$0xff]
        %v598 = vld [vmem:[%s263 + $0x108] sm:$0xff]
        %v599 = vld [vmem:[%s263 + $0x110] sm:$0xff]
        %v600 = vld [vmem:[%s263 + $0x118] sm:$0xff]
        %v601 = vld [vmem:[%s263 + $0x120] sm:$0xff]
        %v602 = vld [vmem:[%s263 + $0x128] sm:$0xff]
        %v603 = vld [vmem:[%s263 + $0x130] sm:$0xff]
        %v604 = vld [vmem:[%s263 + $0x138] sm:$0xff]
        %v605 = vld [vmem:[%s263 + $0x140] sm:$0xff]
        %v606 = vld [vmem:[%s263 + $0x148] sm:$0xff]
        %v607 = vld [vmem:[%s263 + $0x150] sm:$0xff]
        %v608 = vld [vmem:[%s263 + $0x158] sm:$0xff]
        %v609 = vld [vmem:[%s263 + $0x160] sm:$0xff]
        %v610 = vld [vmem:[%s263 + $0x168] sm:$0xff]
        %v611 = vld [vmem:[%s263 + $0x170] sm:$0xff]
        %v612 = vld [vmem:[%s263 + $0x178] sm:$0xff]
        %v613 = vld [vmem:[%s263 + $0x180] sm:$0xff]
        %v614 = vld [vmem:[%s263 + $0x188] sm:$0xff]
        %v615 = vld [vmem:[%s263 + $0x190] sm:$0xff]
        %v616 = vld [vmem:[%s263 + $0x198] sm:$0xff]
        %v617 = vld [vmem:[%s263 + $0x1a0] sm:$0xff]
        %v618 = vld [vmem:[%s263 + $0x1a8] sm:$0xff]
        %v619 = vld [vmem:[%s263 + $0x1b0] sm:$0xff]
        %v620 = vld [vmem:[%s263 + $0x1b8] sm:$0xff]
        %v621 = vld [vmem:[%s263 + $0x1c0] sm:$0xff]
        %v622 = vld [vmem:[%s263 + $0x1c8] sm:$0xff]
        %v623 = vld [vmem:[%s263 + $0x1d0] sm:$0xff]
        %v624 = vld [vmem:[%s263 + $0x1d8] sm:$0xff]
        %v625 = vld [vmem:[%s263 + $0x1e0] sm:$0xff]
        %v626 = vld [vmem:[%s263 + $0x1e8] sm:$0xff]
        %v627 = vld [vmem:[%s263 + $0x1f0] sm:$0xff]
        %v628 = vld [vmem:[%s263 + $0x1f8] sm:$0xff]
        %629 = vmatprep.subr.mxu0 %v596
        %630 = vmatpush1.msra.mxu0 %v595
        %631 = vmatprep.subr.mxu0 %v594
        %632 = vmatpush1.msra.mxu0 %v593
        %633 = vmatprep.subr.mxu0 %v592
        %634 = vmatpush1.msra.mxu0 %v591
        %635 = vmatprep.subr.mxu0 %v590
        %636 = vmatpush1.msra.mxu0 %v589
        %637 = vmatprep.subr.mxu0 %v588
        %638 = vmatpush1.msra.mxu0 %v587
        %639 = vmatprep.subr.mxu0 %v586
        %640 = vmatpush1.msra.mxu0 %v585
        %641 = vmatprep.subr.mxu0 %v584
        %642 = vmatpush1.msra.mxu0 %v583
        %643 = vmatprep.subr.mxu0 %v582
        %644 = vmatpush1.msra.mxu0 %v581
        %645 = vmatprep.subr.mxu0 %v580
        %646 = vmatpush1.msra.mxu0 %v579
        %647 = vmatprep.subr.mxu0 %v578
        %648 = vmatpush1.msra.mxu0 %v577
        %649 = vmatprep.subr.mxu0 %v576
        %650 = vmatpush1.msra.mxu0 %v575
        %651 = vmatprep.subr.mxu0 %v574
        %652 = vmatpush1.msra.mxu0 %v573
        %653 = vmatprep.subr.mxu0 %v572
        %654 = vmatpush1.msra.mxu0 %v571
        %655 = vmatprep.subr.mxu0 %v570
        %656 = vmatpush1.msra.mxu0 %v569
        %657 = vmatprep.subr.mxu0 %v568
        %658 = vmatpush1.msra.mxu0 %v567
        %659 = vmatprep.subr.mxu0 %v566
        %660 = vmatpush1.msra.mxu0 %v565
        %661 = vmatprep.subr.mxu0 %v628
        %662 = vmatpush2.msra.mxu0 %v627
        %663 = vmatprep.subr.mxu0 %v626
        %664 = vmatpush2.msra.mxu0 %v625
        %665 = vmatprep.subr.mxu0 %v624
        %666 = vmatpush2.msra.mxu0 %v623
        %667 = vmatprep.subr.mxu0 %v622
        %668 = vmatpush2.msra.mxu0 %v621
        %669 = vmatprep.subr.mxu0 %v620
        %670 = vmatpush2.msra.mxu0 %v619
        %671 = vmatprep.subr.mxu0 %v618
        %672 = vmatpush2.msra.mxu0 %v617
        %673 = vmatprep.subr.mxu0 %v616
        %674 = vmatpush2.msra.mxu0 %v615
        %675 = vmatprep.subr.mxu0 %v614
        %676 = vmatpush2.msra.mxu0 %v613
        %677 = vmatprep.subr.mxu0 %v612
        %678 = vmatpush2.msra.mxu0 %v611
        %679 = vmatprep.subr.mxu0 %v610
        %680 = vmatpush2.msra.mxu0 %v609
        %681 = vmatprep.subr.mxu0 %v608
        %682 = vmatpush2.msra.mxu0 %v607
        %683 = vmatprep.subr.mxu0 %v606
        %684 = vmatpush2.msra.mxu0 %v605
        %685 = vmatprep.subr.mxu0 %v604
        %686 = vmatpush2.msra.mxu0 %v603
        %687 = vmatprep.subr.mxu0 %v602
        %688 = vmatpush2.msra.mxu0 %v601
        %689 = vmatprep.subr.mxu0 %v600
        %690 = vmatpush2.msra.mxu0 %v599
        %691 = vmatprep.subr.mxu0 %v598
        %692 = vmatpush2.msra.mxu0 %v597
        %693 = vmatprep.mubr.f32.mxu0 %v470
        %694 = vmatmul.mubr.f32.gmra.mxu0 %v469
        %v695 = vpop.f32.mrf.mxu0
        %v696 = vadd.f32 0.0, %v695
        %v697 = vpop.f32.mrf.mxu0
        %v698 = vadd.f32 0.0, %v697
        %699 = vmatprep.mubr.f32.mxu0 %v472
        %700 = vmatmul.mubr.f32.gmra.mxu0 %v471
        %v701 = vpop.f32.mrf.mxu0
        %v702 = vadd.f32 0.0, %v701
        %v703 = vpop.f32.mrf.mxu0
        %v704 = vadd.f32 0.0, %v703
        %705 = vmatprep.mubr.f32.mxu0 %v474
        %706 = vmatmul.mubr.f32.gmra.mxu0 %v473
        %v707 = vpop.f32.mrf.mxu0
        %v708 = vadd.f32 0.0, %v707
        %v709 = vpop.f32.mrf.mxu0
        %v710 = vadd.f32 0.0, %v709
        %711 = vmatprep.mubr.f32.mxu0 %v476
        %712 = vmatmul.mubr.f32.gmra.mxu0 %v475
        %v713 = vpop.f32.mrf.mxu0
        %v714 = vadd.f32 0.0, %v713
        %v715 = vpop.f32.mrf.mxu0
        %v716 = vadd.f32 0.0, %v715
        %717 = vmatprep.mubr.f32.mxu0 %v478
        %718 = vmatmul.mubr.f32.gmra.mxu0 %v477
        %v719 = vpop.f32.mrf.mxu0
        %v720 = vadd.f32 0.0, %v719
        %v721 = vpop.f32.mrf.mxu0
        %v722 = vadd.f32 0.0, %v721
        %723 = vmatprep.mubr.f32.mxu0 %v480
        %724 = vmatmul.mubr.f32.gmra.mxu0 %v479
        %v725 = vpop.f32.mrf.mxu0
        %v726 = vadd.f32 0.0, %v725
        %v727 = vpop.f32.mrf.mxu0
        %v728 = vadd.f32 0.0, %v727
        %729 = vmatprep.mubr.f32.mxu0 %v482
        %730 = vmatmul.mubr.f32.gmra.mxu0 %v481
        %v731 = vpop.f32.mrf.mxu0
        %v732 = vadd.f32 0.0, %v731
        %v733 = vpop.f32.mrf.mxu0
        %v734 = vadd.f32 0.0, %v733
        %735 = vmatprep.mubr.f32.mxu0 %v484
        %736 = vmatmul.mubr.f32.gmra.mxu0 %v483
        %v737 = vpop.f32.mrf.mxu0
        %v738 = vadd.f32 0.0, %v737
        %v739 = vpop.f32.mrf.mxu0
        %v740 = vadd.f32 0.0, %v739
        %741 = vmatprep.mubr.f32.mxu0 %v486
        %742 = vmatmul.mubr.f32.gmra.mxu0 %v485
        %v743 = vpop.f32.mrf.mxu0
        %v744 = vadd.f32 0.0, %v743
        %v745 = vpop.f32.mrf.mxu0
        %v746 = vadd.f32 0.0, %v745
        %747 = vmatprep.mubr.f32.mxu0 %v488
        %748 = vmatmul.mubr.f32.gmra.mxu0 %v487
        %v749 = vpop.f32.mrf.mxu0
        %v750 = vadd.f32 0.0, %v749
        %v751 = vpop.f32.mrf.mxu0
        %v752 = vadd.f32 0.0, %v751
        %753 = vmatprep.mubr.f32.mxu0 %v490
        %754 = vmatmul.mubr.f32.gmra.mxu0 %v489
        %v755 = vpop.f32.mrf.mxu0
        %v756 = vadd.f32 0.0, %v755
        %v757 = vpop.f32.mrf.mxu0
        %v758 = vadd.f32 0.0, %v757
        %759 = vmatprep.mubr.f32.mxu0 %v492
        %760 = vmatmul.mubr.f32.gmra.mxu0 %v491
        %v761 = vpop.f32.mrf.mxu0
        %v762 = vadd.f32 0.0, %v761
        %v763 = vpop.f32.mrf.mxu0
        %v764 = vadd.f32 0.0, %v763
        %765 = vmatprep.mubr.f32.mxu0 %v494
        %766 = vmatmul.mubr.f32.gmra.mxu0 %v493
        %v767 = vpop.f32.mrf.mxu0
        %v768 = vadd.f32 0.0, %v767
        %v769 = vpop.f32.mrf.mxu0
        %v770 = vadd.f32 0.0, %v769
        %771 = vmatprep.mubr.f32.mxu0 %v496
        %772 = vmatmul.mubr.f32.gmra.mxu0 %v495
        %v773 = vpop.f32.mrf.mxu0
        %v774 = vadd.f32 0.0, %v773
        %v775 = vpop.f32.mrf.mxu0
        %v776 = vadd.f32 0.0, %v775
        %777 = vmatprep.mubr.f32.mxu0 %v498
        %778 = vmatmul.mubr.f32.gmra.mxu0 %v497
        %v779 = vpop.f32.mrf.mxu0
        %v780 = vadd.f32 0.0, %v779
        %v781 = vpop.f32.mrf.mxu0
        %v782 = vadd.f32 0.0, %v781
        %783 = vmatprep.mubr.f32.mxu0 %v500
        %784 = vmatmul.mubr.f32.gmra.mxu0 %v499
        %v785 = vpop.f32.mrf.mxu0
        %v786 = vadd.f32 0.0, %v785
        %v787 = vpop.f32.mrf.mxu0
        %v788 = vadd.f32 0.0, %v787
        %789 = vmatprep.mubr.f32.mxu0 %v502
        %790 = vmatmul.mubr.f32.gmra.mxu0 %v501
        %v791 = vpop.f32.mrf.mxu0
        %v792 = vadd.f32 0.0, %v791
        %v793 = vpop.f32.mrf.mxu0
        %v794 = vadd.f32 0.0, %v793
        %795 = vmatprep.mubr.f32.mxu0 %v504
        %796 = vmatmul.mubr.f32.gmra.mxu0 %v503
        %v797 = vpop.f32.mrf.mxu0
        %v798 = vadd.f32 0.0, %v797
        %v799 = vpop.f32.mrf.mxu0
        %v800 = vadd.f32 0.0, %v799
        %801 = vmatprep.mubr.f32.mxu0 %v506
        %802 = vmatmul.mubr.f32.gmra.mxu0 %v505
        %v803 = vpop.f32.mrf.mxu0
        %v804 = vadd.f32 0.0, %v803
        %v805 = vpop.f32.mrf.mxu0
        %v806 = vadd.f32 0.0, %v805
        %807 = vmatprep.mubr.f32.mxu0 %v508
        %808 = vmatmul.mubr.f32.gmra.mxu0 %v507
        %v809 = vpop.f32.mrf.mxu0
        %v810 = vadd.f32 0.0, %v809
        %v811 = vpop.f32.mrf.mxu0
        %v812 = vadd.f32 0.0, %v811
        %813 = vmatprep.mubr.f32.mxu0 %v510
        %814 = vmatmul.mubr.f32.gmra.mxu0 %v509
        %v815 = vpop.f32.mrf.mxu0
        %v816 = vadd.f32 0.0, %v815
        %v817 = vpop.f32.mrf.mxu0
        %v818 = vadd.f32 0.0, %v817
        %819 = vmatprep.mubr.f32.mxu0 %v512
        %820 = vmatmul.mubr.f32.gmra.mxu0 %v511
        %v821 = vpop.f32.mrf.mxu0
        %v822 = vadd.f32 0.0, %v821
        %v823 = vpop.f32.mrf.mxu0
        %v824 = vadd.f32 0.0, %v823
        %825 = vmatprep.mubr.f32.mxu0 %v514
        %826 = vmatmul.mubr.f32.gmra.mxu0 %v513
        %v827 = vpop.f32.mrf.mxu0
        %v828 = vadd.f32 0.0, %v827
        %v829 = vpop.f32.mrf.mxu0
        %v830 = vadd.f32 0.0, %v829
        %831 = vmatprep.mubr.f32.mxu0 %v516
        %832 = vmatmul.mubr.f32.gmra.mxu0 %v515
        %v833 = vpop.f32.mrf.mxu0
        %v834 = vadd.f32 0.0, %v833
        %v835 = vpop.f32.mrf.mxu0
        %v836 = vadd.f32 0.0, %v835
        %837 = vmatprep.mubr.f32.mxu0 %v518
        %838 = vmatmul.mubr.f32.gmra.mxu0 %v517
        %v839 = vpop.f32.mrf.mxu0
        %v840 = vadd.f32 0.0, %v839
        %v841 = vpop.f32.mrf.mxu0
        %v842 = vadd.f32 0.0, %v841
        %843 = vmatprep.mubr.f32.mxu0 %v520
        %844 = vmatmul.mubr.f32.gmra.mxu0 %v519
        %v845 = vpop.f32.mrf.mxu0
        %v846 = vadd.f32 0.0, %v845
        %v847 = vpop.f32.mrf.mxu0
        %v848 = vadd.f32 0.0, %v847
        %849 = vmatprep.mubr.f32.mxu0 %v522
        %850 = vmatmul.mubr.f32.gmra.mxu0 %v521
        %v851 = vpop.f32.mrf.mxu0
        %v852 = vadd.f32 0.0, %v851
        %v853 = vpop.f32.mrf.mxu0
        %v854 = vadd.f32 0.0, %v853
        %855 = vmatprep.mubr.f32.mxu0 %v524
        %856 = vmatmul.mubr.f32.gmra.mxu0 %v523
        %v857 = vpop.f32.mrf.mxu0
        %v858 = vadd.f32 0.0, %v857
        %v859 = vpop.f32.mrf.mxu0
        %v860 = vadd.f32 0.0, %v859
        %861 = vmatprep.mubr.f32.mxu0 %v526
        %862 = vmatmul.mubr.f32.gmra.mxu0 %v525
        %v863 = vpop.f32.mrf.mxu0
        %v864 = vadd.f32 0.0, %v863
        %v865 = vpop.f32.mrf.mxu0
        %v866 = vadd.f32 0.0, %v865
        %867 = vmatprep.mubr.f32.mxu0 %v528
        %868 = vmatmul.mubr.f32.gmra.mxu0 %v527
        %v869 = vpop.f32.mrf.mxu0
        %v870 = vadd.f32 0.0, %v869
        %v871 = vpop.f32.mrf.mxu0
        %v872 = vadd.f32 0.0, %v871
        %873 = vmatprep.mubr.f32.mxu0 %v530
        %874 = vmatmul.mubr.f32.gmra.mxu0 %v529
        %v875 = vpop.f32.mrf.mxu0
        %v876 = vadd.f32 0.0, %v875
        %v877 = vpop.f32.mrf.mxu0
        %v878 = vadd.f32 0.0, %v877
        %879 = vmatprep.mubr.f32.mxu0 %v532
        %880 = vmatmul.mubr.f32.gmra.mxu0 %v531
        %v881 = vpop.f32.mrf.mxu0
        %v882 = vadd.f32 0.0, %v881
        %v883 = vpop.f32.mrf.mxu0
        %v884 = vadd.f32 0.0, %v883
        %885 = vmatprep.mubr.f32.mxu0 %v534
        %886 = vmatmul.mubr.f32.gmra.mxu0 %v533
        %v887 = vpop.f32.mrf.mxu0
        %v888 = vadd.f32 0.0, %v887
        %v889 = vpop.f32.mrf.mxu0
        %v890 = vadd.f32 0.0, %v889
        %891 = vmatprep.mubr.f32.mxu0 %v536
        %892 = vmatmul.mubr.f32.gmra.mxu0 %v535
        %v893 = vpop.f32.mrf.mxu0
        %v894 = vadd.f32 0.0, %v893
        %v895 = vpop.f32.mrf.mxu0
        %v896 = vadd.f32 0.0, %v895
        %897 = vmatprep.mubr.f32.mxu0 %v538
        %898 = vmatmul.mubr.f32.gmra.mxu0 %v537
        %v899 = vpop.f32.mrf.mxu0
        %v900 = vadd.f32 0.0, %v899
        %v901 = vpop.f32.mrf.mxu0
        %v902 = vadd.f32 0.0, %v901
        %903 = vmatprep.mubr.f32.mxu0 %v540
        %904 = vmatmul.mubr.f32.gmra.mxu0 %v539
        %v905 = vpop.f32.mrf.mxu0
        %v906 = vadd.f32 0.0, %v905
        %v907 = vpop.f32.mrf.mxu0
        %v908 = vadd.f32 0.0, %v907
        %909 = vmatprep.mubr.f32.mxu0 %v542
        %910 = vmatmul.mubr.f32.gmra.mxu0 %v541
        %v911 = vpop.f32.mrf.mxu0
        %v912 = vadd.f32 0.0, %v911
        %v913 = vpop.f32.mrf.mxu0
        %v914 = vadd.f32 0.0, %v913
        %915 = vmatprep.mubr.f32.mxu0 %v544
        %916 = vmatmul.mubr.f32.gmra.mxu0 %v543
        %v917 = vpop.f32.mrf.mxu0
        %v918 = vadd.f32 0.0, %v917
        %v919 = vpop.f32.mrf.mxu0
        %v920 = vadd.f32 0.0, %v919
        %921 = vmatprep.mubr.f32.mxu0 %v546
        %922 = vmatmul.mubr.f32.gmra.mxu0 %v545
        %v923 = vpop.f32.mrf.mxu0
        %v924 = vadd.f32 0.0, %v923
        %v925 = vpop.f32.mrf.mxu0
        %v926 = vadd.f32 0.0, %v925
        %927 = vmatprep.mubr.f32.mxu0 %v548
        %928 = vmatmul.mubr.f32.gmra.mxu0 %v547
        %v929 = vpop.f32.mrf.mxu0
        %v930 = vadd.f32 0.0, %v929
        %v931 = vpop.f32.mrf.mxu0
        %v932 = vadd.f32 0.0, %v931
        %933 = vmatprep.mubr.f32.mxu0 %v550
        %934 = vmatmul.mubr.f32.gmra.mxu0 %v549
        %v935 = vpop.f32.mrf.mxu0
        %v936 = vadd.f32 0.0, %v935
        %v937 = vpop.f32.mrf.mxu0
        %v938 = vadd.f32 0.0, %v937
        %939 = vmatprep.mubr.f32.mxu0 %v552
        %940 = vmatmul.mubr.f32.gmra.mxu0 %v551
        %v941 = vpop.f32.mrf.mxu0
        %v942 = vadd.f32 0.0, %v941
        %v943 = vpop.f32.mrf.mxu0
        %v944 = vadd.f32 0.0, %v943
        %945 = vmatprep.mubr.f32.mxu0 %v554
        %946 = vmatmul.mubr.f32.gmra.mxu0 %v553
        %v947 = vpop.f32.mrf.mxu0
        %v948 = vadd.f32 0.0, %v947
        %v949 = vpop.f32.mrf.mxu0
        %v950 = vadd.f32 0.0, %v949
        %951 = vmatprep.mubr.f32.mxu0 %v556
        %952 = vmatmul.mubr.f32.gmra.mxu0 %v555
        %v953 = vpop.f32.mrf.mxu0
        %v954 = vadd.f32 0.0, %v953
        %v955 = vpop.f32.mrf.mxu0
        %v956 = vadd.f32 0.0, %v955
        %957 = vmatprep.mubr.f32.mxu0 %v558
        %958 = vmatmul.mubr.f32.gmra.mxu0 %v557
        %v959 = vpop.f32.mrf.mxu0
        %v960 = vadd.f32 0.0, %v959
        %v961 = vpop.f32.mrf.mxu0
        %v962 = vadd.f32 0.0, %v961
        %963 = vmatprep.mubr.f32.mxu0 %v560
        %964 = vmatmul.mubr.f32.gmra.mxu0 %v559
        %v965 = vpop.f32.mrf.mxu0
        %v966 = vadd.f32 0.0, %v965
        %v967 = vpop.f32.mrf.mxu0
        %v968 = vadd.f32 0.0, %v967
        %969 = vmatprep.mubr.f32.mxu0 %v562
        %970 = vmatmul.mubr.f32.gmra.mxu0 %v561
        %v971 = vpop.f32.mrf.mxu0
        %v972 = vadd.f32 0.0, %v971
        %v973 = vpop.f32.mrf.mxu0
        %v974 = vadd.f32 0.0, %v973
        %975 = vmatprep.mubr.f32.mxu0 %v564
        %976 = vmatmul.mubr.f32.gmra.mxu0 %v563
        %v977 = vpop.f32.mrf.mxu0
        %v978 = vadd.f32 0.0, %v977
        %v979 = vpop.f32.mrf.mxu0
        %v980 = vadd.f32 0.0, %v979
        %981 = vdwg.mxu0
        %v982 = vadd.f32 %v373, %v696
        %v983 = vadd.f32 %v374, %v698
        %v984 = vadd.f32 %v375, %v702
        %v985 = vadd.f32 %v376, %v704
        %v986 = vadd.f32 %v377, %v708
        %v987 = vadd.f32 %v378, %v710
        %v988 = vadd.f32 %v379, %v714
        %v989 = vadd.f32 %v380, %v716
        %v990 = vadd.f32 %v381, %v720
        %v991 = vadd.f32 %v382, %v722
        %v992 = vadd.f32 %v383, %v726
        %v993 = vadd.f32 %v384, %v728
        %v994 = vadd.f32 %v385, %v732
        %v995 = vadd.f32 %v386, %v734
        %v996 = vadd.f32 %v387, %v738
        %v997 = vadd.f32 %v388, %v740
        %v998 = vadd.f32 %v389, %v744
        %v999 = vadd.f32 %v390, %v746
        %v1000 = vadd.f32 %v391, %v750
        %v1001 = vadd.f32 %v392, %v752
        %v1002 = vadd.f32 %v393, %v756
        %v1003 = vadd.f32 %v394, %v758
        %v1004 = vadd.f32 %v395, %v762
        %v1005 = vadd.f32 %v396, %v764
        %v1006 = vadd.f32 %v397, %v768
        %v1007 = vadd.f32 %v398, %v770
        %v1008 = vadd.f32 %v399, %v774
        %v1009 = vadd.f32 %v400, %v776
        %v1010 = vadd.f32 %v401, %v780
        %v1011 = vadd.f32 %v402, %v782
        %v1012 = vadd.f32 %v403, %v786
        %v1013 = vadd.f32 %v404, %v788
        %v1014 = vadd.f32 %v405, %v792
        %v1015 = vadd.f32 %v406, %v794
        %v1016 = vadd.f32 %v407, %v798
        %v1017 = vadd.f32 %v408, %v800
        %v1018 = vadd.f32 %v409, %v804
        %v1019 = vadd.f32 %v410, %v806
        %v1020 = vadd.f32 %v411, %v810
        %v1021 = vadd.f32 %v412, %v812
        %v1022 = vadd.f32 %v413, %v816
        %v1023 = vadd.f32 %v414, %v818
        %v1024 = vadd.f32 %v415, %v822
        %v1025 = vadd.f32 %v416, %v824
        %v1026 = vadd.f32 %v417, %v828
        %v1027 = vadd.f32 %v418, %v830
        %v1028 = vadd.f32 %v419, %v834
        %v1029 = vadd.f32 %v420, %v836
        %v1030 = vadd.f32 %v421, %v840
        %v1031 = vadd.f32 %v422, %v842
        %v1032 = vadd.f32 %v423, %v846
        %v1033 = vadd.f32 %v424, %v848
        %v1034 = vadd.f32 %v425, %v852
        %v1035 = vadd.f32 %v426, %v854
        %v1036 = vadd.f32 %v427, %v858
        %v1037 = vadd.f32 %v428, %v860
        %v1038 = vadd.f32 %v429, %v864
        %v1039 = vadd.f32 %v430, %v866
        %v1040 = vadd.f32 %v431, %v870
        %v1041 = vadd.f32 %v432, %v872
        %v1042 = vadd.f32 %v433, %v876
        %v1043 = vadd.f32 %v434, %v878
        %v1044 = vadd.f32 %v435, %v882
        %v1045 = vadd.f32 %v436, %v884
        %v1046 = vadd.f32 %v437, %v888
        %v1047 = vadd.f32 %v438, %v890
        %v1048 = vadd.f32 %v439, %v894
        %v1049 = vadd.f32 %v440, %v896
        %v1050 = vadd.f32 %v441, %v900
        %v1051 = vadd.f32 %v442, %v902
        %v1052 = vadd.f32 %v443, %v906
        %v1053 = vadd.f32 %v444, %v908
        %v1054 = vadd.f32 %v445, %v912
        %v1055 = vadd.f32 %v446, %v914
        %v1056 = vadd.f32 %v447, %v918
        %v1057 = vadd.f32 %v448, %v920
        %v1058 = vadd.f32 %v449, %v924
        %v1059 = vadd.f32 %v450, %v926
        %v1060 = vadd.f32 %v451, %v930
        %v1061 = vadd.f32 %v452, %v932
        %v1062 = vadd.f32 %v453, %v936
        %v1063 = vadd.f32 %v454, %v938
        %v1064 = vadd.f32 %v455, %v942
        %v1065 = vadd.f32 %v456, %v944
        %v1066 = vadd.f32 %v457, %v948
        %v1067 = vadd.f32 %v458, %v950
        %v1068 = vadd.f32 %v459, %v954
        %v1069 = vadd.f32 %v460, %v956
        %v1070 = vadd.f32 %v461, %v960
        %v1071 = vadd.f32 %v462, %v962
        %v1072 = vadd.f32 %v463, %v966
        %v1073 = vadd.f32 %v464, %v968
        %v1074 = vadd.f32 %v465, %v972
        %v1075 = vadd.f32 %v466, %v974
        %v1076 = vadd.f32 %v467, %v978
        %v1077 = vadd.f32 %v468, %v980
        %1078 = vst [vmem:[#allocation2] sm:$0xff] %v982
        %1079 = vst [vmem:[#allocation2 + $0x8] sm:$0xff] %v983
        %1080 = vst [vmem:[#allocation2 + $0x10] sm:$0xff] %v984
        %1081 = vst [vmem:[#allocation2 + $0x18] sm:$0xff] %v985
        %1082 = vst [vmem:[#allocation2 + $0x20] sm:$0xff] %v986
        %1083 = vst [vmem:[#allocation2 + $0x28] sm:$0xff] %v987
        %1084 = vst [vmem:[#allocation2 + $0x30] sm:$0xff] %v988
        %1085 = vst [vmem:[#allocation2 + $0x38] sm:$0xff] %v989
        %1086 = vst [vmem:[#allocation2 + $0x40] sm:$0xff] %v990
        %1087 = vst [vmem:[#allocation2 + $0x48] sm:$0xff] %v991
        %1088 = vst [vmem:[#allocation2 + $0x50] sm:$0xff] %v992
        %1089 = vst [vmem:[#allocation2 + $0x58] sm:$0xff] %v993
        %1090 = vst [vmem:[#allocation2 + $0x60] sm:$0xff] %v994
        %1091 = vst [vmem:[#allocation2 + $0x68] sm:$0xff] %v995
        %1092 = vst [vmem:[#allocation2 + $0x70] sm:$0xff] %v996
        %1093 = vst [vmem:[#allocation2 + $0x78] sm:$0xff] %v997
        %1094 = vst [vmem:[#allocation2 + $0x80] sm:$0xff] %v998
        %1095 = vst [vmem:[#allocation2 + $0x88] sm:$0xff] %v999
        %1096 = vst [vmem:[#allocation2 + $0x90] sm:$0xff] %v1000
        %1097 = vst [vmem:[#allocation2 + $0x98] sm:$0xff] %v1001
        %1098 = vst [vmem:[#allocation2 + $0xa0] sm:$0xff] %v1002
        %1099 = vst [vmem:[#allocation2 + $0xa8] sm:$0xff] %v1003
        %1100 = vst [vmem:[#allocation2 + $0xb0] sm:$0xff] %v1004
        %1101 = vst [vmem:[#allocation2 + $0xb8] sm:$0xff] %v1005
        %1102 = vst [vmem:[#allocation2 + $0xc0] sm:$0xff] %v1006
        %1103 = vst [vmem:[#allocation2 + $0xc8] sm:$0xff] %v1007
        %1104 = vst [vmem:[#allocation2 + $0xd0] sm:$0xff] %v1008
        %1105 = vst [vmem:[#allocation2 + $0xd8] sm:$0xff] %v1009
        %1106 = vst [vmem:[#allocation2 + $0xe0] sm:$0xff] %v1010
        %1107 = vst [vmem:[#allocation2 + $0xe8] sm:$0xff] %v1011
        %1108 = vst [vmem:[#allocation2 + $0xf0] sm:$0xff] %v1012
        %1109 = vst [vmem:[#allocation2 + $0xf8] sm:$0xff] %v1013
        %1110 = vst [vmem:[#allocation2 + $0x100] sm:$0xff] %v1014
        %1111 = vst [vmem:[#allocation2 + $0x108] sm:$0xff] %v1015
        %1112 = vst [vmem:[#allocation2 + $0x110] sm:$0xff] %v1016
        %1113 = vst [vmem:[#allocation2 + $0x118] sm:$0xff] %v1017
        %1114 = vst [vmem:[#allocation2 + $0x120] sm:$0xff] %v1018
        %1115 = vst [vmem:[#allocation2 + $0x128] sm:$0xff] %v1019
        %1116 = vst [vmem:[#allocation2 + $0x130] sm:$0xff] %v1020
        %1117 = vst [vmem:[#allocation2 + $0x138] sm:$0xff] %v1021
        %1118 = vst [vmem:[#allocation2 + $0x140] sm:$0xff] %v1022
        %1119 = vst [vmem:[#allocation2 + $0x148] sm:$0xff] %v1023
        %1120 = vst [vmem:[#allocation2 + $0x150] sm:$0xff] %v1024
        %1121 = vst [vmem:[#allocation2 + $0x158] sm:$0xff] %v1025
        %1122 = vst [vmem:[#allocation2 + $0x160] sm:$0xff] %v1026
        %1123 = vst [vmem:[#allocation2 + $0x168] sm:$0xff] %v1027
        %1124 = vst [vmem:[#allocation2 + $0x170] sm:$0xff] %v1028
        %1125 = vst [vmem:[#allocation2 + $0x178] sm:$0xff] %v1029
        %1126 = vst [vmem:[#allocation2 + $0x180] sm:$0xff] %v1030
        %1127 = vst [vmem:[#allocation2 + $0x188] sm:$0xff] %v1031
        %1128 = vst [vmem:[#allocation2 + $0x190] sm:$0xff] %v1032
        %1129 = vst [vmem:[#allocation2 + $0x198] sm:$0xff] %v1033
        %1130 = vst [vmem:[#allocation2 + $0x1a0] sm:$0xff] %v1034
        %1131 = vst [vmem:[#allocation2 + $0x1a8] sm:$0xff] %v1035
        %1132 = vst [vmem:[#allocation2 + $0x1b0] sm:$0xff] %v1036
        %1133 = vst [vmem:[#allocation2 + $0x1b8] sm:$0xff] %v1037
        %1134 = vst [vmem:[#allocation2 + $0x1c0] sm:$0xff] %v1038
        %1135 = vst [vmem:[#allocation2 + $0x1c8] sm:$0xff] %v1039
        %1136 = vst [vmem:[#allocation2 + $0x1d0] sm:$0xff] %v1040
        %1137 = vst [vmem:[#allocation2 + $0x1d8] sm:$0xff] %v1041
        %1138 = vst [vmem:[#allocation2 + $0x1e0] sm:$0xff] %v1042
        %1139 = vst [vmem:[#allocation2 + $0x1e8] sm:$0xff] %v1043
        %1140 = vst [vmem:[#allocation2 + $0x1f0] sm:$0xff] %v1044
        %1141 = vst [vmem:[#allocation2 + $0x1f8] sm:$0xff] %v1045
        %1142 = vst [vmem:[#allocation2 + $0x200] sm:$0xff] %v1046
        %1143 = vst [vmem:[#allocation2 + $0x208] sm:$0xff] %v1047
        %1144 = vst [vmem:[#allocation2 + $0x210] sm:$0xff] %v1048
        %1145 = vst [vmem:[#allocation2 + $0x218] sm:$0xff] %v1049
        %1146 = vst [vmem:[#allocation2 + $0x220] sm:$0xff] %v1050
        %1147 = vst [vmem:[#allocation2 + $0x228] sm:$0xff] %v1051
        %1148 = vst [vmem:[#allocation2 + $0x230] sm:$0xff] %v1052
        %1149 = vst [vmem:[#allocation2 + $0x238] sm:$0xff] %v1053
        %1150 = vst [vmem:[#allocation2 + $0x240] sm:$0xff] %v1054
        %1151 = vst [vmem:[#allocation2 + $0x248] sm:$0xff] %v1055
        %1152 = vst [vmem:[#allocation2 + $0x250] sm:$0xff] %v1056
        %1153 = vst [vmem:[#allocation2 + $0x258] sm:$0xff] %v1057
        %1154 = vst [vmem:[#allocation2 + $0x260] sm:$0xff] %v1058
        %1155 = vst [vmem:[#allocation2 + $0x268] sm:$0xff] %v1059
        %1156 = vst [vmem:[#allocation2 + $0x270] sm:$0xff] %v1060
        %1157 = vst [vmem:[#allocation2 + $0x278] sm:$0xff] %v1061
        %1158 = vst [vmem:[#allocation2 + $0x280] sm:$0xff] %v1062
        %1159 = vst [vmem:[#allocation2 + $0x288] sm:$0xff] %v1063
        %1160 = vst [vmem:[#allocation2 + $0x290] sm:$0xff] %v1064
        %1161 = vst [vmem:[#allocation2 + $0x298] sm:$0xff] %v1065
        %1162 = vst [vmem:[#allocation2 + $0x2a0] sm:$0xff] %v1066
        %1163 = vst [vmem:[#allocation2 + $0x2a8] sm:$0xff] %v1067
        %1164 = vst [vmem:[#allocation2 + $0x2b0] sm:$0xff] %v1068
        %1165 = vst [vmem:[#allocation2 + $0x2b8] sm:$0xff] %v1069
        %1166 = vst [vmem:[#allocation2 + $0x2c0] sm:$0xff] %v1070
        %1167 = vst [vmem:[#allocation2 + $0x2c8] sm:$0xff] %v1071
        %1168 = vst [vmem:[#allocation2 + $0x2d0] sm:$0xff] %v1072
        %1169 = vst [vmem:[#allocation2 + $0x2d8] sm:$0xff] %v1073
        %1170 = vst [vmem:[#allocation2 + $0x2e0] sm:$0xff] %v1074
        %1171 = vst [vmem:[#allocation2 + $0x2e8] sm:$0xff] %v1075
        %1172 = vst [vmem:[#allocation2 + $0x2f0] sm:$0xff] %v1076
        %1173 = vst [vmem:[#allocation2 + $0x2f8] sm:$0xff] %v1077
        // Predicated region
        $region37: #{kdgqa_forward.5} parent=31 // pred_check
          %p1174 = pneg %p273
        $region38: #{kdgqa_forward.5} parent=31 // pred_check_branch
          %1176 = sbr.rel (%p1174) target = $region40
        $region39: #{kdgqa_forward.5} parent=31 // pred_region
          %v1177 = vld [vmem:[#allocation2] sm:$0xff]
          %v1178 = vld [vmem:[#allocation2 + $0x8] sm:$0xff]
          %v1179 = vld [vmem:[#allocation2 + $0x10] sm:$0xff]
          %v1180 = vld [vmem:[#allocation2 + $0x18] sm:$0xff]
          %v1181 = vld [vmem:[#allocation2 + $0x20] sm:$0xff]
          %v1182 = vld [vmem:[#allocation2 + $0x28] sm:$0xff]
          %v1183 = vld [vmem:[#allocation2 + $0x30] sm:$0xff]
          %v1184 = vld [vmem:[#allocation2 + $0x38] sm:$0xff]
          %v1185 = vld [vmem:[#allocation2 + $0x40] sm:$0xff]
          %v1186 = vld [vmem:[#allocation2 + $0x48] sm:$0xff]
          %v1187 = vld [vmem:[#allocation2 + $0x50] sm:$0xff]
          %v1188 = vld [vmem:[#allocation2 + $0x58] sm:$0xff]
          %v1189 = vld [vmem:[#allocation2 + $0x60] sm:$0xff]
          %v1190 = vld [vmem:[#allocation2 + $0x68] sm:$0xff]
          %v1191 = vld [vmem:[#allocation2 + $0x70] sm:$0xff]
          %v1192 = vld [vmem:[#allocation2 + $0x78] sm:$0xff]
          %v1193 = vld [vmem:[#allocation2 + $0x80] sm:$0xff]
          %v1194 = vld [vmem:[#allocation2 + $0x88] sm:$0xff]
          %v1195 = vld [vmem:[#allocation2 + $0x90] sm:$0xff]
          %v1196 = vld [vmem:[#allocation2 + $0x98] sm:$0xff]
          %v1197 = vld [vmem:[#allocation2 + $0xa0] sm:$0xff]
          %v1198 = vld [vmem:[#allocation2 + $0xa8] sm:$0xff]
          %v1199 = vld [vmem:[#allocation2 + $0xb0] sm:$0xff]
          %v1200 = vld [vmem:[#allocation2 + $0xb8] sm:$0xff]
          %v1201 = vld [vmem:[#allocation2 + $0xc0] sm:$0xff]
          %v1202 = vld [vmem:[#allocation2 + $0xc8] sm:$0xff]
          %v1203 = vld [vmem:[#allocation2 + $0xd0] sm:$0xff]
          %v1204 = vld [vmem:[#allocation2 + $0xd8] sm:$0xff]
          %v1205 = vld [vmem:[#allocation2 + $0xe0] sm:$0xff]
          %v1206 = vld [vmem:[#allocation2 + $0xe8] sm:$0xff]
          %v1207 = vld [vmem:[#allocation2 + $0xf0] sm:$0xff]
          %v1208 = vld [vmem:[#allocation2 + $0xf8] sm:$0xff]
          %v1209 = vld [vmem:[#allocation2 + $0x100] sm:$0xff]
          %v1210 = vld [vmem:[#allocation2 + $0x108] sm:$0xff]
          %v1211 = vld [vmem:[#allocation2 + $0x110] sm:$0xff]
          %v1212 = vld [vmem:[#allocation2 + $0x118] sm:$0xff]
          %v1213 = vld [vmem:[#allocation2 + $0x120] sm:$0xff]
          %v1214 = vld [vmem:[#allocation2 + $0x128] sm:$0xff]
          %v1215 = vld [vmem:[#allocation2 + $0x130] sm:$0xff]
          %v1216 = vld [vmem:[#allocation2 + $0x138] sm:$0xff]
          %v1217 = vld [vmem:[#allocation2 + $0x140] sm:$0xff]
          %v1218 = vld [vmem:[#allocation2 + $0x148] sm:$0xff]
          %v1219 = vld [vmem:[#allocation2 + $0x150] sm:$0xff]
          %v1220 = vld [vmem:[#allocation2 + $0x158] sm:$0xff]
          %v1221 = vld [vmem:[#allocation2 + $0x160] sm:$0xff]
          %v1222 = vld [vmem:[#allocation2 + $0x168] sm:$0xff]
          %v1223 = vld [vmem:[#allocation2 + $0x170] sm:$0xff]
          %v1224 = vld [vmem:[#allocation2 + $0x178] sm:$0xff]
          %v1225 = vld [vmem:[#allocation2 + $0x180] sm:$0xff]
          %v1226 = vld [vmem:[#allocation2 + $0x188] sm:$0xff]
          %v1227 = vld [vmem:[#allocation2 + $0x190] sm:$0xff]
          %v1228 = vld [vmem:[#allocation2 + $0x198] sm:$0xff]
          %v1229 = vld [vmem:[#allocation2 + $0x1a0] sm:$0xff]
          %v1230 = vld [vmem:[#allocation2 + $0x1a8] sm:$0xff]
          %v1231 = vld [vmem:[#allocation2 + $0x1b0] sm:$0xff]
          %v1232 = vld [vmem:[#allocation2 + $0x1b8] sm:$0xff]
          %v1233 = vld [vmem:[#allocation2 + $0x1c0] sm:$0xff]
          %v1234 = vld [vmem:[#allocation2 + $0x1c8] sm:$0xff]
          %v1235 = vld [vmem:[#allocation2 + $0x1d0] sm:$0xff]
          %v1236 = vld [vmem:[#allocation2 + $0x1d8] sm:$0xff]
          %v1237 = vld [vmem:[#allocation2 + $0x1e0] sm:$0xff]
          %v1238 = vld [vmem:[#allocation2 + $0x1e8] sm:$0xff]
          %v1239 = vld [vmem:[#allocation2 + $0x1f0] sm:$0xff]
          %v1240 = vld [vmem:[#allocation2 + $0x1f8] sm:$0xff]
          %v1241 = vld [vmem:[#allocation2 + $0x200] sm:$0xff]
          %v1242 = vld [vmem:[#allocation2 + $0x208] sm:$0xff]
          %v1243 = vld [vmem:[#allocation2 + $0x210] sm:$0xff]
          %v1244 = vld [vmem:[#allocation2 + $0x218] sm:$0xff]
          %v1245 = vld [vmem:[#allocation2 + $0x220] sm:$0xff]
          %v1246 = vld [vmem:[#allocation2 + $0x228] sm:$0xff]
          %v1247 = vld [vmem:[#allocation2 + $0x230] sm:$0xff]
          %v1248 = vld [vmem:[#allocation2 + $0x238] sm:$0xff]
          %v1249 = vld [vmem:[#allocation2 + $0x240] sm:$0xff]
          %v1250 = vld [vmem:[#allocation2 + $0x248] sm:$0xff]
          %v1251 = vld [vmem:[#allocation2 + $0x250] sm:$0xff]
          %v1252 = vld [vmem:[#allocation2 + $0x258] sm:$0xff]
          %v1253 = vld [vmem:[#allocation2 + $0x260] sm:$0xff]
          %v1254 = vld [vmem:[#allocation2 + $0x268] sm:$0xff]
          %v1255 = vld [vmem:[#allocation2 + $0x270] sm:$0xff]
          %v1256 = vld [vmem:[#allocation2 + $0x278] sm:$0xff]
          %v1257 = vld [vmem:[#allocation2 + $0x280] sm:$0xff]
          %v1258 = vld [vmem:[#allocation2 + $0x288] sm:$0xff]
          %v1259 = vld [vmem:[#allocation2 + $0x290] sm:$0xff]
          %v1260 = vld [vmem:[#allocation2 + $0x298] sm:$0xff]
          %v1261 = vld [vmem:[#allocation2 + $0x2a0] sm:$0xff]
          %v1262 = vld [vmem:[#allocation2 + $0x2a8] sm:$0xff]
          %v1263 = vld [vmem:[#allocation2 + $0x2b0] sm:$0xff]
          %v1264 = vld [vmem:[#allocation2 + $0x2b8] sm:$0xff]
          %v1265 = vld [vmem:[#allocation2 + $0x2c0] sm:$0xff]
          %v1266 = vld [vmem:[#allocation2 + $0x2c8] sm:$0xff]
          %v1267 = vld [vmem:[#allocation2 + $0x2d0] sm:$0xff]
          %v1268 = vld [vmem:[#allocation2 + $0x2d8] sm:$0xff]
          %v1269 = vld [vmem:[#allocation2 + $0x2e0] sm:$0xff]
          %v1270 = vld [vmem:[#allocation2 + $0x2e8] sm:$0xff]
          %v1271 = vld [vmem:[#allocation2 + $0x2f0] sm:$0xff]
          %v1272 = vld [vmem:[#allocation2 + $0x2f8] sm:$0xff]
          %v1273 = vld [vmem:[%s269] sm:$0x3]
          %v1275 = vlaneseq
          %v1276 = vshrl.u32 %v1275, 7
          %v1277 = vsub.s32 0, %v1276
          %v1278 = vrot.slane %v1273, %v1277
          %v1279 = vlaneseq
          %v1280 = vshrl.u32 %v1279, 7
          %v1281 = vsub.s32 1, %v1280
          %v1282 = vrot.slane %v1273, %v1281
          %v1285 = vadd.f32 %v1177, %v1278
          %v1286 = vadd.f32 %v1178, %v1282
          %v1287 = vadd.f32 %v1179, %v1278
          %v1288 = vadd.f32 %v1180, %v1282
          %v1289 = vadd.f32 %v1181, %v1278
          %v1290 = vadd.f32 %v1182, %v1282
          %v1291 = vadd.f32 %v1183, %v1278
          %v1292 = vadd.f32 %v1184, %v1282
          %v1293 = vadd.f32 %v1185, %v1278
          %v1294 = vadd.f32 %v1186, %v1282
          %v1295 = vadd.f32 %v1187, %v1278
          %v1296 = vadd.f32 %v1188, %v1282
          %v1297 = vadd.f32 %v1189, %v1278
          %v1298 = vadd.f32 %v1190, %v1282
          %v1299 = vadd.f32 %v1191, %v1278
          %v1300 = vadd.f32 %v1192, %v1282
          %v1301 = vadd.f32 %v1193, %v1278
          %v1302 = vadd.f32 %v1194, %v1282
          %v1303 = vadd.f32 %v1195, %v1278
          %v1304 = vadd.f32 %v1196, %v1282
          %v1305 = vadd.f32 %v1197, %v1278
          %v1306 = vadd.f32 %v1198, %v1282
          %v1307 = vadd.f32 %v1199, %v1278
          %v1308 = vadd.f32 %v1200, %v1282
          %v1309 = vadd.f32 %v1201, %v1278
          %v1310 = vadd.f32 %v1202, %v1282
          %v1311 = vadd.f32 %v1203, %v1278
          %v1312 = vadd.f32 %v1204, %v1282
          %v1313 = vadd.f32 %v1205, %v1278
          %v1314 = vadd.f32 %v1206, %v1282
          %v1315 = vadd.f32 %v1207, %v1278
          %v1316 = vadd.f32 %v1208, %v1282
          %v1317 = vadd.f32 %v1209, %v1278
          %v1318 = vadd.f32 %v1210, %v1282
          %v1319 = vadd.f32 %v1211, %v1278
          %v1320 = vadd.f32 %v1212, %v1282
          %v1321 = vadd.f32 %v1213, %v1278
          %v1322 = vadd.f32 %v1214, %v1282
          %v1323 = vadd.f32 %v1215, %v1278
          %v1324 = vadd.f32 %v1216, %v1282
          %v1325 = vadd.f32 %v1217, %v1278
          %v1326 = vadd.f32 %v1218, %v1282
          %v1327 = vadd.f32 %v1219, %v1278
          %v1328 = vadd.f32 %v1220, %v1282
          %v1329 = vadd.f32 %v1221, %v1278
          %v1330 = vadd.f32 %v1222, %v1282
          %v1331 = vadd.f32 %v1223, %v1278
          %v1332 = vadd.f32 %v1224, %v1282
          %v1333 = vadd.f32 %v1225, %v1278
          %v1334 = vadd.f32 %v1226, %v1282
          %v1335 = vadd.f32 %v1227, %v1278
          %v1336 = vadd.f32 %v1228, %v1282
          %v1337 = vadd.f32 %v1229, %v1278
          %v1338 = vadd.f32 %v1230, %v1282
          %v1339 = vadd.f32 %v1231, %v1278
          %v1340 = vadd.f32 %v1232, %v1282
          %v1341 = vadd.f32 %v1233, %v1278
          %v1342 = vadd.f32 %v1234, %v1282
          %v1343 = vadd.f32 %v1235, %v1278
          %v1344 = vadd.f32 %v1236, %v1282
          %v1345 = vadd.f32 %v1237, %v1278
          %v1346 = vadd.f32 %v1238, %v1282
          %v1347 = vadd.f32 %v1239, %v1278
          %v1348 = vadd.f32 %v1240, %v1282
          %v1349 = vadd.f32 %v1241, %v1278
          %v1350 = vadd.f32 %v1242, %v1282
          %v1351 = vadd.f32 %v1243, %v1278
          %v1352 = vadd.f32 %v1244, %v1282
          %v1353 = vadd.f32 %v1245, %v1278
          %v1354 = vadd.f32 %v1246, %v1282
          %v1355 = vadd.f32 %v1247, %v1278
          %v1356 = vadd.f32 %v1248, %v1282
          %v1357 = vadd.f32 %v1249, %v1278
          %v1358 = vadd.f32 %v1250, %v1282
          %v1359 = vadd.f32 %v1251, %v1278
          %v1360 = vadd.f32 %v1252, %v1282
          %v1361 = vadd.f32 %v1253, %v1278
          %v1362 = vadd.f32 %v1254, %v1282
          %v1363 = vadd.f32 %v1255, %v1278
          %v1364 = vadd.f32 %v1256, %v1282
          %v1365 = vadd.f32 %v1257, %v1278
          %v1366 = vadd.f32 %v1258, %v1282
          %v1367 = vadd.f32 %v1259, %v1278
          %v1368 = vadd.f32 %v1260, %v1282
          %v1369 = vadd.f32 %v1261, %v1278
          %v1370 = vadd.f32 %v1262, %v1282
          %v1371 = vadd.f32 %v1263, %v1278
          %v1372 = vadd.f32 %v1264, %v1282
          %v1373 = vadd.f32 %v1265, %v1278
          %v1374 = vadd.f32 %v1266, %v1282
          %v1375 = vadd.f32 %v1267, %v1278
          %v1376 = vadd.f32 %v1268, %v1282
          %v1377 = vadd.f32 %v1269, %v1278
          %v1378 = vadd.f32 %v1270, %v1282
          %v1379 = vadd.f32 %v1271, %v1278
          %v1380 = vadd.f32 %v1272, %v1282
          %1381 = vst [vmem:[%s241] sm:$0xff] %v1285
          %1382 = vst [vmem:[%s241 + $0x8] sm:$0xff] %v1286
          %1383 = vst [vmem:[%s241 + $0x10] sm:$0xff] %v1287
          %1384 = vst [vmem:[%s241 + $0x18] sm:$0xff] %v1288
          %1385 = vst [vmem:[%s241 + $0x20] sm:$0xff] %v1289
          %1386 = vst [vmem:[%s241 + $0x28] sm:$0xff] %v1290
          %1387 = vst [vmem:[%s241 + $0x30] sm:$0xff] %v1291
          %1388 = vst [vmem:[%s241 + $0x38] sm:$0xff] %v1292
          %1389 = vst [vmem:[%s241 + $0x40] sm:$0xff] %v1293
          %1390 = vst [vmem:[%s241 + $0x48] sm:$0xff] %v1294
          %1391 = vst [vmem:[%s241 + $0x50] sm:$0xff] %v1295
          %1392 = vst [vmem:[%s241 + $0x58] sm:$0xff] %v1296
          %1393 = vst [vmem:[%s241 + $0x60] sm:$0xff] %v1297
          %1394 = vst [vmem:[%s241 + $0x68] sm:$0xff] %v1298
          %1395 = vst [vmem:[%s241 + $0x70] sm:$0xff] %v1299
          %1396 = vst [vmem:[%s241 + $0x78] sm:$0xff] %v1300
          %1397 = vst [vmem:[%s241 + $0x80] sm:$0xff] %v1301
          %1398 = vst [vmem:[%s241 + $0x88] sm:$0xff] %v1302
          %1399 = vst [vmem:[%s241 + $0x90] sm:$0xff] %v1303
          %1400 = vst [vmem:[%s241 + $0x98] sm:$0xff] %v1304
          %1401 = vst [vmem:[%s241 + $0xa0] sm:$0xff] %v1305
          %1402 = vst [vmem:[%s241 + $0xa8] sm:$0xff] %v1306
          %1403 = vst [vmem:[%s241 + $0xb0] sm:$0xff] %v1307
          %1404 = vst [vmem:[%s241 + $0xb8] sm:$0xff] %v1308
          %1405 = vst [vmem:[%s241 + $0xc0] sm:$0xff] %v1309
          %1406 = vst [vmem:[%s241 + $0xc8] sm:$0xff] %v1310
          %1407 = vst [vmem:[%s241 + $0xd0] sm:$0xff] %v1311
          %1408 = vst [vmem:[%s241 + $0xd8] sm:$0xff] %v1312
          %1409 = vst [vmem:[%s241 + $0xe0] sm:$0xff] %v1313
          %1410 = vst [vmem:[%s241 + $0xe8] sm:$0xff] %v1314
          %1411 = vst [vmem:[%s241 + $0xf0] sm:$0xff] %v1315
          %1412 = vst [vmem:[%s241 + $0xf8] sm:$0xff] %v1316
          %1413 = vst [vmem:[%s241 + $0x100] sm:$0xff] %v1317
          %1414 = vst [vmem:[%s241 + $0x108] sm:$0xff] %v1318
          %1415 = vst [vmem:[%s241 + $0x110] sm:$0xff] %v1319
          %1416 = vst [vmem:[%s241 + $0x118] sm:$0xff] %v1320
          %1417 = vst [vmem:[%s241 + $0x120] sm:$0xff] %v1321
          %1418 = vst [vmem:[%s241 + $0x128] sm:$0xff] %v1322
          %1419 = vst [vmem:[%s241 + $0x130] sm:$0xff] %v1323
          %1420 = vst [vmem:[%s241 + $0x138] sm:$0xff] %v1324
          %1421 = vst [vmem:[%s241 + $0x140] sm:$0xff] %v1325
          %1422 = vst [vmem:[%s241 + $0x148] sm:$0xff] %v1326
          %1423 = vst [vmem:[%s241 + $0x150] sm:$0xff] %v1327
          %1424 = vst [vmem:[%s241 + $0x158] sm:$0xff] %v1328
          %1425 = vst [vmem:[%s241 + $0x160] sm:$0xff] %v1329
          %1426 = vst [vmem:[%s241 + $0x168] sm:$0xff] %v1330
          %1427 = vst [vmem:[%s241 + $0x170] sm:$0xff] %v1331
          %1428 = vst [vmem:[%s241 + $0x178] sm:$0xff] %v1332
          %1429 = vst [vmem:[%s241 + $0x180] sm:$0xff] %v1333
          %1430 = vst [vmem:[%s241 + $0x188] sm:$0xff] %v1334
          %1431 = vst [vmem:[%s241 + $0x190] sm:$0xff] %v1335
          %1432 = vst [vmem:[%s241 + $0x198] sm:$0xff] %v1336
          %1433 = vst [vmem:[%s241 + $0x1a0] sm:$0xff] %v1337
          %1434 = vst [vmem:[%s241 + $0x1a8] sm:$0xff] %v1338
          %1435 = vst [vmem:[%s241 + $0x1b0] sm:$0xff] %v1339
          %1436 = vst [vmem:[%s241 + $0x1b8] sm:$0xff] %v1340
          %1437 = vst [vmem:[%s241 + $0x1c0] sm:$0xff] %v1341
          %1438 = vst [vmem:[%s241 + $0x1c8] sm:$0xff] %v1342
          %1439 = vst [vmem:[%s241 + $0x1d0] sm:$0xff] %v1343
          %1440 = vst [vmem:[%s241 + $0x1d8] sm:$0xff] %v1344
          %1441 = vst [vmem:[%s241 + $0x1e0] sm:$0xff] %v1345
          %1442 = vst [vmem:[%s241 + $0x1e8] sm:$0xff] %v1346
          %1443 = vst [vmem:[%s241 + $0x1f0] sm:$0xff] %v1347
          %1444 = vst [vmem:[%s241 + $0x1f8] sm:$0xff] %v1348
          %1445 = vst [vmem:[%s241 + $0x200] sm:$0xff] %v1349
          %1446 = vst [vmem:[%s241 + $0x208] sm:$0xff] %v1350
          %1447 = vst [vmem:[%s241 + $0x210] sm:$0xff] %v1351
          %1448 = vst [vmem:[%s241 + $0x218] sm:$0xff] %v1352
          %1449 = vst [vmem:[%s241 + $0x220] sm:$0xff] %v1353
          %1450 = vst [vmem:[%s241 + $0x228] sm:$0xff] %v1354
          %1451 = vst [vmem:[%s241 + $0x230] sm:$0xff] %v1355
          %1452 = vst [vmem:[%s241 + $0x238] sm:$0xff] %v1356
          %1453 = vst [vmem:[%s241 + $0x240] sm:$0xff] %v1357
          %1454 = vst [vmem:[%s241 + $0x248] sm:$0xff] %v1358
          %1455 = vst [vmem:[%s241 + $0x250] sm:$0xff] %v1359
          %1456 = vst [vmem:[%s241 + $0x258] sm:$0xff] %v1360
          %1457 = vst [vmem:[%s241 + $0x260] sm:$0xff] %v1361
          %1458 = vst [vmem:[%s241 + $0x268] sm:$0xff] %v1362
          %1459 = vst [vmem:[%s241 + $0x270] sm:$0xff] %v1363
          %1460 = vst [vmem:[%s241 + $0x278] sm:$0xff] %v1364
          %1461 = vst [vmem:[%s241 + $0x280] sm:$0xff] %v1365
          %1462 = vst [vmem:[%s241 + $0x288] sm:$0xff] %v1366
          %1463 = vst [vmem:[%s241 + $0x290] sm:$0xff] %v1367
          %1464 = vst [vmem:[%s241 + $0x298] sm:$0xff] %v1368
          %1465 = vst [vmem:[%s241 + $0x2a0] sm:$0xff] %v1369
          %1466 = vst [vmem:[%s241 + $0x2a8] sm:$0xff] %v1370
          %1467 = vst [vmem:[%s241 + $0x2b0] sm:$0xff] %v1371
          %1468 = vst [vmem:[%s241 + $0x2b8] sm:$0xff] %v1372
          %1469 = vst [vmem:[%s241 + $0x2c0] sm:$0xff] %v1373
          %1470 = vst [vmem:[%s241 + $0x2c8] sm:$0xff] %v1374
          %1471 = vst [vmem:[%s241 + $0x2d0] sm:$0xff] %v1375
          %1472 = vst [vmem:[%s241 + $0x2d8] sm:$0xff] %v1376
          %1473 = vst [vmem:[%s241 + $0x2e0] sm:$0xff] %v1377
          %1474 = vst [vmem:[%s241 + $0x2e8] sm:$0xff] %v1378
          %1475 = vst [vmem:[%s241 + $0x2f0] sm:$0xff] %v1379
          %1476 = vst [vmem:[%s241 + $0x2f8] sm:$0xff] %v1380
        $region40: #{kdgqa_forward.5} parent=31 // pred_fallthru
          _
        %s1477 = sand.u32 %s128, 1
        %s1478 = scalar_lea.sflag [#allocation4], %s1477
        %s1479 = sand.u32 %s128, 1
        %s1480 = smul.addr %s1479, 768
        %s1481 = scalar_lea.vmem [#allocation3], %s1480
        // Predicated region
        $region41: #{kdgqa_forward.5} parent=31 // pred_check
          %p1482 = pneg %p138
        $region42: #{kdgqa_forward.5} parent=31 // pred_check_branch
          %1484 = sbr.rel (%p1482) target = $region44
        $region43: #{kdgqa_forward.5} parent=31 // pred_region
          %s1485 = smul.u32 48, %s22
          %s1486 = smul.u32 2, %s23
          %s1488 = ssub.s32 12288, 12288
          %1489 = vsyncadd %s1478, %s1488
          %s1490 = smul.addr %s1485, 2
          %s1491 = sadd.s32 %s1486, %s1490
          %s1492 = smul.addr %s1491, 128
          %s1493 = scalar_lea.hbm %s3, %s1492
          %s1494 = sshll.u32 %s1481, 4
          %s1495 = int_to_ptr.vmem [resolvable:$true] %s1494
          %1500 = dma.vmem_to_hbm [thread:$0]  %s1495, 12288, %s1493, %s1478, 256, 256, 16
        $region44: #{kdgqa_forward.5} parent=31 // pred_fallthru
          _
      $region32: #{kdgqa_forward.5} parent=5 // pred_fallthru
        _
      %p1501 = scmp.le.s32.totalorder 2, %s12
      // Predicated region
      $region45: #{kdgqa_forward.5} parent=5 // pred_check
        %p1502 = pneg %p1501
      $region46: #{kdgqa_forward.5} parent=5 // pred_check_branch
        %1504 = sbr.rel (%p1502) target = $region48
      $region47: #{kdgqa_forward.5} parent=5 // pred_region
        %s1505 = ssub.s32 %s12, 2
        // Predicated region
        $region49: #{kdgqa_forward.5} parent=47 // pred_check
          %p1506 = pneg %p144
        $region50: #{kdgqa_forward.5} parent=47 // pred_check_branch
          %1508 = sbr.rel (%p1506) target = $region52
        $region51: #{kdgqa_forward.5} parent=47 // pred_region
          %s1509 = sand.u32 %s129, 1
          %s1510 = scalar_lea.sflag [#allocation4], %s1509
          %s1511 = sand.u32 %s129, 1
          %s1512 = smul.addr %s1511, 768
          %s1513 = scalar_lea.vmem [#allocation3], %s1512
          %1514 = dma.done %s1510, 12288
        $region52: #{kdgqa_forward.5} parent=47 // pred_fallthru
          _
      $region48: #{kdgqa_forward.5} parent=5 // pred_fallthru
        _
    $region6: #{kdgqa_forward.5} parent=1 // loop_footer
      %s16 = sadd.s32 1, %s12
    $region7: #{kdgqa_forward.5} parent=1 // loop_footer_branch
      %11 = sbr.rel target = $region3
    $region8: #{kdgqa_forward.5} parent=1 // loop_exit
      _
    %1515 = vsyncpa [#allocation4], 1
    %s1516 = scalar_lea.sflag [#allocation4], 1
    %1517 = vsyncpa %s1516, 1

</llo_original>
